<compile_context>
chip_gen: v7x
topology: tpu7x:2x2x1
jax: 0.10.0
libtpu: 0.0.40
codegen_flags: <defaults>
</compile_context>

<pallas_src>
import jax
import jax.numpy as jnp
from jax.experimental import pallas as pl
from jax.experimental.pallas import tpu as pltpu


HIDDEN = 4096          # fixed by the module definition (nn.Linear(D, 4096))


def _vmem_capacity_bytes():
    """Per-core VMEM capacity; fall back to the smallest generation (v7x: 64 MiB)."""
    try:
        return int(pltpu.get_tpu_info().vmem_capacity_bytes)
    except Exception:
        return 64 * 1024 * 1024


def _num_tensorcores():
    """2 on v7x (split the reduction across TensorCores), else 1."""
    try:
        kind = jax.devices()[0].device_kind.lower()
        if "v7" in kind or "7x" in kind:
            return 2
    except Exception:
        pass
    return 1


def _choose_tile_h(d, b, hidden_per_core, vmem_budget_bytes):
    """Largest hidden tile (divisor of hidden_per_core) whose working set fits budget.

    Budget includes the bf16 W1 column / W2 row tiles and the f32 b1 tile
    (single-buffered when one tile covers the whole per-core hidden range,
    double-buffered otherwise), the f32 h intermediate, and the small resident
    x / output blocks.
    """
    fixed = 4 * b * d * 4                       # x (f32) + output partial (f32), 2 bufs each
    candidates = [t for t in (4096, 2048, 1024, 512, 256, 128)
                  if t <= hidden_per_core and hidden_per_core % t == 0]
    for t in candidates:
        bufs = 1 if t == hidden_per_core else 2
        per_h = bufs * (2 * d * 2 + 4) + b * 4  # W1 + W2 (bf16) + b1 (f32), + f32 h row
        if fixed + t * per_h <= vmem_budget_bytes:
            return t
    return candidates[-1]


def _mlp_kernel(x_ref, w1_ref, b1_ref, w2_ref, o_ref):
    """Fused relu(x @ W1 + b1) @ W2, accumulated into a per-core partial output."""
    k = pl.program_id(1)

    @pl.when(k == 0)
    def _():
        # Output block index is constant across k for a given core -> resident.
        o_ref[...] = jnp.zeros_like(o_ref)

    # First linear layer (current hidden tile) + ReLU; bf16 inputs, f32 MXU accumulation.
    xb = x_ref[...].astype(jnp.bfloat16)
    h = jnp.dot(xb, w1_ref[...], preferred_element_type=jnp.float32)
    h = jnp.maximum(h + b1_ref[...], 0.0)          # f32 epilogue (v5e-friendly)

    # Second linear layer: partial contraction over this hidden tile.
    o_ref[...] += jnp.dot(h.astype(w2_ref.dtype), w2_ref[...],
                          preferred_element_type=jnp.float32)


def regression_model_forward(x, w1, b1, w2, b2):
    """x: arbitrary shape (B, ...) with prod(...) == D.  Returns same shape, f32.

    w1: (D, HIDDEN)  -- pass pre-cast to bf16 (see prepare_params)
    b1: (HIDDEN,)    -- f32
    w2: (HIDDEN, D)  -- bf16
    b2: (D,)         -- f32
    (i.e. the transposed layout of PyTorch's nn.Linear weights, so y = x @ W + b).
    """
    input_shape = x.shape
    B = input_shape[0]
    D = 1
    for s in input_shape[1:]:
        D *= s

    xf = x.reshape(B, D)                      # no dtype round-trips; cast happens in-kernel
    # Weights should already be bf16 (one-time cast outside the per-call path).
    w1 = w1 if w1.dtype == jnp.bfloat16 else w1.astype(jnp.bfloat16)
    w2 = w2 if w2.dtype == jnp.bfloat16 else w2.astype(jnp.bfloat16)
    b1_2d = b1.reshape(1, HIDDEN).astype(jnp.float32)

    num_tc = _num_tensorcores()
    hidden_per_core = HIDDEN // num_tc

    vmem_cap = _vmem_capacity_bytes()
    tile_h = _choose_tile_h(D, B, hidden_per_core, int(vmem_cap * 0.6))
    n_k = hidden_per_core // tile_h
    single_buffer = (n_k == 1)

    # Explicit scoped-VMEM limit with headroom.
    bufs = 1 if single_buffer else 2
    step_bytes = tile_h * (bufs * (2 * D * 2 + 4) + B * 4) + 4 * B * D * 4
    vmem_limit = min(int(vmem_cap * 0.9), max(32 * 1024 * 1024, 2 * step_bytes))

    # Single-buffer the weight tiles when there is nothing to pipeline.
    weight_pipeline = None
    if single_buffer:
        try:
            weight_pipeline = pl.Buffered(1)
        except Exception:
            weight_pipeline = None

    def wspec(shape, imap):
        if weight_pipeline is not None:
            try:
                return pl.BlockSpec(shape, imap, pipeline_mode=weight_pipeline)
            except TypeError:
                pass
        return pl.BlockSpec(shape, imap)

    partials = pl.pallas_call(
        _mlp_kernel,
        out_shape=jax.ShapeDtypeStruct((num_tc, B, D), jnp.float32),
        grid_spec=pl.GridSpec(
            grid=(num_tc, n_k),
            in_specs=[
                pl.BlockSpec((B, D), lambda c, k: (0, 0)),              # x (resident)
                wspec((D, tile_h), lambda c, k: (0, c * n_k + k)),      # W1 tile (bf16)
                wspec((1, tile_h), lambda c, k: (0, c * n_k + k)),      # b1 tile (f32)
                wspec((tile_h, D), lambda c, k: (c * n_k + k, 0)),      # W2 tile (bf16)
            ],
            out_specs=pl.BlockSpec((None, B, D), lambda c, k: (c, 0, 0)),  # per-core partial
        ),
        compiler_params=pltpu.CompilerParams(
            dimension_semantics=("parallel", "arbitrary"),   # cores x hidden-reduction
            vmem_limit_bytes=vmem_limit,
        ),
    )(xf, w1, b1_2d, w2)

    # Combine per-core partials and add b2 (tiny (B, D) op).
    y = jnp.sum(partials, axis=0) + b2.astype(jnp.float32)
    return y.reshape(input_shape)


def init_params(input_dim, key):
    """Synthetic parameters matching nn.Linear(D,4096) / nn.Linear(4096,D) default init."""
    k1, k2, k3, k4 = jax.random.split(key, 4)
    lim1 = 1.0 / (input_dim ** 0.5)
    lim2 = 1.0 / (HIDDEN ** 0.5)
    w1 = jax.random.uniform(k1, (input_dim, HIDDEN), jnp.float32, -lim1, lim1)
    b1 = jax.random.uniform(k2, (HIDDEN,), jnp.float32, -lim1, lim1)
    w2 = jax.random.uniform(k3, (HIDDEN, input_dim), jnp.float32, -lim2, lim2)
    b2 = jax.random.uniform(k4, (input_dim,), jnp.float32, -lim2, lim2)
    return w1, b1, w2, b2


def prepare_params(w1, b1, w2, b2):
    """One-time prep OUTSIDE the per-call path: bf16 stream-ready weights, f32 biases."""
    return (w1.astype(jnp.bfloat16), b1.astype(jnp.float32),
            w2.astype(jnp.bfloat16), b2.astype(jnp.float32))


if __name__ == "__main__":
    key = jax.random.PRNGKey(0)
    kx, kp = jax.random.split(key)

    # Small input: batch=2, flattens to input_dim = 4*8 = 32.
    x = jax.random.normal(kx, (2, 4, 8), dtype=jnp.float32)
    input_dim = x.shape[1] * x.shape[2]

    w1, b1, w2, b2 = init_params(input_dim, kp)
    w1b, b1f, w2b, b2f = prepare_params(w1, b1, w2, b2)   # cast once, outside the call

    y = jax.block_until_ready(regression_model_forward(x, w1b, b1f, w2b, b2f))

    xf = x.reshape(x.shape[0], -1)
    # Reference mirroring the kernel's bf16 quantization points (tight check).
    xq = xf.astype(jnp.bfloat16).astype(jnp.float32)
    w1q = w1.astype(jnp.bfloat16).astype(jnp.float32)
    w2q = w2.astype(jnp.bfloat16).astype(jnp.float32)
    h = jnp.maximum(xq @ w1q + b1, 0.0).astype(jnp.bfloat16).astype(jnp.float32)
    ref_bf16 = (h @ w2q + b2).reshape(x.shape)
    # Full f32 reference (loose check: bf16 weight streaming tolerance).
    ref_f32 = (jnp.maximum(xf @ w1 + b1, 0.0) @ w2 + b2).reshape(x.shape)

    assert y.shape == x.shape and y.dtype == jnp.float32
    assert jnp.allclose(y, ref_bf16, atol=2e-3, rtol=2e-3)
    assert jnp.allclose(y, ref_f32, atol=5e-2, rtol=5e-2)

    print("KERNEL_OK")
</pallas_src>

<mosaic_0001>
module attributes {stable_mosaic.version = 11 : i64} {
  func.func @_mlp_kernel(%arg0: i32, %arg1: i32, %arg2: memref<2x32xf32, #tpu.memory_space<vmem>>, %arg3: memref<32x4096xbf16, #tpu.memory_space<vmem>>, %arg4: memref<1x4096xf32, #tpu.memory_space<vmem>>, %arg5: memref<4096x32xbf16, #tpu.memory_space<vmem>>, %arg6: memref<1x2x32xf32, #tpu.memory_space<vmem>>) attributes {dimension_semantics = [#tpu.dimension_semantics<parallel>, #tpu.dimension_semantics<arbitrary>], iteration_bounds = array<i64: 1, 1>, scalar_prefetch = 0 : i64, scratch_operands = 0 : i64, tpu.core_type = #tpu.core_type<tc>, window_params = [{pipeline_mode = #tpu.pipeline_mode<synchronous>, transform_indices = @transform_0, window_bounds = array<i64: 2, 32>}, {pipeline_mode = #tpu.pipeline_mode<synchronous>, transform_indices = @transform_1, window_bounds = array<i64: 32, 4096>}, {pipeline_mode = #tpu.pipeline_mode<synchronous>, transform_indices = @transform_2, window_bounds = array<i64: 1, 4096>}, {pipeline_mode = #tpu.pipeline_mode<synchronous>, transform_indices = @transform_3, window_bounds = array<i64: 4096, 32>}, {transform_indices = @transform_4, window_bounds = array<i64: 1, 2, 32>}]} {
    %c0_i32 = arith.constant 0 : i32
    %0 = arith.cmpi eq, %arg1, %c0_i32 : i32
    %1 = arith.extui %0 : i1 to i32
    %c0_i32_0 = arith.constant 0 : i32
    %2 = arith.cmpi ne, %1, %c0_i32_0 : i32
    scf.if %2 {
      %cst_16 = arith.constant 0.000000e+00 : f32
      %21 = vector.broadcast %cst_16 : f32 to vector<2x32xf32>
      %c0_17 = arith.constant 0 : index
      %c0_18 = arith.constant 0 : index
      %c0_19 = arith.constant 0 : index
      %22 = vector.load %arg6[%c0_17, %c0_18, %c0_19] : memref<1x2x32xf32, #tpu.memory_space<vmem>>, vector<1x2x32xf32>
      %23 = vector.shape_cast %22 : vector<1x2x32xf32> to vector<2x32xf32>
      %24 = vector.shape_cast %21 : vector<2x32xf32> to vector<1x2x32xf32>
      tpu.vector_store %arg6[%c0_17, %c0_18, %c0_19], %24 {strides = array<i32>} : memref<1x2x32xf32, #tpu.memory_space<vmem>>, vector<1x2x32xf32>,
    } else {
    }
    %c0 = arith.constant 0 : index
    %c0_1 = arith.constant 0 : index
    %3 = vector.load %arg2[%c0, %c0_1] : memref<2x32xf32, #tpu.memory_space<vmem>>, vector<2x32xf32>
    %4 = arith.truncf %3 : vector<2x32xf32> to vector<2x32xbf16>
    %c0_2 = arith.constant 0 : index
    %c0_3 = arith.constant 0 : index
    %5 = vector.load %arg3[%c0_2, %c0_3] : memref<32x4096xbf16, #tpu.memory_space<vmem>>, vector<32x4096xbf16>
    %cst = arith.constant dense<0.000000e+00> : vector<2x4096xf32>
    %6 = tpu.matmul %4, %5, %cst {dimension_numbers = #tpu.dot_dimension_numbers<[1], [0], [0], [1], [0, 0, 1, 1], [], []>} : vector<2x32xbf16>, vector<32x4096xbf16>, vector<2x4096xf32> -> vector<2x4096xf32>
    %c0_4 = arith.constant 0 : index
    %c0_5 = arith.constant 0 : index
    %7 = vector.load %arg4[%c0_4, %c0_5] : memref<1x4096xf32, #tpu.memory_space<vmem>>, vector<1x4096xf32>
    %8 = vector.broadcast %7 : vector<1x4096xf32> to vector<2x4096xf32>
    %9 = arith.addf %6, %8 : vector<2x4096xf32>
    %cst_6 = arith.constant 0.000000e+00 : f32
    %10 = vector.broadcast %cst_6 : f32 to vector<2x4096xf32>
    %11 = arith.maximumf %9, %10 : vector<2x4096xf32>
    %c0_7 = arith.constant 0 : index
    %c0_8 = arith.constant 0 : index
    %c0_9 = arith.constant 0 : index
    %12 = vector.load %arg6[%c0_7, %c0_8, %c0_9] : memref<1x2x32xf32, #tpu.memory_space<vmem>>, vector<1x2x32xf32>
    %13 = vector.shape_cast %12 : vector<1x2x32xf32> to vector<2x32xf32>
    %14 = arith.truncf %11 : vector<2x4096xf32> to vector<2x4096xbf16>
    %c0_10 = arith.constant 0 : index
    %c0_11 = arith.constant 0 : index
    %15 = vector.load %arg5[%c0_10, %c0_11] : memref<4096x32xbf16, #tpu.memory_space<vmem>>, vector<4096x32xbf16>
    %cst_12 = arith.constant dense<0.000000e+00> : vector<2x32xf32>
    %16 = tpu.matmul %14, %15, %cst_12 {dimension_numbers = #tpu.dot_dimension_numbers<[1], [0], [0], [1], [0, 0, 1, 1], [], []>} : vector<2x4096xbf16>, vector<4096x32xbf16>, vector<2x32xf32> -> vector<2x32xf32>
    %17 = arith.addf %13, %16 : vector<2x32xf32>
    %c0_13 = arith.constant 0 : index
    %c0_14 = arith.constant 0 : index
    %c0_15 = arith.constant 0 : index
    %18 = vector.load %arg6[%c0_13, %c0_14, %c0_15] : memref<1x2x32xf32, #tpu.memory_space<vmem>>, vector<1x2x32xf32>
    %19 = vector.shape_cast %18 : vector<1x2x32xf32> to vector<2x32xf32>
    %20 = vector.shape_cast %17 : vector<2x32xf32> to vector<1x2x32xf32>
    tpu.vector_store %arg6[%c0_13, %c0_14, %c0_15], %20 {strides = array<i32>} : memref<1x2x32xf32, #tpu.memory_space<vmem>>, vector<1x2x32xf32>,
    return
  }
  func.func @transform_0(%arg0: i32, %arg1: i32) -> (i32, i32) {
    %c0_i32 = arith.constant 0 : i32
    %c0_i32_0 = arith.constant 0 : i32
    %c0_i32_1 = arith.constant 0 : i32
    return %c0_i32, %c0_i32_0 : i32, i32
  }
  func.func @transform_1(%arg0: i32, %arg1: i32) -> (i32, i32) {
    %c1_i32 = arith.constant 1 : i32
    %0 = arith.muli %arg0, %c1_i32 : i32
    %1 = arith.addi %0, %arg1 : i32
    %c0_i32 = arith.constant 0 : i32
    %c0_i32_0 = arith.constant 0 : i32
    return %c0_i32, %1 : i32, i32
  }
  func.func @transform_2(%arg0: i32, %arg1: i32) -> (i32, i32) {
    %c1_i32 = arith.constant 1 : i32
    %0 = arith.muli %arg0, %c1_i32 : i32
    %1 = arith.addi %0, %arg1 : i32
    %c0_i32 = arith.constant 0 : i32
    %c0_i32_0 = arith.constant 0 : i32
    return %c0_i32, %1 : i32, i32
  }
  func.func @transform_3(%arg0: i32, %arg1: i32) -> (i32, i32) {
    %c1_i32 = arith.constant 1 : i32
    %0 = arith.muli %arg0, %c1_i32 : i32
    %1 = arith.addi %0, %arg1 : i32
    %c0_i32 = arith.constant 0 : i32
    %c0_i32_0 = arith.constant 0 : i32
    return %1, %c0_i32 : i32, i32
  }
  func.func @transform_4(%arg0: i32, %arg1: i32) -> (i32, i32, i32) {
    %c0_i32 = arith.constant 0 : i32
    %c0_i32_0 = arith.constant 0 : i32
    %c0_i32_1 = arith.constant 0 : i32
    return %arg0, %c0_i32, %c0_i32_0 : i32, i32, i32
  }
}

</mosaic_0001>

<llo_original>
// kernel: tpu_custom_call.1
$region0: #{tpu_custom_call.1}
  #allocation0 [shape = 'u32[]', space=smem, size = 0x4, offset = 0x4, fixed_abs, tag = 'smem constant byte address 0x4 - core index']
  #allocation1 [shape = 'u32[144,128]{1,0:T(1,128)}', space=vmem, size = 0x12000, scoped, tag = 'internal scratch']
  %s0 = inlined_call_operand.vmem [shape: f32[2,32], index: 0, kind: input, shape index: {}]
  %s1 = inlined_call_operand.vmem [shape: bf16[32,4096], index: 1, kind: input, shape index: {}]
  %s2 = inlined_call_operand.vmem [shape: f32[1,4096], index: 2, kind: input, shape index: {}]
  %s3 = inlined_call_operand.vmem [shape: bf16[4096,32], index: 3, kind: input, shape index: {}]
  %s4 = inlined_call_operand.hbm [shape: f32[1,2,32], index: 4, kind: output, shape index: {}]
  %s5 = sld [smem:[#allocation0]]
  $region30: #{tpu_custom_call.1} parent=0
    _
  %s7 = ssub.s32 1, %s5
  %s8 = scalar_select 0, %s7, %s5
  $region1: #{tpu_custom_call.1} parent=0
    #allocation2 [shape = 'u8[1024]{0}', space=vmem, size = 0x400, scoped, tag = 'output window, operand 0, single buffered']
    #allocation3 [shape = 's32[1]{0}', space=sflag, size = 0x4, scoped, tag = 'scoped memory for tpu_custom_call.1']
    %9 = vsyncpa [#allocation3], 0
    // Predicated region
    $region2: #{tpu_custom_call.1} parent=1 // pred_check
      _
    $region3: #{tpu_custom_call.1} parent=1 // pred_check_branch
      %11 = sbr.rel (0) target = $region5
    $region4: #{tpu_custom_call.1} parent=1 // pred_region
      _
    $region5: #{tpu_custom_call.1} parent=1 // pred_fallthru
      _
    // Predicated region
    $region6: #{tpu_custom_call.1} parent=1 // pred_check
      _
    $region7: #{tpu_custom_call.1} parent=1 // pred_check_branch
      %13 = sbr.rel (0) target = $region9
    $region8: #{tpu_custom_call.1} parent=1 // pred_region
      %s14 = sadd.s32 0, 0
      %s15 = smul.u32 32, %s14
      %p16 = scmp.lt.s32.totalorder %s15, 31
      %s17 = scalar_select %p16, %s15, 31
      %s18 = smul.addr %s17, 4
      %s19 = scalar_lea.vmem %s1, %s18
      %s20 = sadd.s32 0, 0
      %s21 = smul.u32 32, %s20
    $region9: #{tpu_custom_call.1} parent=1 // pred_fallthru
      _
    // Predicated region
    $region10: #{tpu_custom_call.1} parent=1 // pred_check
      _
    $region11: #{tpu_custom_call.1} parent=1 // pred_check_branch
      %23 = sbr.rel (0) target = $region13
    $region12: #{tpu_custom_call.1} parent=1 // pred_region
      %s24 = sadd.s32 0, 0
      %s25 = smul.u32 32, %s24
      %p26 = scmp.lt.s32.totalorder %s25, 31
      %s27 = scalar_select %p26, %s25, 31
      %s28 = scalar_lea.vmem %s2, %s27
      %s29 = sadd.s32 0, 0
      %s30 = smul.u32 32, %s29
    $region13: #{tpu_custom_call.1} parent=1 // pred_fallthru
      _
    // Predicated region
    $region14: #{tpu_custom_call.1} parent=1 // pred_check
      _
    $region15: #{tpu_custom_call.1} parent=1 // pred_check_branch
      %32 = sbr.rel (0) target = $region17
    $region16: #{tpu_custom_call.1} parent=1 // pred_region
      %s33 = sadd.s32 0, 0
      %s34 = smul.u32 512, %s33
      %p35 = scmp.lt.s32.totalorder %s34, 511
      %s36 = scalar_select %p35, %s34, 511
      %s37 = smul.addr %s36, 4
      %s38 = scalar_lea.vmem %s3, %s37
      %s39 = sadd.s32 0, 0
      %s40 = smul.u32 512, %s39
    $region17: #{tpu_custom_call.1} parent=1 // pred_fallthru
      _
    %s41 = sadd.s32 0, 0
    %s42 = smul.u32 32, %s41
    %p43 = scmp.lt.s32.totalorder %s42, 31
    %s44 = scalar_select %p43, %s42, 31
    %s45 = smul.addr %s44, 4
    %s46 = scalar_lea.vmem %s1, %s45
    %s47 = sadd.s32 0, 0
    %s48 = smul.u32 32, %s47
    %p49 = scmp.lt.s32.totalorder %s48, 31
    %s50 = scalar_select %p49, %s48, 31
    %s51 = scalar_lea.vmem %s2, %s50
    %s52 = sadd.s32 0, 0
    %s53 = smul.u32 512, %s52
    %p54 = scmp.lt.s32.totalorder %s53, 511
    %s55 = scalar_select %p54, %s53, 511
    %s56 = smul.addr %s55, 4
    %s57 = scalar_lea.vmem %s3, %s56
    %s58 = sadd.s32 0, 0
    %s59 = smul.u32 32, %s58
    %p60 = scmp.lt.s32.totalorder %s59, 31
    %s61 = scalar_select %p60, %s59, 31
    %s62 = smul.addr %s61, 4
    %s63 = scalar_lea.vmem %s1, %s62
    %s64 = sadd.s32 0, 0
    %s65 = smul.u32 32, %s64
    %s66 = sadd.s32 0, 0
    %s67 = smul.u32 32, %s66
    %p68 = scmp.lt.s32.totalorder %s67, 31
    %s69 = scalar_select %p68, %s67, 31
    %s70 = scalar_lea.vmem %s2, %s69
    %s71 = sadd.s32 0, 0
    %s72 = smul.u32 32, %s71
    %s73 = sadd.s32 0, 0
    %s74 = smul.u32 512, %s73
    %p75 = scmp.lt.s32.totalorder %s74, 511
    %s76 = scalar_select %p75, %s74, 511
    %s77 = smul.addr %s76, 4
    %s78 = scalar_lea.vmem %s3, %s77
    %s79 = sadd.s32 0, 0
    %s80 = smul.u32 512, %s79
    %p82 = scmp.eq.s32.totalorder 0, 0
    // Predicated region
    $region18: #{tpu_custom_call.1} parent=1 // pred_check
      %p83 = pneg %p82
    $region19: #{tpu_custom_call.1} parent=1 // pred_check_branch
      %85 = sbr.rel (%p83) target = $region21
    $region20: #{tpu_custom_call.1} parent=1 // pred_region
      %vm86 = vcmask 254976
      %87 = vst.msk [vmem:[#allocation2] sm:$0x3] %vm86, 0.0
    $region21: #{tpu_custom_call.1} parent=1 // pred_fallthru
      _
    %v88 = vld [vmem:[%s0] sm:$0x3]
    %v89 = vpack.c.bf16 %v88, %v88
    %v90 = vld [vmem:[%s63] sm:$0xff]
    %v91 = vld [vmem:[%s63 + $0x8] sm:$0xff]
    %v92 = vld [vmem:[%s63 + $0x10] sm:$0xff]
    %v93 = vld [vmem:[%s63 + $0x18] sm:$0xff]
    %v94 = vld [vmem:[%s63 + $0x20] sm:$0xff]
    %v95 = vld [vmem:[%s63 + $0x28] sm:$0xff]
    %v96 = vld [vmem:[%s63 + $0x30] sm:$0xff]
    %v97 = vld [vmem:[%s63 + $0x38] sm:$0xff]
    %v98 = vld [vmem:[%s63 + $0x40] sm:$0xff]
    %v99 = vld [vmem:[%s63 + $0x48] sm:$0xff]
    %v100 = vld [vmem:[%s63 + $0x50] sm:$0xff]
    %v101 = vld [vmem:[%s63 + $0x58] sm:$0xff]
    %v102 = vld [vmem:[%s63 + $0x60] sm:$0xff]
    %v103 = vld [vmem:[%s63 + $0x68] sm:$0xff]
    %v104 = vld [vmem:[%s63 + $0x70] sm:$0xff]
    %v105 = vld [vmem:[%s63 + $0x78] sm:$0xff]
    %v106 = vld [vmem:[%s63 + $0x80] sm:$0xff]
    %v107 = vld [vmem:[%s63 + $0x88] sm:$0xff]
    %v108 = vld [vmem:[%s63 + $0x90] sm:$0xff]
    %v109 = vld [vmem:[%s63 + $0x98] sm:$0xff]
    %v110 = vld [vmem:[%s63 + $0xa0] sm:$0xff]
    %v111 = vld [vmem:[%s63 + $0xa8] sm:$0xff]
    %v112 = vld [vmem:[%s63 + $0xb0] sm:$0xff]
    %v113 = vld [vmem:[%s63 + $0xb8] sm:$0xff]
    %v114 = vld [vmem:[%s63 + $0xc0] sm:$0xff]
    %v115 = vld [vmem:[%s63 + $0xc8] sm:$0xff]
    %v116 = vld [vmem:[%s63 + $0xd0] sm:$0xff]
    %v117 = vld [vmem:[%s63 + $0xd8] sm:$0xff]
    %v118 = vld [vmem:[%s63 + $0xe0] sm:$0xff]
    %v119 = vld [vmem:[%s63 + $0xe8] sm:$0xff]
    %v120 = vld [vmem:[%s63 + $0xf0] sm:$0xff]
    %v121 = vld [vmem:[%s63 + $0xf8] sm:$0xff]
    %v122 = vld [vmem:[%s63 + $0x100] sm:$0xff]
    %v123 = vld [vmem:[%s63 + $0x108] sm:$0xff]
    %v124 = vld [vmem:[%s63 + $0x110] sm:$0xff]
    %v125 = vld [vmem:[%s63 + $0x118] sm:$0xff]
    %v126 = vld [vmem:[%s63 + $0x120] sm:$0xff]
    %v127 = vld [vmem:[%s63 + $0x128] sm:$0xff]
    %v128 = vld [vmem:[%s63 + $0x130] sm:$0xff]
    %v129 = vld [vmem:[%s63 + $0x138] sm:$0xff]
    %v130 = vld [vmem:[%s63 + $0x140] sm:$0xff]
    %v131 = vld [vmem:[%s63 + $0x148] sm:$0xff]
    %v132 = vld [vmem:[%s63 + $0x150] sm:$0xff]
    %v133 = vld [vmem:[%s63 + $0x158] sm:$0xff]
    %v134 = vld [vmem:[%s63 + $0x160] sm:$0xff]
    %v135 = vld [vmem:[%s63 + $0x168] sm:$0xff]
    %v136 = vld [vmem:[%s63 + $0x170] sm:$0xff]
    %v137 = vld [vmem:[%s63 + $0x178] sm:$0xff]
    %v138 = vld [vmem:[%s63 + $0x180] sm:$0xff]
    %v139 = vld [vmem:[%s63 + $0x188] sm:$0xff]
    %v140 = vld [vmem:[%s63 + $0x190] sm:$0xff]
    %v141 = vld [vmem:[%s63 + $0x198] sm:$0xff]
    %v142 = vld [vmem:[%s63 + $0x1a0] sm:$0xff]
    %v143 = vld [vmem:[%s63 + $0x1a8] sm:$0xff]
    %v144 = vld [vmem:[%s63 + $0x1b0] sm:$0xff]
    %v145 = vld [vmem:[%s63 + $0x1b8] sm:$0xff]
    %v146 = vld [vmem:[%s63 + $0x1c0] sm:$0xff]
    %v147 = vld [vmem:[%s63 + $0x1c8] sm:$0xff]
    %v148 = vld [vmem:[%s63 + $0x1d0] sm:$0xff]
    %v149 = vld [vmem:[%s63 + $0x1d8] sm:$0xff]
    %v150 = vld [vmem:[%s63 + $0x1e0] sm:$0xff]
    %v151 = vld [vmem:[%s63 + $0x1e8] sm:$0xff]
    %v152 = vld [vmem:[%s63 + $0x1f0] sm:$0xff]
    %v153 = vld [vmem:[%s63 + $0x1f8] sm:$0xff]
    %v154 = vld [vmem:[%s70] sm:$0xff]
    %v155 = vld [vmem:[%s70 + $0x8] sm:$0xff]
    %v156 = vld [vmem:[%s70 + $0x10] sm:$0xff]
    %v157 = vld [vmem:[%s70 + $0x18] sm:$0xff]
    %v162 = vlaneseq
    %v163 = vshrl.u32 %v162, 7
    %v164 = vsub.s32 0, %v163
    %v165 = vrot.slane %v154, %v164
    %v166 = vlaneseq
    %v167 = vshrl.u32 %v166, 7
    %v168 = vsub.s32 1, %v167
    %v169 = vrot.slane %v154, %v168
    %v170 = vlaneseq
    %v171 = vshrl.u32 %v170, 7
    %v172 = vsub.s32 2, %v171
    %v173 = vrot.slane %v154, %v172
    %v174 = vlaneseq
    %v175 = vshrl.u32 %v174, 7
    %v176 = vsub.s32 3, %v175
    %v177 = vrot.slane %v154, %v176
    %v178 = vlaneseq
    %v179 = vshrl.u32 %v178, 7
    %v180 = vsub.s32 4, %v179
    %v181 = vrot.slane %v154, %v180
    %v182 = vlaneseq
    %v183 = vshrl.u32 %v182, 7
    %v184 = vsub.s32 5, %v183
    %v185 = vrot.slane %v154, %v184
    %v186 = vlaneseq
    %v187 = vshrl.u32 %v186, 7
    %v188 = vsub.s32 6, %v187
    %v189 = vrot.slane %v154, %v188
    %v190 = vlaneseq
    %v191 = vshrl.u32 %v190, 7
    %v192 = vsub.s32 7, %v191
    %v193 = vrot.slane %v154, %v192
    %v194 = vlaneseq
    %v195 = vshrl.u32 %v194, 7
    %v196 = vsub.s32 0, %v195
    %v197 = vrot.slane %v155, %v196
    %v198 = vlaneseq
    %v199 = vshrl.u32 %v198, 7
    %v200 = vsub.s32 1, %v199
    %v201 = vrot.slane %v155, %v200
    %v202 = vlaneseq
    %v203 = vshrl.u32 %v202, 7
    %v204 = vsub.s32 2, %v203
    %v205 = vrot.slane %v155, %v204
    %v206 = vlaneseq
    %v207 = vshrl.u32 %v206, 7
    %v208 = vsub.s32 3, %v207
    %v209 = vrot.slane %v155, %v208
    %v210 = vlaneseq
    %v211 = vshrl.u32 %v210, 7
    %v212 = vsub.s32 4, %v211
    %v213 = vrot.slane %v155, %v212
    %v214 = vlaneseq
    %v215 = vshrl.u32 %v214, 7
    %v216 = vsub.s32 5, %v215
    %v217 = vrot.slane %v155, %v216
    %v218 = vlaneseq
    %v219 = vshrl.u32 %v218, 7
    %v220 = vsub.s32 6, %v219
    %v221 = vrot.slane %v155, %v220
    %v222 = vlaneseq
    %v223 = vshrl.u32 %v222, 7
    %v224 = vsub.s32 7, %v223
    %v225 = vrot.slane %v155, %v224
    %v226 = vlaneseq
    %v227 = vshrl.u32 %v226, 7
    %v228 = vsub.s32 0, %v227
    %v229 = vrot.slane %v156, %v228
    %v230 = vlaneseq
    %v231 = vshrl.u32 %v230, 7
    %v232 = vsub.s32 1, %v231
    %v233 = vrot.slane %v156, %v232
    %v234 = vlaneseq
    %v235 = vshrl.u32 %v234, 7
    %v236 = vsub.s32 2, %v235
    %v237 = vrot.slane %v156, %v236
    %v238 = vlaneseq
    %v239 = vshrl.u32 %v238, 7
    %v240 = vsub.s32 3, %v239
    %v241 = vrot.slane %v156, %v240
    %v242 = vlaneseq
    %v243 = vshrl.u32 %v242, 7
    %v244 = vsub.s32 4, %v243
    %v245 = vrot.slane %v156, %v244
    %v246 = vlaneseq
    %v247 = vshrl.u32 %v246, 7
    %v248 = vsub.s32 5, %v247
    %v249 = vrot.slane %v156, %v248
    %v250 = vlaneseq
    %v251 = vshrl.u32 %v250, 7
    %v252 = vsub.s32 6, %v251
    %v253 = vrot.slane %v156, %v252
    %v254 = vlaneseq
    %v255 = vshrl.u32 %v254, 7
    %v256 = vsub.s32 7, %v255
    %v257 = vrot.slane %v156, %v256
    %v258 = vlaneseq
    %v259 = vshrl.u32 %v258, 7
    %v260 = vsub.s32 0, %v259
    %v261 = vrot.slane %v157, %v260
    %v262 = vlaneseq
    %v263 = vshrl.u32 %v262, 7
    %v264 = vsub.s32 1, %v263
    %v265 = vrot.slane %v157, %v264
    %v266 = vlaneseq
    %v267 = vshrl.u32 %v266, 7
    %v268 = vsub.s32 2, %v267
    %v269 = vrot.slane %v157, %v268
    %v270 = vlaneseq
    %v271 = vshrl.u32 %v270, 7
    %v272 = vsub.s32 3, %v271
    %v273 = vrot.slane %v157, %v272
    %v274 = vlaneseq
    %v275 = vshrl.u32 %v274, 7
    %v276 = vsub.s32 4, %v275
    %v277 = vrot.slane %v157, %v276
    %v278 = vlaneseq
    %v279 = vshrl.u32 %v278, 7
    %v280 = vsub.s32 5, %v279
    %v281 = vrot.slane %v157, %v280
    %v282 = vlaneseq
    %v283 = vshrl.u32 %v282, 7
    %v284 = vsub.s32 6, %v283
    %v285 = vrot.slane %v157, %v284
    %v286 = vlaneseq
    %v287 = vshrl.u32 %v286, 7
    %v288 = vsub.s32 7, %v287
    %v289 = vrot.slane %v157, %v288
    %v386 = vunpack.c.l.b16 %v90
    %v387 = vunpack.c.h.b16 %v90
    %v388 = vunpack.c.l.b16 %v91
    %v389 = vunpack.c.h.b16 %v91
    %v390 = vunpack.c.l.b16 %v92
    %v391 = vunpack.c.h.b16 %v92
    %v392 = vunpack.c.l.b16 %v93
    %v393 = vunpack.c.h.b16 %v93
    %v394 = vunpack.c.l.b16 %v94
    %v395 = vunpack.c.h.b16 %v94
    %v396 = vunpack.c.l.b16 %v95
    %v397 = vunpack.c.h.b16 %v95
    %v398 = vunpack.c.l.b16 %v96
    %v399 = vunpack.c.h.b16 %v96
    %v400 = vunpack.c.l.b16 %v97
    %v401 = vunpack.c.h.b16 %v97
    %v402 = vunpack.c.l.b16 %v98
    %v403 = vunpack.c.h.b16 %v98
    %v404 = vunpack.c.l.b16 %v99
    %v405 = vunpack.c.h.b16 %v99
    %v406 = vunpack.c.l.b16 %v100
    %v407 = vunpack.c.h.b16 %v100
    %v408 = vunpack.c.l.b16 %v101
    %v409 = vunpack.c.h.b16 %v101
    %v410 = vunpack.c.l.b16 %v102
    %v411 = vunpack.c.h.b16 %v102
    %v412 = vunpack.c.l.b16 %v103
    %v413 = vunpack.c.h.b16 %v103
    %v414 = vunpack.c.l.b16 %v104
    %v415 = vunpack.c.h.b16 %v104
    %v416 = vunpack.c.l.b16 %v105
    %v417 = vunpack.c.h.b16 %v105
    %v418 = vunpack.c.l.b16 %v106
    %v419 = vunpack.c.h.b16 %v106
    %v420 = vunpack.c.l.b16 %v107
    %v421 = vunpack.c.h.b16 %v107
    %v422 = vunpack.c.l.b16 %v108
    %v423 = vunpack.c.h.b16 %v108
    %v424 = vunpack.c.l.b16 %v109
    %v425 = vunpack.c.h.b16 %v109
    %v426 = vunpack.c.l.b16 %v110
    %v427 = vunpack.c.h.b16 %v110
    %v428 = vunpack.c.l.b16 %v111
    %v429 = vunpack.c.h.b16 %v111
    %v430 = vunpack.c.l.b16 %v112
    %v431 = vunpack.c.h.b16 %v112
    %v432 = vunpack.c.l.b16 %v113
    %v433 = vunpack.c.h.b16 %v113
    %v434 = vunpack.c.l.b16 %v114
    %v435 = vunpack.c.h.b16 %v114
    %v436 = vunpack.c.l.b16 %v115
    %v437 = vunpack.c.h.b16 %v115
    %v438 = vunpack.c.l.b16 %v116
    %v439 = vunpack.c.h.b16 %v116
    %v440 = vunpack.c.l.b16 %v117
    %v441 = vunpack.c.h.b16 %v117
    %v442 = vunpack.c.l.b16 %v118
    %v443 = vunpack.c.h.b16 %v118
    %v444 = vunpack.c.l.b16 %v119
    %v445 = vunpack.c.h.b16 %v119
    %v446 = vunpack.c.l.b16 %v120
    %v447 = vunpack.c.h.b16 %v120
    %v448 = vunpack.c.l.b16 %v121
    %v449 = vunpack.c.h.b16 %v121
    %v450 = vunpack.c.l.b16 %v122
    %v451 = vunpack.c.h.b16 %v122
    %v452 = vunpack.c.l.b16 %v123
    %v453 = vunpack.c.h.b16 %v123
    %v454 = vunpack.c.l.b16 %v124
    %v455 = vunpack.c.h.b16 %v124
    %v456 = vunpack.c.l.b16 %v125
    %v457 = vunpack.c.h.b16 %v125
    %v458 = vunpack.c.l.b16 %v126
    %v459 = vunpack.c.h.b16 %v126
    %v460 = vunpack.c.l.b16 %v127
    %v461 = vunpack.c.h.b16 %v127
    %v462 = vunpack.c.l.b16 %v128
    %v463 = vunpack.c.h.b16 %v128
    %v464 = vunpack.c.l.b16 %v129
    %v465 = vunpack.c.h.b16 %v129
    %v466 = vunpack.c.l.b16 %v130
    %v467 = vunpack.c.h.b16 %v130
    %v468 = vunpack.c.l.b16 %v131
    %v469 = vunpack.c.h.b16 %v131
    %v470 = vunpack.c.l.b16 %v132
    %v471 = vunpack.c.h.b16 %v132
    %v472 = vunpack.c.l.b16 %v133
    %v473 = vunpack.c.h.b16 %v133
    %v474 = vunpack.c.l.b16 %v134
    %v475 = vunpack.c.h.b16 %v134
    %v476 = vunpack.c.l.b16 %v135
    %v477 = vunpack.c.h.b16 %v135
    %v478 = vunpack.c.l.b16 %v136
    %v479 = vunpack.c.h.b16 %v136
    %v480 = vunpack.c.l.b16 %v137
    %v481 = vunpack.c.h.b16 %v137
    %v482 = vunpack.c.l.b16 %v138
    %v483 = vunpack.c.h.b16 %v138
    %v484 = vunpack.c.l.b16 %v139
    %v485 = vunpack.c.h.b16 %v139
    %v486 = vunpack.c.l.b16 %v140
    %v487 = vunpack.c.h.b16 %v140
    %v488 = vunpack.c.l.b16 %v141
    %v489 = vunpack.c.h.b16 %v141
    %v490 = vunpack.c.l.b16 %v142
    %v491 = vunpack.c.h.b16 %v142
    %v492 = vunpack.c.l.b16 %v143
    %v493 = vunpack.c.h.b16 %v143
    %v494 = vunpack.c.l.b16 %v144
    %v495 = vunpack.c.h.b16 %v144
    %v496 = vunpack.c.l.b16 %v145
    %v497 = vunpack.c.h.b16 %v145
    %v498 = vunpack.c.l.b16 %v146
    %v499 = vunpack.c.h.b16 %v146
    %v500 = vunpack.c.l.b16 %v147
    %v501 = vunpack.c.h.b16 %v147
    %v502 = vunpack.c.l.b16 %v148
    %v503 = vunpack.c.h.b16 %v148
    %v504 = vunpack.c.l.b16 %v149
    %v505 = vunpack.c.h.b16 %v149
    %v506 = vunpack.c.l.b16 %v150
    %v507 = vunpack.c.h.b16 %v150
    %v508 = vunpack.c.l.b16 %v151
    %v509 = vunpack.c.h.b16 %v151
    %v510 = vunpack.c.l.b16 %v152
    %v511 = vunpack.c.h.b16 %v152
    %v512 = vunpack.c.l.b16 %v153
    %v513 = vunpack.c.h.b16 %v153
    %v514 = vpack.c.b16 %v418, %v386
    %v515 = vpack.c.b16 %v419, %v387
    %v516 = vpack.c.b16 %v420, %v388
    %v517 = vpack.c.b16 %v421, %v389
    %v518 = vpack.c.b16 %v422, %v390
    %v519 = vpack.c.b16 %v423, %v391
    %v520 = vpack.c.b16 %v424, %v392
    %v521 = vpack.c.b16 %v425, %v393
    %v522 = vpack.c.b16 %v426, %v394
    %v523 = vpack.c.b16 %v427, %v395
    %v524 = vpack.c.b16 %v428, %v396
    %v525 = vpack.c.b16 %v429, %v397
    %v526 = vpack.c.b16 %v430, %v398
    %v527 = vpack.c.b16 %v431, %v399
    %v528 = vpack.c.b16 %v432, %v400
    %v529 = vpack.c.b16 %v433, %v401
    %v530 = vpack.c.b16 %v434, %v402
    %v531 = vpack.c.b16 %v435, %v403
    %v532 = vpack.c.b16 %v436, %v404
    %v533 = vpack.c.b16 %v437, %v405
    %v534 = vpack.c.b16 %v438, %v406
    %v535 = vpack.c.b16 %v439, %v407
    %v536 = vpack.c.b16 %v440, %v408
    %v537 = vpack.c.b16 %v441, %v409
    %v538 = vpack.c.b16 %v442, %v410
    %v539 = vpack.c.b16 %v443, %v411
    %v540 = vpack.c.b16 %v444, %v412
    %v541 = vpack.c.b16 %v445, %v413
    %v542 = vpack.c.b16 %v446, %v414
    %v543 = vpack.c.b16 %v447, %v415
    %v544 = vpack.c.b16 %v448, %v416
    %v545 = vpack.c.b16 %v449, %v417
    %v546 = vpack.c.b16 %v482, %v450
    %v547 = vpack.c.b16 %v483, %v451
    %v548 = vpack.c.b16 %v484, %v452
    %v549 = vpack.c.b16 %v485, %v453
    %v550 = vpack.c.b16 %v486, %v454
    %v551 = vpack.c.b16 %v487, %v455
    %v552 = vpack.c.b16 %v488, %v456
    %v553 = vpack.c.b16 %v489, %v457
    %v554 = vpack.c.b16 %v490, %v458
    %v555 = vpack.c.b16 %v491, %v459
    %v556 = vpack.c.b16 %v492, %v460
    %v557 = vpack.c.b16 %v493, %v461
    %v558 = vpack.c.b16 %v494, %v462
    %v559 = vpack.c.b16 %v495, %v463
    %v560 = vpack.c.b16 %v496, %v464
    %v561 = vpack.c.b16 %v497, %v465
    %v562 = vpack.c.b16 %v498, %v466
    %v563 = vpack.c.b16 %v499, %v467
    %v564 = vpack.c.b16 %v500, %v468
    %v565 = vpack.c.b16 %v501, %v469
    %v566 = vpack.c.b16 %v502, %v470
    %v567 = vpack.c.b16 %v503, %v471
    %v568 = vpack.c.b16 %v504, %v472
    %v569 = vpack.c.b16 %v505, %v473
    %v570 = vpack.c.b16 %v506, %v474
    %v571 = vpack.c.b16 %v507, %v475
    %v572 = vpack.c.b16 %v508, %v476
    %v573 = vpack.c.b16 %v509, %v477
    %v574 = vpack.c.b16 %v510, %v478
    %v575 = vpack.c.b16 %v511, %v479
    %v576 = vpack.c.b16 %v512, %v480
    %v577 = vpack.c.b16 %v513, %v481
    %vm642 = vcmask 261120
    %v644 = vsel %vm642, %v89, 0
    %646 = vmatprep.subr.bf16.mxu0 %v515
    %647 = vmatpush1.bf16.msra.mxu0 %v514
    %648 = vmatprep.subr.bf16.mxu0 %v547
    %649 = vmatpush1.bf16.msra.mxu0 %v546
    %650 = vmatprep.subr.bf16.mxu0 0
    %651 = vmatpush1.bf16.msra.mxu0 0
    %652 = vmatprep.subr.bf16.mxu0 0
    %653 = vmatpush1.bf16.msra.mxu0 0
    %654 = vmatprep.subr.bf16.mxu0 0
    %655 = vmatpush1.bf16.msra.mxu0 0
    %656 = vmatprep.subr.bf16.mxu0 0
    %657 = vmatpush1.bf16.msra.mxu0 0
    %658 = vmatprep.subr.bf16.mxu0 0
    %659 = vmatpush1.bf16.msra.mxu0 0
    %660 = vmatprep.subr.bf16.mxu0 0
    %661 = vmatpush1.bf16.msra.mxu0 0
    %662 = vmatprep.subr.bf16.mxu0 0
    %663 = vmatpush1.bf16.msra.mxu0 0
    %664 = vmatprep.subr.bf16.mxu0 0
    %665 = vmatpush1.bf16.msra.mxu0 0
    %666 = vmatprep.subr.bf16.mxu0 0
    %667 = vmatpush1.bf16.msra.mxu0 0
    %668 = vmatprep.subr.bf16.mxu0 0
    %669 = vmatpush1.bf16.msra.mxu0 0
    %670 = vmatprep.subr.bf16.mxu0 0
    %671 = vmatpush1.bf16.msra.mxu0 0
    %672 = vmatprep.subr.bf16.mxu0 0
    %673 = vmatpush1.bf16.msra.mxu0 0
    %674 = vmatprep.subr.bf16.mxu0 0
    %675 = vmatpush1.bf16.msra.mxu0 0
    %676 = vmatprep.subr.bf16.mxu0 0
    %677 = vmatpush1.bf16.msra.mxu0 0
    %678 = vmatprep.mubr.bf16.mxu0 0
    %679 = vmatmul.mubr.bf16.gmra.mrb[0].mxu0 %v644
    %v680 = vpop.f32.mrb[0].mxu0
    %v681 = vadd.f32 %v165, %v680
    %v682 = vpop.f32.mrb[0].mxu0
    %v683 = vadd.f32 %v169, %v682
    %v684 = vpop.f32.mrb[0].mxu0
    %v685 = vpop.f32.mrb[0].mxu0
    %686 = vdwg.mxu0
    %687 = vmatprep.subr.bf16.mxu0 %v517
    %688 = vmatpush1.bf16.msra.mxu0 %v516
    %689 = vmatprep.subr.bf16.mxu0 %v549
    %690 = vmatpush1.bf16.msra.mxu0 %v548
    %691 = vmatprep.subr.bf16.mxu0 0
    %692 = vmatpush1.bf16.msra.mxu0 0
    %693 = vmatprep.subr.bf16.mxu0 0
    %694 = vmatpush1.bf16.msra.mxu0 0
    %695 = vmatprep.subr.bf16.mxu0 0
    %696 = vmatpush1.bf16.msra.mxu0 0
    %697 = vmatprep.subr.bf16.mxu0 0
    %698 = vmatpush1.bf16.msra.mxu0 0
    %699 = vmatprep.subr.bf16.mxu0 0
    %700 = vmatpush1.bf16.msra.mxu0 0
    %701 = vmatprep.subr.bf16.mxu0 0
    %702 = vmatpush1.bf16.msra.mxu0 0
    %703 = vmatprep.subr.bf16.mxu0 0
    %704 = vmatpush1.bf16.msra.mxu0 0
    %705 = vmatprep.subr.bf16.mxu0 0
    %706 = vmatpush1.bf16.msra.mxu0 0
    %707 = vmatprep.subr.bf16.mxu0 0
    %708 = vmatpush1.bf16.msra.mxu0 0
    %709 = vmatprep.subr.bf16.mxu0 0
    %710 = vmatpush1.bf16.msra.mxu0 0
    %711 = vmatprep.subr.bf16.mxu0 0
    %712 = vmatpush1.bf16.msra.mxu0 0
    %713 = vmatprep.subr.bf16.mxu0 0
    %714 = vmatpush1.bf16.msra.mxu0 0
    %715 = vmatprep.subr.bf16.mxu0 0
    %716 = vmatpush1.bf16.msra.mxu0 0
    %717 = vmatprep.subr.bf16.mxu0 0
    %718 = vmatpush1.bf16.msra.mxu0 0
    %719 = vmatprep.mubr.bf16.mxu0 0
    %720 = vmatmul.mubr.bf16.gmra.mrb[0].mxu0 %v644
    %v721 = vpop.f32.mrb[0].mxu0
    %v722 = vadd.f32 %v173, %v721
    %v723 = vpop.f32.mrb[0].mxu0
    %v724 = vadd.f32 %v177, %v723
    %v725 = vpop.f32.mrb[0].mxu0
    %v726 = vpop.f32.mrb[0].mxu0
    %727 = vdwg.mxu0
    %728 = vmatprep.subr.bf16.mxu0 %v519
    %729 = vmatpush1.bf16.msra.mxu0 %v518
    %730 = vmatprep.subr.bf16.mxu0 %v551
    %731 = vmatpush1.bf16.msra.mxu0 %v550
    %732 = vmatprep.subr.bf16.mxu0 0
    %733 = vmatpush1.bf16.msra.mxu0 0
    %734 = vmatprep.subr.bf16.mxu0 0
    %735 = vmatpush1.bf16.msra.mxu0 0
    %736 = vmatprep.subr.bf16.mxu0 0
    %737 = vmatpush1.bf16.msra.mxu0 0
    %738 = vmatprep.subr.bf16.mxu0 0
    %739 = vmatpush1.bf16.msra.mxu0 0
    %740 = vmatprep.subr.bf16.mxu0 0
    %741 = vmatpush1.bf16.msra.mxu0 0
    %742 = vmatprep.subr.bf16.mxu0 0
    %743 = vmatpush1.bf16.msra.mxu0 0
    %744 = vmatprep.subr.bf16.mxu0 0
    %745 = vmatpush1.bf16.msra.mxu0 0
    %746 = vmatprep.subr.bf16.mxu0 0
    %747 = vmatpush1.bf16.msra.mxu0 0
    %748 = vmatprep.subr.bf16.mxu0 0
    %749 = vmatpush1.bf16.msra.mxu0 0
    %750 = vmatprep.subr.bf16.mxu0 0
    %751 = vmatpush1.bf16.msra.mxu0 0
    %752 = vmatprep.subr.bf16.mxu0 0
    %753 = vmatpush1.bf16.msra.mxu0 0
    %754 = vmatprep.subr.bf16.mxu0 0
    %755 = vmatpush1.bf16.msra.mxu0 0
    %756 = vmatprep.subr.bf16.mxu0 0
    %757 = vmatpush1.bf16.msra.mxu0 0
    %758 = vmatprep.subr.bf16.mxu0 0
    %759 = vmatpush1.bf16.msra.mxu0 0
    %760 = vmatprep.mubr.bf16.mxu0 0
    %761 = vmatmul.mubr.bf16.gmra.mrb[0].mxu0 %v644
    %v762 = vpop.f32.mrb[0].mxu0
    %v763 = vadd.f32 %v181, %v762
    %v764 = vpop.f32.mrb[0].mxu0
    %v765 = vadd.f32 %v185, %v764
    %v766 = vpop.f32.mrb[0].mxu0
    %v767 = vpop.f32.mrb[0].mxu0
    %768 = vdwg.mxu0
    %769 = vmatprep.subr.bf16.mxu0 %v521
    %770 = vmatpush1.bf16.msra.mxu0 %v520
    %771 = vmatprep.subr.bf16.mxu0 %v553
    %772 = vmatpush1.bf16.msra.mxu0 %v552
    %773 = vmatprep.subr.bf16.mxu0 0
    %774 = vmatpush1.bf16.msra.mxu0 0
    %775 = vmatprep.subr.bf16.mxu0 0
    %776 = vmatpush1.bf16.msra.mxu0 0
    %777 = vmatprep.subr.bf16.mxu0 0
    %778 = vmatpush1.bf16.msra.mxu0 0
    %779 = vmatprep.subr.bf16.mxu0 0
    %780 = vmatpush1.bf16.msra.mxu0 0
    %781 = vmatprep.subr.bf16.mxu0 0
    %782 = vmatpush1.bf16.msra.mxu0 0
    %783 = vmatprep.subr.bf16.mxu0 0
    %784 = vmatpush1.bf16.msra.mxu0 0
    %785 = vmatprep.subr.bf16.mxu0 0
    %786 = vmatpush1.bf16.msra.mxu0 0
    %787 = vmatprep.subr.bf16.mxu0 0
    %788 = vmatpush1.bf16.msra.mxu0 0
    %789 = vmatprep.subr.bf16.mxu0 0
    %790 = vmatpush1.bf16.msra.mxu0 0
    %791 = vmatprep.subr.bf16.mxu0 0
    %792 = vmatpush1.bf16.msra.mxu0 0
    %793 = vmatprep.subr.bf16.mxu0 0
    %794 = vmatpush1.bf16.msra.mxu0 0
    %795 = vmatprep.subr.bf16.mxu0 0
    %796 = vmatpush1.bf16.msra.mxu0 0
    %797 = vmatprep.subr.bf16.mxu0 0
    %798 = vmatpush1.bf16.msra.mxu0 0
    %799 = vmatprep.subr.bf16.mxu0 0
    %800 = vmatpush1.bf16.msra.mxu0 0
    %801 = vmatprep.mubr.bf16.mxu0 0
    %802 = vmatmul.mubr.bf16.gmra.mrb[0].mxu0 %v644
    %v803 = vpop.f32.mrb[0].mxu0
    %v804 = vadd.f32 %v189, %v803
    %v805 = vpop.f32.mrb[0].mxu0
    %v806 = vadd.f32 %v193, %v805
    %v807 = vpop.f32.mrb[0].mxu0
    %v808 = vpop.f32.mrb[0].mxu0
    %809 = vdwg.mxu0
    %810 = vmatprep.subr.bf16.mxu0 %v523
    %811 = vmatpush1.bf16.msra.mxu0 %v522
    %812 = vmatprep.subr.bf16.mxu0 %v555
    %813 = vmatpush1.bf16.msra.mxu0 %v554
    %814 = vmatprep.subr.bf16.mxu0 0
    %815 = vmatpush1.bf16.msra.mxu0 0
    %816 = vmatprep.subr.bf16.mxu0 0
    %817 = vmatpush1.bf16.msra.mxu0 0
    %818 = vmatprep.subr.bf16.mxu0 0
    %819 = vmatpush1.bf16.msra.mxu0 0
    %820 = vmatprep.subr.bf16.mxu0 0
    %821 = vmatpush1.bf16.msra.mxu0 0
    %822 = vmatprep.subr.bf16.mxu0 0
    %823 = vmatpush1.bf16.msra.mxu0 0
    %824 = vmatprep.subr.bf16.mxu0 0
    %825 = vmatpush1.bf16.msra.mxu0 0
    %826 = vmatprep.subr.bf16.mxu0 0
    %827 = vmatpush1.bf16.msra.mxu0 0
    %828 = vmatprep.subr.bf16.mxu0 0
    %829 = vmatpush1.bf16.msra.mxu0 0
    %830 = vmatprep.subr.bf16.mxu0 0
    %831 = vmatpush1.bf16.msra.mxu0 0
    %832 = vmatprep.subr.bf16.mxu0 0
    %833 = vmatpush1.bf16.msra.mxu0 0
    %834 = vmatprep.subr.bf16.mxu0 0
    %835 = vmatpush1.bf16.msra.mxu0 0
    %836 = vmatprep.subr.bf16.mxu0 0
    %837 = vmatpush1.bf16.msra.mxu0 0
    %838 = vmatprep.subr.bf16.mxu0 0
    %839 = vmatpush1.bf16.msra.mxu0 0
    %840 = vmatprep.subr.bf16.mxu0 0
    %841 = vmatpush1.bf16.msra.mxu0 0
    %842 = vmatprep.mubr.bf16.mxu0 0
    %843 = vmatmul.mubr.bf16.gmra.mrb[0].mxu0 %v644
    %v844 = vpop.f32.mrb[0].mxu0
    %v845 = vadd.f32 %v197, %v844
    %v846 = vpop.f32.mrb[0].mxu0
    %v847 = vadd.f32 %v201, %v846
    %v848 = vpop.f32.mrb[0].mxu0
    %v849 = vpop.f32.mrb[0].mxu0
    %850 = vdwg.mxu0
    %851 = vmatprep.subr.bf16.mxu0 %v525
    %852 = vmatpush1.bf16.msra.mxu0 %v524
    %853 = vmatprep.subr.bf16.mxu0 %v557
    %854 = vmatpush1.bf16.msra.mxu0 %v556
    %855 = vmatprep.subr.bf16.mxu0 0
    %856 = vmatpush1.bf16.msra.mxu0 0
    %857 = vmatprep.subr.bf16.mxu0 0
    %858 = vmatpush1.bf16.msra.mxu0 0
    %859 = vmatprep.subr.bf16.mxu0 0
    %860 = vmatpush1.bf16.msra.mxu0 0
    %861 = vmatprep.subr.bf16.mxu0 0
    %862 = vmatpush1.bf16.msra.mxu0 0
    %863 = vmatprep.subr.bf16.mxu0 0
    %864 = vmatpush1.bf16.msra.mxu0 0
    %865 = vmatprep.subr.bf16.mxu0 0
    %866 = vmatpush1.bf16.msra.mxu0 0
    %867 = vmatprep.subr.bf16.mxu0 0
    %868 = vmatpush1.bf16.msra.mxu0 0
    %869 = vmatprep.subr.bf16.mxu0 0
    %870 = vmatpush1.bf16.msra.mxu0 0
    %871 = vmatprep.subr.bf16.mxu0 0
    %872 = vmatpush1.bf16.msra.mxu0 0
    %873 = vmatprep.subr.bf16.mxu0 0
    %874 = vmatpush1.bf16.msra.mxu0 0
    %875 = vmatprep.subr.bf16.mxu0 0
    %876 = vmatpush1.bf16.msra.mxu0 0
    %877 = vmatprep.subr.bf16.mxu0 0
    %878 = vmatpush1.bf16.msra.mxu0 0
    %879 = vmatprep.subr.bf16.mxu0 0
    %880 = vmatpush1.bf16.msra.mxu0 0
    %881 = vmatprep.subr.bf16.mxu0 0
    %882 = vmatpush1.bf16.msra.mxu0 0
    %883 = vmatprep.mubr.bf16.mxu0 0
    %884 = vmatmul.mubr.bf16.gmra.mrb[0].mxu0 %v644
    %v885 = vpop.f32.mrb[0].mxu0
    %v886 = vadd.f32 %v205, %v885
    %v887 = vpop.f32.mrb[0].mxu0
    %v888 = vadd.f32 %v209, %v887
    %v889 = vpop.f32.mrb[0].mxu0
    %v890 = vpop.f32.mrb[0].mxu0
    %891 = vdwg.mxu0
    %892 = vmatprep.subr.bf16.mxu0 %v527
    %893 = vmatpush1.bf16.msra.mxu0 %v526
    %894 = vmatprep.subr.bf16.mxu0 %v559
    %895 = vmatpush1.bf16.msra.mxu0 %v558
    %896 = vmatprep.subr.bf16.mxu0 0
    %897 = vmatpush1.bf16.msra.mxu0 0
    %898 = vmatprep.subr.bf16.mxu0 0
    %899 = vmatpush1.bf16.msra.mxu0 0
    %900 = vmatprep.subr.bf16.mxu0 0
    %901 = vmatpush1.bf16.msra.mxu0 0
    %902 = vmatprep.subr.bf16.mxu0 0
    %903 = vmatpush1.bf16.msra.mxu0 0
    %904 = vmatprep.subr.bf16.mxu0 0
    %905 = vmatpush1.bf16.msra.mxu0 0
    %906 = vmatprep.subr.bf16.mxu0 0
    %907 = vmatpush1.bf16.msra.mxu0 0
    %908 = vmatprep.subr.bf16.mxu0 0
    %909 = vmatpush1.bf16.msra.mxu0 0
    %910 = vmatprep.subr.bf16.mxu0 0
    %911 = vmatpush1.bf16.msra.mxu0 0
    %912 = vmatprep.subr.bf16.mxu0 0
    %913 = vmatpush1.bf16.msra.mxu0 0
    %914 = vmatprep.subr.bf16.mxu0 0
    %915 = vmatpush1.bf16.msra.mxu0 0
    %916 = vmatprep.subr.bf16.mxu0 0
    %917 = vmatpush1.bf16.msra.mxu0 0
    %918 = vmatprep.subr.bf16.mxu0 0
    %919 = vmatpush1.bf16.msra.mxu0 0
    %920 = vmatprep.subr.bf16.mxu0 0
    %921 = vmatpush1.bf16.msra.mxu0 0
    %922 = vmatprep.subr.bf16.mxu0 0
    %923 = vmatpush1.bf16.msra.mxu0 0
    %924 = vmatprep.mubr.bf16.mxu0 0
    %925 = vmatmul.mubr.bf16.gmra.mrb[0].mxu0 %v644
    %v926 = vpop.f32.mrb[0].mxu0
    %v927 = vadd.f32 %v213, %v926
    %v928 = vpop.f32.mrb[0].mxu0
    %v929 = vadd.f32 %v217, %v928
    %v930 = vpop.f32.mrb[0].mxu0
    %v931 = vpop.f32.mrb[0].mxu0
    %932 = vdwg.mxu0
    %933 = vmatprep.subr.bf16.mxu0 %v529
    %934 = vmatpush1.bf16.msra.mxu0 %v528
    %935 = vmatprep.subr.bf16.mxu0 %v561
    %936 = vmatpush1.bf16.msra.mxu0 %v560
    %937 = vmatprep.subr.bf16.mxu0 0
    %938 = vmatpush1.bf16.msra.mxu0 0
    %939 = vmatprep.subr.bf16.mxu0 0
    %940 = vmatpush1.bf16.msra.mxu0 0
    %941 = vmatprep.subr.bf16.mxu0 0
    %942 = vmatpush1.bf16.msra.mxu0 0
    %943 = vmatprep.subr.bf16.mxu0 0
    %944 = vmatpush1.bf16.msra.mxu0 0
    %945 = vmatprep.subr.bf16.mxu0 0
    %946 = vmatpush1.bf16.msra.mxu0 0
    %947 = vmatprep.subr.bf16.mxu0 0
    %948 = vmatpush1.bf16.msra.mxu0 0
    %949 = vmatprep.subr.bf16.mxu0 0
    %950 = vmatpush1.bf16.msra.mxu0 0
    %951 = vmatprep.subr.bf16.mxu0 0
    %952 = vmatpush1.bf16.msra.mxu0 0
    %953 = vmatprep.subr.bf16.mxu0 0
    %954 = vmatpush1.bf16.msra.mxu0 0
    %955 = vmatprep.subr.bf16.mxu0 0
    %956 = vmatpush1.bf16.msra.mxu0 0
    %957 = vmatprep.subr.bf16.mxu0 0
    %958 = vmatpush1.bf16.msra.mxu0 0
    %959 = vmatprep.subr.bf16.mxu0 0
    %960 = vmatpush1.bf16.msra.mxu0 0
    %961 = vmatprep.subr.bf16.mxu0 0
    %962 = vmatpush1.bf16.msra.mxu0 0
    %963 = vmatprep.subr.bf16.mxu0 0
    %964 = vmatpush1.bf16.msra.mxu0 0
    %965 = vmatprep.mubr.bf16.mxu0 0
    %966 = vmatmul.mubr.bf16.gmra.mrb[0].mxu0 %v644
    %v967 = vpop.f32.mrb[0].mxu0
    %v968 = vadd.f32 %v221, %v967
    %v969 = vpop.f32.mrb[0].mxu0
    %v970 = vadd.f32 %v225, %v969
    %v971 = vpop.f32.mrb[0].mxu0
    %v972 = vpop.f32.mrb[0].mxu0
    %973 = vdwg.mxu0
    %974 = vmatprep.subr.bf16.mxu0 %v531
    %975 = vmatpush1.bf16.msra.mxu0 %v530
    %976 = vmatprep.subr.bf16.mxu0 %v563
    %977 = vmatpush1.bf16.msra.mxu0 %v562
    %978 = vmatprep.subr.bf16.mxu0 0
    %979 = vmatpush1.bf16.msra.mxu0 0
    %980 = vmatprep.subr.bf16.mxu0 0
    %981 = vmatpush1.bf16.msra.mxu0 0
    %982 = vmatprep.subr.bf16.mxu0 0
    %983 = vmatpush1.bf16.msra.mxu0 0
    %984 = vmatprep.subr.bf16.mxu0 0
    %985 = vmatpush1.bf16.msra.mxu0 0
    %986 = vmatprep.subr.bf16.mxu0 0
    %987 = vmatpush1.bf16.msra.mxu0 0
    %988 = vmatprep.subr.bf16.mxu0 0
    %989 = vmatpush1.bf16.msra.mxu0 0
    %990 = vmatprep.subr.bf16.mxu0 0
    %991 = vmatpush1.bf16.msra.mxu0 0
    %992 = vmatprep.subr.bf16.mxu0 0
    %993 = vmatpush1.bf16.msra.mxu0 0
    %994 = vmatprep.subr.bf16.mxu0 0
    %995 = vmatpush1.bf16.msra.mxu0 0
    %996 = vmatprep.subr.bf16.mxu0 0
    %997 = vmatpush1.bf16.msra.mxu0 0
    %998 = vmatprep.subr.bf16.mxu0 0
    %999 = vmatpush1.bf16.msra.mxu0 0
    %1000 = vmatprep.subr.bf16.mxu0 0
    %1001 = vmatpush1.bf16.msra.mxu0 0
    %1002 = vmatprep.subr.bf16.mxu0 0
    %1003 = vmatpush1.bf16.msra.mxu0 0
    %1004 = vmatprep.subr.bf16.mxu0 0
    %1005 = vmatpush1.bf16.msra.mxu0 0
    %1006 = vmatprep.mubr.bf16.mxu0 0
    %1007 = vmatmul.mubr.bf16.gmra.mrb[0].mxu0 %v644
    %v1008 = vpop.f32.mrb[0].mxu0
    %v1009 = vadd.f32 %v229, %v1008
    %v1010 = vpop.f32.mrb[0].mxu0
    %v1011 = vadd.f32 %v233, %v1010
    %v1012 = vpop.f32.mrb[0].mxu0
    %v1013 = vpop.f32.mrb[0].mxu0
    %1014 = vdwg.mxu0
    %1015 = vmatprep.subr.bf16.mxu0 %v533
    %1016 = vmatpush1.bf16.msra.mxu0 %v532
    %1017 = vmatprep.subr.bf16.mxu0 %v565
    %1018 = vmatpush1.bf16.msra.mxu0 %v564
    %1019 = vmatprep.subr.bf16.mxu0 0
    %1020 = vmatpush1.bf16.msra.mxu0 0
    %1021 = vmatprep.subr.bf16.mxu0 0
    %1022 = vmatpush1.bf16.msra.mxu0 0
    %1023 = vmatprep.subr.bf16.mxu0 0
    %1024 = vmatpush1.bf16.msra.mxu0 0
    %1025 = vmatprep.subr.bf16.mxu0 0
    %1026 = vmatpush1.bf16.msra.mxu0 0
    %1027 = vmatprep.subr.bf16.mxu0 0
    %1028 = vmatpush1.bf16.msra.mxu0 0
    %1029 = vmatprep.subr.bf16.mxu0 0
    %1030 = vmatpush1.bf16.msra.mxu0 0
    %1031 = vmatprep.subr.bf16.mxu0 0
    %1032 = vmatpush1.bf16.msra.mxu0 0
    %1033 = vmatprep.subr.bf16.mxu0 0
    %1034 = vmatpush1.bf16.msra.mxu0 0
    %1035 = vmatprep.subr.bf16.mxu0 0
    %1036 = vmatpush1.bf16.msra.mxu0 0
    %1037 = vmatprep.subr.bf16.mxu0 0
    %1038 = vmatpush1.bf16.msra.mxu0 0
    %1039 = vmatprep.subr.bf16.mxu0 0
    %1040 = vmatpush1.bf16.msra.mxu0 0
    %1041 = vmatprep.subr.bf16.mxu0 0
    %1042 = vmatpush1.bf16.msra.mxu0 0
    %1043 = vmatprep.subr.bf16.mxu0 0
    %1044 = vmatpush1.bf16.msra.mxu0 0
    %1045 = vmatprep.subr.bf16.mxu0 0
    %1046 = vmatpush1.bf16.msra.mxu0 0
    %1047 = vmatprep.mubr.bf16.mxu0 0
    %1048 = vmatmul.mubr.bf16.gmra.mrb[0].mxu0 %v644
    %v1049 = vpop.f32.mrb[0].mxu0
    %v1050 = vadd.f32 %v237, %v1049
    %v1051 = vpop.f32.mrb[0].mxu0
    %v1052 = vadd.f32 %v241, %v1051
    %v1053 = vpop.f32.mrb[0].mxu0
    %v1054 = vpop.f32.mrb[0].mxu0
    %1055 = vdwg.mxu0
    %1056 = vmatprep.subr.bf16.mxu0 %v535
    %1057 = vmatpush1.bf16.msra.mxu0 %v534
    %1058 = vmatprep.subr.bf16.mxu0 %v567
    %1059 = vmatpush1.bf16.msra.mxu0 %v566
    %1060 = vmatprep.subr.bf16.mxu0 0
    %1061 = vmatpush1.bf16.msra.mxu0 0
    %1062 = vmatprep.subr.bf16.mxu0 0
    %1063 = vmatpush1.bf16.msra.mxu0 0
    %1064 = vmatprep.subr.bf16.mxu0 0
    %1065 = vmatpush1.bf16.msra.mxu0 0
    %1066 = vmatprep.subr.bf16.mxu0 0
    %1067 = vmatpush1.bf16.msra.mxu0 0
    %1068 = vmatprep.subr.bf16.mxu0 0
    %1069 = vmatpush1.bf16.msra.mxu0 0
    %1070 = vmatprep.subr.bf16.mxu0 0
    %1071 = vmatpush1.bf16.msra.mxu0 0
    %1072 = vmatprep.subr.bf16.mxu0 0
    %1073 = vmatpush1.bf16.msra.mxu0 0
    %1074 = vmatprep.subr.bf16.mxu0 0
    %1075 = vmatpush1.bf16.msra.mxu0 0
    %1076 = vmatprep.subr.bf16.mxu0 0
    %1077 = vmatpush1.bf16.msra.mxu0 0
    %1078 = vmatprep.subr.bf16.mxu0 0
    %1079 = vmatpush1.bf16.msra.mxu0 0
    %1080 = vmatprep.subr.bf16.mxu0 0
    %1081 = vmatpush1.bf16.msra.mxu0 0
    %1082 = vmatprep.subr.bf16.mxu0 0
    %1083 = vmatpush1.bf16.msra.mxu0 0
    %1084 = vmatprep.subr.bf16.mxu0 0
    %1085 = vmatpush1.bf16.msra.mxu0 0
    %1086 = vmatprep.subr.bf16.mxu0 0
    %1087 = vmatpush1.bf16.msra.mxu0 0
    %1088 = vmatprep.mubr.bf16.mxu0 0
    %1089 = vmatmul.mubr.bf16.gmra.mrb[0].mxu0 %v644
    %v1090 = vpop.f32.mrb[0].mxu0
    %v1091 = vadd.f32 %v245, %v1090
    %v1092 = vpop.f32.mrb[0].mxu0
    %v1093 = vadd.f32 %v249, %v1092
    %v1094 = vpop.f32.mrb[0].mxu0
    %v1095 = vpop.f32.mrb[0].mxu0
    %1096 = vdwg.mxu0
    %1097 = vmatprep.subr.bf16.mxu0 %v537
    %1098 = vmatpush1.bf16.msra.mxu0 %v536
    %1099 = vmatprep.subr.bf16.mxu0 %v569
    %1100 = vmatpush1.bf16.msra.mxu0 %v568
    %1101 = vmatprep.subr.bf16.mxu0 0
    %1102 = vmatpush1.bf16.msra.mxu0 0
    %1103 = vmatprep.subr.bf16.mxu0 0
    %1104 = vmatpush1.bf16.msra.mxu0 0
    %1105 = vmatprep.subr.bf16.mxu0 0
    %1106 = vmatpush1.bf16.msra.mxu0 0
    %1107 = vmatprep.subr.bf16.mxu0 0
    %1108 = vmatpush1.bf16.msra.mxu0 0
    %1109 = vmatprep.subr.bf16.mxu0 0
    %1110 = vmatpush1.bf16.msra.mxu0 0
    %1111 = vmatprep.subr.bf16.mxu0 0
    %1112 = vmatpush1.bf16.msra.mxu0 0
    %1113 = vmatprep.subr.bf16.mxu0 0
    %1114 = vmatpush1.bf16.msra.mxu0 0
    %1115 = vmatprep.subr.bf16.mxu0 0
    %1116 = vmatpush1.bf16.msra.mxu0 0
    %1117 = vmatprep.subr.bf16.mxu0 0
    %1118 = vmatpush1.bf16.msra.mxu0 0
    %1119 = vmatprep.subr.bf16.mxu0 0
    %1120 = vmatpush1.bf16.msra.mxu0 0
    %1121 = vmatprep.subr.bf16.mxu0 0
    %1122 = vmatpush1.bf16.msra.mxu0 0
    %1123 = vmatprep.subr.bf16.mxu0 0
    %1124 = vmatpush1.bf16.msra.mxu0 0
    %1125 = vmatprep.subr.bf16.mxu0 0
    %1126 = vmatpush1.bf16.msra.mxu0 0
    %1127 = vmatprep.subr.bf16.mxu0 0
    %1128 = vmatpush1.bf16.msra.mxu0 0
    %1129 = vmatprep.mubr.bf16.mxu0 0
    %1130 = vmatmul.mubr.bf16.gmra.mrb[0].mxu0 %v644
    %v1131 = vpop.f32.mrb[0].mxu0
    %v1132 = vadd.f32 %v253, %v1131
    %v1133 = vpop.f32.mrb[0].mxu0
    %v1134 = vadd.f32 %v257, %v1133
    %v1135 = vpop.f32.mrb[0].mxu0
    %v1136 = vpop.f32.mrb[0].mxu0
    %1137 = vdwg.mxu0
    %1138 = vmatprep.subr.bf16.mxu0 %v539
    %1139 = vmatpush1.bf16.msra.mxu0 %v538
    %1140 = vmatprep.subr.bf16.mxu0 %v571
    %1141 = vmatpush1.bf16.msra.mxu0 %v570
    %1142 = vmatprep.subr.bf16.mxu0 0
    %1143 = vmatpush1.bf16.msra.mxu0 0
    %1144 = vmatprep.subr.bf16.mxu0 0
    %1145 = vmatpush1.bf16.msra.mxu0 0
    %1146 = vmatprep.subr.bf16.mxu0 0
    %1147 = vmatpush1.bf16.msra.mxu0 0
    %1148 = vmatprep.subr.bf16.mxu0 0
    %1149 = vmatpush1.bf16.msra.mxu0 0
    %1150 = vmatprep.subr.bf16.mxu0 0
    %1151 = vmatpush1.bf16.msra.mxu0 0
    %1152 = vmatprep.subr.bf16.mxu0 0
    %1153 = vmatpush1.bf16.msra.mxu0 0
    %1154 = vmatprep.subr.bf16.mxu0 0
    %1155 = vmatpush1.bf16.msra.mxu0 0
    %1156 = vmatprep.subr.bf16.mxu0 0
    %1157 = vmatpush1.bf16.msra.mxu0 0
    %1158 = vmatprep.subr.bf16.mxu0 0
    %1159 = vmatpush1.bf16.msra.mxu0 0
    %1160 = vmatprep.subr.bf16.mxu0 0
    %1161 = vmatpush1.bf16.msra.mxu0 0
    %1162 = vmatprep.subr.bf16.mxu0 0
    %1163 = vmatpush1.bf16.msra.mxu0 0
    %1164 = vmatprep.subr.bf16.mxu0 0
    %1165 = vmatpush1.bf16.msra.mxu0 0
    %1166 = vmatprep.subr.bf16.mxu0 0
    %1167 = vmatpush1.bf16.msra.mxu0 0
    %1168 = vmatprep.subr.bf16.mxu0 0
    %1169 = vmatpush1.bf16.msra.mxu0 0
    %1170 = vmatprep.mubr.bf16.mxu0 0
    %1171 = vmatmul.mubr.bf16.gmra.mrb[0].mxu0 %v644
    %v1172 = vpop.f32.mrb[0].mxu0
    %v1173 = vadd.f32 %v261, %v1172
    %v1174 = vpop.f32.mrb[0].mxu0
    %v1175 = vadd.f32 %v265, %v1174
    %v1176 = vpop.f32.mrb[0].mxu0
    %v1177 = vpop.f32.mrb[0].mxu0
    %1178 = vdwg.mxu0
    %1179 = vmatprep.subr.bf16.mxu0 %v541
    %1180 = vmatpush1.bf16.msra.mxu0 %v540
    %1181 = vmatprep.subr.bf16.mxu0 %v573
    %1182 = vmatpush1.bf16.msra.mxu0 %v572
    %1183 = vmatprep.subr.bf16.mxu0 0
    %1184 = vmatpush1.bf16.msra.mxu0 0
    %1185 = vmatprep.subr.bf16.mxu0 0
    %1186 = vmatpush1.bf16.msra.mxu0 0
    %1187 = vmatprep.subr.bf16.mxu0 0
    %1188 = vmatpush1.bf16.msra.mxu0 0
    %1189 = vmatprep.subr.bf16.mxu0 0
    %1190 = vmatpush1.bf16.msra.mxu0 0
    %1191 = vmatprep.subr.bf16.mxu0 0
    %1192 = vmatpush1.bf16.msra.mxu0 0
    %1193 = vmatprep.subr.bf16.mxu0 0
    %1194 = vmatpush1.bf16.msra.mxu0 0
    %1195 = vmatprep.subr.bf16.mxu0 0
    %1196 = vmatpush1.bf16.msra.mxu0 0
    %1197 = vmatprep.subr.bf16.mxu0 0
    %1198 = vmatpush1.bf16.msra.mxu0 0
    %1199 = vmatprep.subr.bf16.mxu0 0
    %1200 = vmatpush1.bf16.msra.mxu0 0
    %1201 = vmatprep.subr.bf16.mxu0 0
    %1202 = vmatpush1.bf16.msra.mxu0 0
    %1203 = vmatprep.subr.bf16.mxu0 0
    %1204 = vmatpush1.bf16.msra.mxu0 0
    %1205 = vmatprep.subr.bf16.mxu0 0
    %1206 = vmatpush1.bf16.msra.mxu0 0
    %1207 = vmatprep.subr.bf16.mxu0 0
    %1208 = vmatpush1.bf16.msra.mxu0 0
    %1209 = vmatprep.subr.bf16.mxu0 0
    %1210 = vmatpush1.bf16.msra.mxu0 0
    %1211 = vmatprep.mubr.bf16.mxu0 0
    %1212 = vmatmul.mubr.bf16.gmra.mrb[0].mxu0 %v644
    %v1213 = vpop.f32.mrb[0].mxu0
    %v1214 = vadd.f32 %v269, %v1213
    %v1215 = vpop.f32.mrb[0].mxu0
    %v1216 = vadd.f32 %v273, %v1215
    %v1217 = vpop.f32.mrb[0].mxu0
    %v1218 = vpop.f32.mrb[0].mxu0
    %1219 = vdwg.mxu0
    %1220 = vmatprep.subr.bf16.mxu0 %v543
    %1221 = vmatpush1.bf16.msra.mxu0 %v542
    %1222 = vmatprep.subr.bf16.mxu0 %v575
    %1223 = vmatpush1.bf16.msra.mxu0 %v574
    %1224 = vmatprep.subr.bf16.mxu0 0
    %1225 = vmatpush1.bf16.msra.mxu0 0
    %1226 = vmatprep.subr.bf16.mxu0 0
    %1227 = vmatpush1.bf16.msra.mxu0 0
    %1228 = vmatprep.subr.bf16.mxu0 0
    %1229 = vmatpush1.bf16.msra.mxu0 0
    %1230 = vmatprep.subr.bf16.mxu0 0
    %1231 = vmatpush1.bf16.msra.mxu0 0
    %1232 = vmatprep.subr.bf16.mxu0 0
    %1233 = vmatpush1.bf16.msra.mxu0 0
    %1234 = vmatprep.subr.bf16.mxu0 0
    %1235 = vmatpush1.bf16.msra.mxu0 0
    %1236 = vmatprep.subr.bf16.mxu0 0
    %1237 = vmatpush1.bf16.msra.mxu0 0
    %1238 = vmatprep.subr.bf16.mxu0 0
    %1239 = vmatpush1.bf16.msra.mxu0 0
    %1240 = vmatprep.subr.bf16.mxu0 0
    %1241 = vmatpush1.bf16.msra.mxu0 0
    %1242 = vmatprep.subr.bf16.mxu0 0
    %1243 = vmatpush1.bf16.msra.mxu0 0
    %1244 = vmatprep.subr.bf16.mxu0 0
    %1245 = vmatpush1.bf16.msra.mxu0 0
    %1246 = vmatprep.subr.bf16.mxu0 0
    %1247 = vmatpush1.bf16.msra.mxu0 0
    %1248 = vmatprep.subr.bf16.mxu0 0
    %1249 = vmatpush1.bf16.msra.mxu0 0
    %1250 = vmatprep.subr.bf16.mxu0 0
    %1251 = vmatpush1.bf16.msra.mxu0 0
    %1252 = vmatprep.mubr.bf16.mxu0 0
    %1253 = vmatmul.mubr.bf16.gmra.mrb[0].mxu0 %v644
    %v1254 = vpop.f32.mrb[0].mxu0
    %v1255 = vadd.f32 %v277, %v1254
    %v1256 = vpop.f32.mrb[0].mxu0
    %v1257 = vadd.f32 %v281, %v1256
    %v1258 = vpop.f32.mrb[0].mxu0
    %v1259 = vpop.f32.mrb[0].mxu0
    %1260 = vdwg.mxu0
    %1261 = vmatprep.subr.bf16.mxu0 %v545
    %1262 = vmatpush1.bf16.msra.mxu0 %v544
    %1263 = vmatprep.subr.bf16.mxu0 %v577
    %1264 = vmatpush1.bf16.msra.mxu0 %v576
    %1265 = vmatprep.subr.bf16.mxu0 0
    %1266 = vmatpush1.bf16.msra.mxu0 0
    %1267 = vmatprep.subr.bf16.mxu0 0
    %1268 = vmatpush1.bf16.msra.mxu0 0
    %1269 = vmatprep.subr.bf16.mxu0 0
    %1270 = vmatpush1.bf16.msra.mxu0 0
    %1271 = vmatprep.subr.bf16.mxu0 0
    %1272 = vmatpush1.bf16.msra.mxu0 0
    %1273 = vmatprep.subr.bf16.mxu0 0
    %1274 = vmatpush1.bf16.msra.mxu0 0
    %1275 = vmatprep.subr.bf16.mxu0 0
    %1276 = vmatpush1.bf16.msra.mxu0 0
    %1277 = vmatprep.subr.bf16.mxu0 0
    %1278 = vmatpush1.bf16.msra.mxu0 0
    %1279 = vmatprep.subr.bf16.mxu0 0
    %1280 = vmatpush1.bf16.msra.mxu0 0
    %1281 = vmatprep.subr.bf16.mxu0 0
    %1282 = vmatpush1.bf16.msra.mxu0 0
    %1283 = vmatprep.subr.bf16.mxu0 0
    %1284 = vmatpush1.bf16.msra.mxu0 0
    %1285 = vmatprep.subr.bf16.mxu0 0
    %1286 = vmatpush1.bf16.msra.mxu0 0
    %1287 = vmatprep.subr.bf16.mxu0 0
    %1288 = vmatpush1.bf16.msra.mxu0 0
    %1289 = vmatprep.subr.bf16.mxu0 0
    %1290 = vmatpush1.bf16.msra.mxu0 0
    %1291 = vmatprep.subr.bf16.mxu0 0
    %1292 = vmatpush1.bf16.msra.mxu0 0
    %1293 = vmatprep.mubr.bf16.mxu0 0
    %1294 = vmatmul.mubr.bf16.gmra.mrb[0].mxu0 %v644
    %v1295 = vpop.f32.mrb[0].mxu0
    %v1296 = vadd.f32 %v285, %v1295
    %v1297 = vpop.f32.mrb[0].mxu0
    %v1298 = vadd.f32 %v289, %v1297
    %v1299 = vpop.f32.mrb[0].mxu0
    %v1300 = vpop.f32.mrb[0].mxu0
    %1301 = vdwg.mxu0
    %v1302 = vmax.f32 %v681, 0.0
    %v1303 = vmax.f32 %v683, 0.0
    %v1304 = vmax.f32 %v722, 0.0
    %v1305 = vmax.f32 %v724, 0.0
    %v1306 = vmax.f32 %v763, 0.0
    %v1307 = vmax.f32 %v765, 0.0
    %v1308 = vmax.f32 %v804, 0.0
    %v1309 = vmax.f32 %v806, 0.0
    %v1310 = vmax.f32 %v845, 0.0
    %v1311 = vmax.f32 %v847, 0.0
    %v1312 = vmax.f32 %v886, 0.0
    %v1313 = vmax.f32 %v888, 0.0
    %v1314 = vmax.f32 %v927, 0.0
    %v1315 = vmax.f32 %v929, 0.0
    %v1316 = vmax.f32 %v968, 0.0
    %v1317 = vmax.f32 %v970, 0.0
    %v1318 = vmax.f32 %v1009, 0.0
    %v1319 = vmax.f32 %v1011, 0.0
    %v1320 = vmax.f32 %v1050, 0.0
    %v1321 = vmax.f32 %v1052, 0.0
    %v1322 = vmax.f32 %v1091, 0.0
    %v1323 = vmax.f32 %v1093, 0.0
    %v1324 = vmax.f32 %v1132, 0.0
    %v1325 = vmax.f32 %v1134, 0.0
    %v1326 = vmax.f32 %v1173, 0.0
    %v1327 = vmax.f32 %v1175, 0.0
    %v1328 = vmax.f32 %v1214, 0.0
    %v1329 = vmax.f32 %v1216, 0.0
    %v1330 = vmax.f32 %v1255, 0.0
    %v1331 = vmax.f32 %v1257, 0.0
    %v1332 = vmax.f32 %v1296, 0.0
    %v1333 = vmax.f32 %v1298, 0.0
    %v1334 = vld [vmem:[#allocation2] sm:$0x3]
    %v1335 = vpack.c.bf16 %v1302, %v1302
    %v1336 = vpack.c.bf16 %v1303, %v1303
    %v1337 = vpack.c.bf16 %v1304, %v1304
    %v1338 = vpack.c.bf16 %v1305, %v1305
    %v1339 = vpack.c.bf16 %v1306, %v1306
    %v1340 = vpack.c.bf16 %v1307, %v1307
    %v1341 = vpack.c.bf16 %v1308, %v1308
    %v1342 = vpack.c.bf16 %v1309, %v1309
    %v1343 = vpack.c.bf16 %v1310, %v1310
    %v1344 = vpack.c.bf16 %v1311, %v1311
    %v1345 = vpack.c.bf16 %v1312, %v1312
    %v1346 = vpack.c.bf16 %v1313, %v1313
    %v1347 = vpack.c.bf16 %v1314, %v1314
    %v1348 = vpack.c.bf16 %v1315, %v1315
    %v1349 = vpack.c.bf16 %v1316, %v1316
    %v1350 = vpack.c.bf16 %v1317, %v1317
    %v1351 = vpack.c.bf16 %v1318, %v1318
    %v1352 = vpack.c.bf16 %v1319, %v1319
    %v1353 = vpack.c.bf16 %v1320, %v1320
    %v1354 = vpack.c.bf16 %v1321, %v1321
    %v1355 = vpack.c.bf16 %v1322, %v1322
    %v1356 = vpack.c.bf16 %v1323, %v1323
    %v1357 = vpack.c.bf16 %v1324, %v1324
    %v1358 = vpack.c.bf16 %v1325, %v1325
    %v1359 = vpack.c.bf16 %v1326, %v1326
    %v1360 = vpack.c.bf16 %v1327, %v1327
    %v1361 = vpack.c.bf16 %v1328, %v1328
    %v1362 = vpack.c.bf16 %v1329, %v1329
    %v1363 = vpack.c.bf16 %v1330, %v1330
    %v1364 = vpack.c.bf16 %v1331, %v1331
    %v1365 = vpack.c.bf16 %v1332, %v1332
    %v1366 = vpack.c.bf16 %v1333, %v1333
    %v1367 = vld [vmem:[%s78] sm:$0xf]
    %v1368 = vld [vmem:[%s78 + $0x4] sm:$0xf]
    %v1369 = vld [vmem:[%s78 + $0x8] sm:$0xf]
    %v1370 = vld [vmem:[%s78 + $0xc] sm:$0xf]
    %v1371 = vld [vmem:[%s78 + $0x10] sm:$0xf]
    %v1372 = vld [vmem:[%s78 + $0x14] sm:$0xf]
    %v1373 = vld [vmem:[%s78 + $0x18] sm:$0xf]
    %v1374 = vld [vmem:[%s78 + $0x1c] sm:$0xf]
    %v1375 = vld [vmem:[%s78 + $0x20] sm:$0xf]
    %v1376 = vld [vmem:[%s78 + $0x24] sm:$0xf]
    %v1377 = vld [vmem:[%s78 + $0x28] sm:$0xf]
    %v1378 = vld [vmem:[%s78 + $0x2c] sm:$0xf]
    %v1379 = vld [vmem:[%s78 + $0x30] sm:$0xf]
    %v1380 = vld [vmem:[%s78 + $0x34] sm:$0xf]
    %v1381 = vld [vmem:[%s78 + $0x38] sm:$0xf]
    %v1382 = vld [vmem:[%s78 + $0x3c] sm:$0xf]
    %v1383 = vld [vmem:[%s78 + $0x40] sm:$0xf]
    %v1384 = vld [vmem:[%s78 + $0x44] sm:$0xf]
    %v1385 = vld [vmem:[%s78 + $0x48] sm:$0xf]
    %v1386 = vld [vmem:[%s78 + $0x4c] sm:$0xf]
    %v1387 = vld [vmem:[%s78 + $0x50] sm:$0xf]
    %v1388 = vld [vmem:[%s78 + $0x54] sm:$0xf]
    %v1389 = vld [vmem:[%s78 + $0x58] sm:$0xf]
    %v1390 = vld [vmem:[%s78 + $0x5c] sm:$0xf]
    %v1391 = vld [vmem:[%s78 + $0x60] sm:$0xf]
    %v1392 = vld [vmem:[%s78 + $0x64] sm:$0xf]
    %v1393 = vld [vmem:[%s78 + $0x68] sm:$0xf]
    %v1394 = vld [vmem:[%s78 + $0x6c] sm:$0xf]
    %v1395 = vld [vmem:[%s78 + $0x70] sm:$0xf]
    %v1396 = vld [vmem:[%s78 + $0x74] sm:$0xf]
    %v1397 = vld [vmem:[%s78 + $0x78] sm:$0xf]
    %v1398 = vld [vmem:[%s78 + $0x7c] sm:$0xf]
    %v1399 = vld [vmem:[%s78 + $0x80] sm:$0xf]
    %v1400 = vld [vmem:[%s78 + $0x84] sm:$0xf]
    %v1401 = vld [vmem:[%s78 + $0x88] sm:$0xf]
    %v1402 = vld [vmem:[%s78 + $0x8c] sm:$0xf]
    %v1403 = vld [vmem:[%s78 + $0x90] sm:$0xf]
    %v1404 = vld [vmem:[%s78 + $0x94] sm:$0xf]
    %v1405 = vld [vmem:[%s78 + $0x98] sm:$0xf]
    %v1406 = vld [vmem:[%s78 + $0x9c] sm:$0xf]
    %v1407 = vld [vmem:[%s78 + $0xa0] sm:$0xf]
    %v1408 = vld [vmem:[%s78 + $0xa4] sm:$0xf]
    %v1409 = vld [vmem:[%s78 + $0xa8] sm:$0xf]
    %v1410 = vld [vmem:[%s78 + $0xac] sm:$0xf]
    %v1411 = vld [vmem:[%s78 + $0xb0] sm:$0xf]
    %v1412 = vld [vmem:[%s78 + $0xb4] sm:$0xf]
    %v1413 = vld [vmem:[%s78 + $0xb8] sm:$0xf]
    %v1414 = vld [vmem:[%s78 + $0xbc] sm:$0xf]
    %v1415 = vld [vmem:[%s78 + $0xc0] sm:$0xf]
    %v1416 = vld [vmem:[%s78 + $0xc4] sm:$0xf]
    %v1417 = vld [vmem:[%s78 + $0xc8] sm:$0xf]
    %v1418 = vld [vmem:[%s78 + $0xcc] sm:$0xf]
    %v1419 = vld [vmem:[%s78 + $0xd0] sm:$0xf]
    %v1420 = vld [vmem:[%s78 + $0xd4] sm:$0xf]
    %v1421 = vld [vmem:[%s78 + $0xd8] sm:$0xf]
    %v1422 = vld [vmem:[%s78 + $0xdc] sm:$0xf]
    %v1423 = vld [vmem:[%s78 + $0xe0] sm:$0xf]
    %v1424 = vld [vmem:[%s78 + $0xe4] sm:$0xf]
    %v1425 = vld [vmem:[%s78 + $0xe8] sm:$0xf]
    %v1426 = vld [vmem:[%s78 + $0xec] sm:$0xf]
    %v1427 = vld [vmem:[%s78 + $0xf0] sm:$0xf]
    %v1428 = vld [vmem:[%s78 + $0xf4] sm:$0xf]
    %v1429 = vld [vmem:[%s78 + $0xf8] sm:$0xf]
    %v1430 = vld [vmem:[%s78 + $0xfc] sm:$0xf]
    %v1431 = vld [vmem:[%s78 + $0x100] sm:$0xf]
    %v1432 = vld [vmem:[%s78 + $0x104] sm:$0xf]
    %v1433 = vld [vmem:[%s78 + $0x108] sm:$0xf]
    %v1434 = vld [vmem:[%s78 + $0x10c] sm:$0xf]
    %v1435 = vld [vmem:[%s78 + $0x110] sm:$0xf]
    %v1436 = vld [vmem:[%s78 + $0x114] sm:$0xf]
    %v1437 = vld [vmem:[%s78 + $0x118] sm:$0xf]
    %v1438 = vld [vmem:[%s78 + $0x11c] sm:$0xf]
    %v1439 = vld [vmem:[%s78 + $0x120] sm:$0xf]
    %v1440 = vld [vmem:[%s78 + $0x124] sm:$0xf]
    %v1441 = vld [vmem:[%s78 + $0x128] sm:$0xf]
    %v1442 = vld [vmem:[%s78 + $0x12c] sm:$0xf]
    %v1443 = vld [vmem:[%s78 + $0x130] sm:$0xf]
    %v1444 = vld [vmem:[%s78 + $0x134] sm:$0xf]
    %v1445 = vld [vmem:[%s78 + $0x138] sm:$0xf]
    %v1446 = vld [vmem:[%s78 + $0x13c] sm:$0xf]
    %v1447 = vld [vmem:[%s78 + $0x140] sm:$0xf]
    %v1448 = vld [vmem:[%s78 + $0x144] sm:$0xf]
    %v1449 = vld [vmem:[%s78 + $0x148] sm:$0xf]
    %v1450 = vld [vmem:[%s78 + $0x14c] sm:$0xf]
    %v1451 = vld [vmem:[%s78 + $0x150] sm:$0xf]
    %v1452 = vld [vmem:[%s78 + $0x154] sm:$0xf]
    %v1453 = vld [vmem:[%s78 + $0x158] sm:$0xf]
    %v1454 = vld [vmem:[%s78 + $0x15c] sm:$0xf]
    %v1455 = vld [vmem:[%s78 + $0x160] sm:$0xf]
    %v1456 = vld [vmem:[%s78 + $0x164] sm:$0xf]
    %v1457 = vld [vmem:[%s78 + $0x168] sm:$0xf]
    %v1458 = vld [vmem:[%s78 + $0x16c] sm:$0xf]
    %v1459 = vld [vmem:[%s78 + $0x170] sm:$0xf]
    %v1460 = vld [vmem:[%s78 + $0x174] sm:$0xf]
    %v1461 = vld [vmem:[%s78 + $0x178] sm:$0xf]
    %v1462 = vld [vmem:[%s78 + $0x17c] sm:$0xf]
    %v1463 = vld [vmem:[%s78 + $0x180] sm:$0xf]
    %v1464 = vld [vmem:[%s78 + $0x184] sm:$0xf]
    %v1465 = vld [vmem:[%s78 + $0x188] sm:$0xf]
    %v1466 = vld [vmem:[%s78 + $0x18c] sm:$0xf]
    %v1467 = vld [vmem:[%s78 + $0x190] sm:$0xf]
    %v1468 = vld [vmem:[%s78 + $0x194] sm:$0xf]
    %v1469 = vld [vmem:[%s78 + $0x198] sm:$0xf]
    %v1470 = vld [vmem:[%s78 + $0x19c] sm:$0xf]
    %v1471 = vld [vmem:[%s78 + $0x1a0] sm:$0xf]
    %v1472 = vld [vmem:[%s78 + $0x1a4] sm:$0xf]
    %v1473 = vld [vmem:[%s78 + $0x1a8] sm:$0xf]
    %v1474 = vld [vmem:[%s78 + $0x1ac] sm:$0xf]
    %v1475 = vld [vmem:[%s78 + $0x1b0] sm:$0xf]
    %v1476 = vld [vmem:[%s78 + $0x1b4] sm:$0xf]
    %v1477 = vld [vmem:[%s78 + $0x1b8] sm:$0xf]
    %v1478 = vld [vmem:[%s78 + $0x1bc] sm:$0xf]
    %v1479 = vld [vmem:[%s78 + $0x1c0] sm:$0xf]
    %v1480 = vld [vmem:[%s78 + $0x1c4] sm:$0xf]
    %v1481 = vld [vmem:[%s78 + $0x1c8] sm:$0xf]
    %v1482 = vld [vmem:[%s78 + $0x1cc] sm:$0xf]
    %v1483 = vld [vmem:[%s78 + $0x1d0] sm:$0xf]
    %v1484 = vld [vmem:[%s78 + $0x1d4] sm:$0xf]
    %v1485 = vld [vmem:[%s78 + $0x1d8] sm:$0xf]
    %v1486 = vld [vmem:[%s78 + $0x1dc] sm:$0xf]
    %v1487 = vld [vmem:[%s78 + $0x1e0] sm:$0xf]
    %v1488 = vld [vmem:[%s78 + $0x1e4] sm:$0xf]
    %v1489 = vld [vmem:[%s78 + $0x1e8] sm:$0xf]
    %v1490 = vld [vmem:[%s78 + $0x1ec] sm:$0xf]
    %v1491 = vld [vmem:[%s78 + $0x1f0] sm:$0xf]
    %v1492 = vld [vmem:[%s78 + $0x1f4] sm:$0xf]
    %v1493 = vld [vmem:[%s78 + $0x1f8] sm:$0xf]
    %v1494 = vld [vmem:[%s78 + $0x1fc] sm:$0xf]
    %v1495 = vld [vmem:[%s78 + $0x200] sm:$0xf]
    %v1496 = vld [vmem:[%s78 + $0x204] sm:$0xf]
    %v1497 = vld [vmem:[%s78 + $0x208] sm:$0xf]
    %v1498 = vld [vmem:[%s78 + $0x20c] sm:$0xf]
    %v1499 = vld [vmem:[%s78 + $0x210] sm:$0xf]
    %v1500 = vld [vmem:[%s78 + $0x214] sm:$0xf]
    %v1501 = vld [vmem:[%s78 + $0x218] sm:$0xf]
    %v1502 = vld [vmem:[%s78 + $0x21c] sm:$0xf]
    %v1503 = vld [vmem:[%s78 + $0x220] sm:$0xf]
    %v1504 = vld [vmem:[%s78 + $0x224] sm:$0xf]
    %v1505 = vld [vmem:[%s78 + $0x228] sm:$0xf]
    %v1506 = vld [vmem:[%s78 + $0x22c] sm:$0xf]
    %v1507 = vld [vmem:[%s78 + $0x230] sm:$0xf]
    %v1508 = vld [vmem:[%s78 + $0x234] sm:$0xf]
    %v1509 = vld [vmem:[%s78 + $0x238] sm:$0xf]
    %v1510 = vld [vmem:[%s78 + $0x23c] sm:$0xf]
    %v1511 = vld [vmem:[%s78 + $0x240] sm:$0xf]
    %v1512 = vld [vmem:[%s78 + $0x244] sm:$0xf]
    %v1513 = vld [vmem:[%s78 + $0x248] sm:$0xf]
    %v1514 = vld [vmem:[%s78 + $0x24c] sm:$0xf]
    %v1515 = vld [vmem:[%s78 + $0x250] sm:$0xf]
    %v1516 = vld [vmem:[%s78 + $0x254] sm:$0xf]
    %v1517 = vld [vmem:[%s78 + $0x258] sm:$0xf]
    %v1518 = vld [vmem:[%s78 + $0x25c] sm:$0xf]
    %v1519 = vld [vmem:[%s78 + $0x260] sm:$0xf]
    %v1520 = vld [vmem:[%s78 + $0x264] sm:$0xf]
    %v1521 = vld [vmem:[%s78 + $0x268] sm:$0xf]
    %v1522 = vld [vmem:[%s78 + $0x26c] sm:$0xf]
    %v1523 = vld [vmem:[%s78 + $0x270] sm:$0xf]
    %v1524 = vld [vmem:[%s78 + $0x274] sm:$0xf]
    %v1525 = vld [vmem:[%s78 + $0x278] sm:$0xf]
    %v1526 = vld [vmem:[%s78 + $0x27c] sm:$0xf]
    %v1527 = vld [vmem:[%s78 + $0x280] sm:$0xf]
    %v1528 = vld [vmem:[%s78 + $0x284] sm:$0xf]
    %v1529 = vld [vmem:[%s78 + $0x288] sm:$0xf]
    %v1530 = vld [vmem:[%s78 + $0x28c] sm:$0xf]
    %v1531 = vld [vmem:[%s78 + $0x290] sm:$0xf]
    %v1532 = vld [vmem:[%s78 + $0x294] sm:$0xf]
    %v1533 = vld [vmem:[%s78 + $0x298] sm:$0xf]
    %v1534 = vld [vmem:[%s78 + $0x29c] sm:$0xf]
    %v1535 = vld [vmem:[%s78 + $0x2a0] sm:$0xf]
    %v1536 = vld [vmem:[%s78 + $0x2a4] sm:$0xf]
    %v1537 = vld [vmem:[%s78 + $0x2a8] sm:$0xf]
    %v1538 = vld [vmem:[%s78 + $0x2ac] sm:$0xf]
    %v1539 = vld [vmem:[%s78 + $0x2b0] sm:$0xf]
    %v1540 = vld [vmem:[%s78 + $0x2b4] sm:$0xf]
    %v1541 = vld [vmem:[%s78 + $0x2b8] sm:$0xf]
    %v1542 = vld [vmem:[%s78 + $0x2bc] sm:$0xf]
    %v1543 = vld [vmem:[%s78 + $0x2c0] sm:$0xf]
    %v1544 = vld [vmem:[%s78 + $0x2c4] sm:$0xf]
    %v1545 = vld [vmem:[%s78 + $0x2c8] sm:$0xf]
    %v1546 = vld [vmem:[%s78 + $0x2cc] sm:$0xf]
    %v1547 = vld [vmem:[%s78 + $0x2d0] sm:$0xf]
    %v1548 = vld [vmem:[%s78 + $0x2d4] sm:$0xf]
    %v1549 = vld [vmem:[%s78 + $0x2d8] sm:$0xf]
    %v1550 = vld [vmem:[%s78 + $0x2dc] sm:$0xf]
    %v1551 = vld [vmem:[%s78 + $0x2e0] sm:$0xf]
    %v1552 = vld [vmem:[%s78 + $0x2e4] sm:$0xf]
    %v1553 = vld [vmem:[%s78 + $0x2e8] sm:$0xf]
    %v1554 = vld [vmem:[%s78 + $0x2ec] sm:$0xf]
    %v1555 = vld [vmem:[%s78 + $0x2f0] sm:$0xf]
    %v1556 = vld [vmem:[%s78 + $0x2f4] sm:$0xf]
    %v1557 = vld [vmem:[%s78 + $0x2f8] sm:$0xf]
    %v1558 = vld [vmem:[%s78 + $0x2fc] sm:$0xf]
    %v1559 = vld [vmem:[%s78 + $0x300] sm:$0xf]
    %v1560 = vld [vmem:[%s78 + $0x304] sm:$0xf]
    %v1561 = vld [vmem:[%s78 + $0x308] sm:$0xf]
    %v1562 = vld [vmem:[%s78 + $0x30c] sm:$0xf]
    %v1563 = vld [vmem:[%s78 + $0x310] sm:$0xf]
    %v1564 = vld [vmem:[%s78 + $0x314] sm:$0xf]
    %v1565 = vld [vmem:[%s78 + $0x318] sm:$0xf]
    %v1566 = vld [vmem:[%s78 + $0x31c] sm:$0xf]
    %v1567 = vld [vmem:[%s78 + $0x320] sm:$0xf]
    %v1568 = vld [vmem:[%s78 + $0x324] sm:$0xf]
    %v1569 = vld [vmem:[%s78 + $0x328] sm:$0xf]
    %v1570 = vld [vmem:[%s78 + $0x32c] sm:$0xf]
    %v1571 = vld [vmem:[%s78 + $0x330] sm:$0xf]
    %v1572 = vld [vmem:[%s78 + $0x334] sm:$0xf]
    %v1573 = vld [vmem:[%s78 + $0x338] sm:$0xf]
    %v1574 = vld [vmem:[%s78 + $0x33c] sm:$0xf]
    %v1575 = vld [vmem:[%s78 + $0x340] sm:$0xf]
    %v1576 = vld [vmem:[%s78 + $0x344] sm:$0xf]
    %v1577 = vld [vmem:[%s78 + $0x348] sm:$0xf]
    %v1578 = vld [vmem:[%s78 + $0x34c] sm:$0xf]
    %v1579 = vld [vmem:[%s78 + $0x350] sm:$0xf]
    %v1580 = vld [vmem:[%s78 + $0x354] sm:$0xf]
    %v1581 = vld [vmem:[%s78 + $0x358] sm:$0xf]
    %v1582 = vld [vmem:[%s78 + $0x35c] sm:$0xf]
    %v1583 = vld [vmem:[%s78 + $0x360] sm:$0xf]
    %v1584 = vld [vmem:[%s78 + $0x364] sm:$0xf]
    %v1585 = vld [vmem:[%s78 + $0x368] sm:$0xf]
    %v1586 = vld [vmem:[%s78 + $0x36c] sm:$0xf]
    %v1587 = vld [vmem:[%s78 + $0x370] sm:$0xf]
    %v1588 = vld [vmem:[%s78 + $0x374] sm:$0xf]
    %v1589 = vld [vmem:[%s78 + $0x378] sm:$0xf]
    %v1590 = vld [vmem:[%s78 + $0x37c] sm:$0xf]
    %v1591 = vld [vmem:[%s78 + $0x380] sm:$0xf]
    %v1592 = vld [vmem:[%s78 + $0x384] sm:$0xf]
    %v1593 = vld [vmem:[%s78 + $0x388] sm:$0xf]
    %v1594 = vld [vmem:[%s78 + $0x38c] sm:$0xf]
    %v1595 = vld [vmem:[%s78 + $0x390] sm:$0xf]
    %v1596 = vld [vmem:[%s78 + $0x394] sm:$0xf]
    %v1597 = vld [vmem:[%s78 + $0x398] sm:$0xf]
    %v1598 = vld [vmem:[%s78 + $0x39c] sm:$0xf]
    %v1599 = vld [vmem:[%s78 + $0x3a0] sm:$0xf]
    %v1600 = vld [vmem:[%s78 + $0x3a4] sm:$0xf]
    %v1601 = vld [vmem:[%s78 + $0x3a8] sm:$0xf]
    %v1602 = vld [vmem:[%s78 + $0x3ac] sm:$0xf]
    %v1603 = vld [vmem:[%s78 + $0x3b0] sm:$0xf]
    %v1604 = vld [vmem:[%s78 + $0x3b4] sm:$0xf]
    %v1605 = vld [vmem:[%s78 + $0x3b8] sm:$0xf]
    %v1606 = vld [vmem:[%s78 + $0x3bc] sm:$0xf]
    %v1607 = vld [vmem:[%s78 + $0x3c0] sm:$0xf]
    %v1608 = vld [vmem:[%s78 + $0x3c4] sm:$0xf]
    %v1609 = vld [vmem:[%s78 + $0x3c8] sm:$0xf]
    %v1610 = vld [vmem:[%s78 + $0x3cc] sm:$0xf]
    %v1611 = vld [vmem:[%s78 + $0x3d0] sm:$0xf]
    %v1612 = vld [vmem:[%s78 + $0x3d4] sm:$0xf]
    %v1613 = vld [vmem:[%s78 + $0x3d8] sm:$0xf]
    %v1614 = vld [vmem:[%s78 + $0x3dc] sm:$0xf]
    %v1615 = vld [vmem:[%s78 + $0x3e0] sm:$0xf]
    %v1616 = vld [vmem:[%s78 + $0x3e4] sm:$0xf]
    %v1617 = vld [vmem:[%s78 + $0x3e8] sm:$0xf]
    %v1618 = vld [vmem:[%s78 + $0x3ec] sm:$0xf]
    %v1619 = vld [vmem:[%s78 + $0x3f0] sm:$0xf]
    %v1620 = vld [vmem:[%s78 + $0x3f4] sm:$0xf]
    %v1621 = vld [vmem:[%s78 + $0x3f8] sm:$0xf]
    %v1622 = vld [vmem:[%s78 + $0x3fc] sm:$0xf]
    %v1623 = vld [vmem:[%s78 + $0x400] sm:$0xf]
    %v1624 = vld [vmem:[%s78 + $0x404] sm:$0xf]
    %v1625 = vld [vmem:[%s78 + $0x408] sm:$0xf]
    %v1626 = vld [vmem:[%s78 + $0x40c] sm:$0xf]
    %v1627 = vld [vmem:[%s78 + $0x410] sm:$0xf]
    %v1628 = vld [vmem:[%s78 + $0x414] sm:$0xf]
    %v1629 = vld [vmem:[%s78 + $0x418] sm:$0xf]
    %v1630 = vld [vmem:[%s78 + $0x41c] sm:$0xf]
    %v1631 = vld [vmem:[%s78 + $0x420] sm:$0xf]
    %v1632 = vld [vmem:[%s78 + $0x424] sm:$0xf]
    %v1633 = vld [vmem:[%s78 + $0x428] sm:$0xf]
    %v1634 = vld [vmem:[%s78 + $0x42c] sm:$0xf]
    %v1635 = vld [vmem:[%s78 + $0x430] sm:$0xf]
    %v1636 = vld [vmem:[%s78 + $0x434] sm:$0xf]
    %v1637 = vld [vmem:[%s78 + $0x438] sm:$0xf]
    %v1638 = vld [vmem:[%s78 + $0x43c] sm:$0xf]
    %v1639 = vld [vmem:[%s78 + $0x440] sm:$0xf]
    %v1640 = vld [vmem:[%s78 + $0x444] sm:$0xf]
    %v1641 = vld [vmem:[%s78 + $0x448] sm:$0xf]
    %v1642 = vld [vmem:[%s78 + $0x44c] sm:$0xf]
    %v1643 = vld [vmem:[%s78 + $0x450] sm:$0xf]
    %v1644 = vld [vmem:[%s78 + $0x454] sm:$0xf]
    %v1645 = vld [vmem:[%s78 + $0x458] sm:$0xf]
    %v1646 = vld [vmem:[%s78 + $0x45c] sm:$0xf]
    %v1647 = vld [vmem:[%s78 + $0x460] sm:$0xf]
    %v1648 = vld [vmem:[%s78 + $0x464] sm:$0xf]
    %v1649 = vld [vmem:[%s78 + $0x468] sm:$0xf]
    %v1650 = vld [vmem:[%s78 + $0x46c] sm:$0xf]
    %v1651 = vld [vmem:[%s78 + $0x470] sm:$0xf]
    %v1652 = vld [vmem:[%s78 + $0x474] sm:$0xf]
    %v1653 = vld [vmem:[%s78 + $0x478] sm:$0xf]
    %v1654 = vld [vmem:[%s78 + $0x47c] sm:$0xf]
    %v1655 = vld [vmem:[%s78 + $0x480] sm:$0xf]
    %v1656 = vld [vmem:[%s78 + $0x484] sm:$0xf]
    %v1657 = vld [vmem:[%s78 + $0x488] sm:$0xf]
    %v1658 = vld [vmem:[%s78 + $0x48c] sm:$0xf]
    %v1659 = vld [vmem:[%s78 + $0x490] sm:$0xf]
    %v1660 = vld [vmem:[%s78 + $0x494] sm:$0xf]
    %v1661 = vld [vmem:[%s78 + $0x498] sm:$0xf]
    %v1662 = vld [vmem:[%s78 + $0x49c] sm:$0xf]
    %v1663 = vld [vmem:[%s78 + $0x4a0] sm:$0xf]
    %v1664 = vld [vmem:[%s78 + $0x4a4] sm:$0xf]
    %v1665 = vld [vmem:[%s78 + $0x4a8] sm:$0xf]
    %v1666 = vld [vmem:[%s78 + $0x4ac] sm:$0xf]
    %v1667 = vld [vmem:[%s78 + $0x4b0] sm:$0xf]
    %v1668 = vld [vmem:[%s78 + $0x4b4] sm:$0xf]
    %v1669 = vld [vmem:[%s78 + $0x4b8] sm:$0xf]
    %v1670 = vld [vmem:[%s78 + $0x4bc] sm:$0xf]
    %v1671 = vld [vmem:[%s78 + $0x4c0] sm:$0xf]
    %v1672 = vld [vmem:[%s78 + $0x4c4] sm:$0xf]
    %v1673 = vld [vmem:[%s78 + $0x4c8] sm:$0xf]
    %v1674 = vld [vmem:[%s78 + $0x4cc] sm:$0xf]
    %v1675 = vld [vmem:[%s78 + $0x4d0] sm:$0xf]
    %v1676 = vld [vmem:[%s78 + $0x4d4] sm:$0xf]
    %v1677 = vld [vmem:[%s78 + $0x4d8] sm:$0xf]
    %v1678 = vld [vmem:[%s78 + $0x4dc] sm:$0xf]
    %v1679 = vld [vmem:[%s78 + $0x4e0] sm:$0xf]
    %v1680 = vld [vmem:[%s78 + $0x4e4] sm:$0xf]
    %v1681 = vld [vmem:[%s78 + $0x4e8] sm:$0xf]
    %v1682 = vld [vmem:[%s78 + $0x4ec] sm:$0xf]
    %v1683 = vld [vmem:[%s78 + $0x4f0] sm:$0xf]
    %v1684 = vld [vmem:[%s78 + $0x4f4] sm:$0xf]
    %v1685 = vld [vmem:[%s78 + $0x4f8] sm:$0xf]
    %v1686 = vld [vmem:[%s78 + $0x4fc] sm:$0xf]
    %v1687 = vld [vmem:[%s78 + $0x500] sm:$0xf]
    %v1688 = vld [vmem:[%s78 + $0x504] sm:$0xf]
    %v1689 = vld [vmem:[%s78 + $0x508] sm:$0xf]
    %v1690 = vld [vmem:[%s78 + $0x50c] sm:$0xf]
    %v1691 = vld [vmem:[%s78 + $0x510] sm:$0xf]
    %v1692 = vld [vmem:[%s78 + $0x514] sm:$0xf]
    %v1693 = vld [vmem:[%s78 + $0x518] sm:$0xf]
    %v1694 = vld [vmem:[%s78 + $0x51c] sm:$0xf]
    %v1695 = vld [vmem:[%s78 + $0x520] sm:$0xf]
    %v1696 = vld [vmem:[%s78 + $0x524] sm:$0xf]
    %v1697 = vld [vmem:[%s78 + $0x528] sm:$0xf]
    %v1698 = vld [vmem:[%s78 + $0x52c] sm:$0xf]
    %v1699 = vld [vmem:[%s78 + $0x530] sm:$0xf]
    %v1700 = vld [vmem:[%s78 + $0x534] sm:$0xf]
    %v1701 = vld [vmem:[%s78 + $0x538] sm:$0xf]
    %v1702 = vld [vmem:[%s78 + $0x53c] sm:$0xf]
    %v1703 = vld [vmem:[%s78 + $0x540] sm:$0xf]
    %v1704 = vld [vmem:[%s78 + $0x544] sm:$0xf]
    %v1705 = vld [vmem:[%s78 + $0x548] sm:$0xf]
    %v1706 = vld [vmem:[%s78 + $0x54c] sm:$0xf]
    %v1707 = vld [vmem:[%s78 + $0x550] sm:$0xf]
    %v1708 = vld [vmem:[%s78 + $0x554] sm:$0xf]
    %v1709 = vld [vmem:[%s78 + $0x558] sm:$0xf]
    %v1710 = vld [vmem:[%s78 + $0x55c] sm:$0xf]
    %v1711 = vld [vmem:[%s78 + $0x560] sm:$0xf]
    %v1712 = vld [vmem:[%s78 + $0x564] sm:$0xf]
    %v1713 = vld [vmem:[%s78 + $0x568] sm:$0xf]
    %v1714 = vld [vmem:[%s78 + $0x56c] sm:$0xf]
    %v1715 = vld [vmem:[%s78 + $0x570] sm:$0xf]
    %v1716 = vld [vmem:[%s78 + $0x574] sm:$0xf]
    %v1717 = vld [vmem:[%s78 + $0x578] sm:$0xf]
    %v1718 = vld [vmem:[%s78 + $0x57c] sm:$0xf]
    %v1719 = vld [vmem:[%s78 + $0x580] sm:$0xf]
    %v1720 = vld [vmem:[%s78 + $0x584] sm:$0xf]
    %v1721 = vld [vmem:[%s78 + $0x588] sm:$0xf]
    %v1722 = vld [vmem:[%s78 + $0x58c] sm:$0xf]
    %v1723 = vld [vmem:[%s78 + $0x590] sm:$0xf]
    %v1724 = vld [vmem:[%s78 + $0x594] sm:$0xf]
    %v1725 = vld [vmem:[%s78 + $0x598] sm:$0xf]
    %v1726 = vld [vmem:[%s78 + $0x59c] sm:$0xf]
    %v1727 = vld [vmem:[%s78 + $0x5a0] sm:$0xf]
    %v1728 = vld [vmem:[%s78 + $0x5a4] sm:$0xf]
    %v1729 = vld [vmem:[%s78 + $0x5a8] sm:$0xf]
    %v1730 = vld [vmem:[%s78 + $0x5ac] sm:$0xf]
    %v1731 = vld [vmem:[%s78 + $0x5b0] sm:$0xf]
    %v1732 = vld [vmem:[%s78 + $0x5b4] sm:$0xf]
    %v1733 = vld [vmem:[%s78 + $0x5b8] sm:$0xf]
    %v1734 = vld [vmem:[%s78 + $0x5bc] sm:$0xf]
    %v1735 = vld [vmem:[%s78 + $0x5c0] sm:$0xf]
    %v1736 = vld [vmem:[%s78 + $0x5c4] sm:$0xf]
    %v1737 = vld [vmem:[%s78 + $0x5c8] sm:$0xf]
    %v1738 = vld [vmem:[%s78 + $0x5cc] sm:$0xf]
    %v1739 = vld [vmem:[%s78 + $0x5d0] sm:$0xf]
    %v1740 = vld [vmem:[%s78 + $0x5d4] sm:$0xf]
    %v1741 = vld [vmem:[%s78 + $0x5d8] sm:$0xf]
    %v1742 = vld [vmem:[%s78 + $0x5dc] sm:$0xf]
    %v1743 = vld [vmem:[%s78 + $0x5e0] sm:$0xf]
    %v1744 = vld [vmem:[%s78 + $0x5e4] sm:$0xf]
    %v1745 = vld [vmem:[%s78 + $0x5e8] sm:$0xf]
    %v1746 = vld [vmem:[%s78 + $0x5ec] sm:$0xf]
    %v1747 = vld [vmem:[%s78 + $0x5f0] sm:$0xf]
    %v1748 = vld [vmem:[%s78 + $0x5f4] sm:$0xf]
    %v1749 = vld [vmem:[%s78 + $0x5f8] sm:$0xf]
    %v1750 = vld [vmem:[%s78 + $0x5fc] sm:$0xf]
    %v1751 = vld [vmem:[%s78 + $0x600] sm:$0xf]
    %v1752 = vld [vmem:[%s78 + $0x604] sm:$0xf]
    %v1753 = vld [vmem:[%s78 + $0x608] sm:$0xf]
    %v1754 = vld [vmem:[%s78 + $0x60c] sm:$0xf]
    %v1755 = vld [vmem:[%s78 + $0x610] sm:$0xf]
    %v1756 = vld [vmem:[%s78 + $0x614] sm:$0xf]
    %v1757 = vld [vmem:[%s78 + $0x618] sm:$0xf]
    %v1758 = vld [vmem:[%s78 + $0x61c] sm:$0xf]
    %v1759 = vld [vmem:[%s78 + $0x620] sm:$0xf]
    %v1760 = vld [vmem:[%s78 + $0x624] sm:$0xf]
    %v1761 = vld [vmem:[%s78 + $0x628] sm:$0xf]
    %v1762 = vld [vmem:[%s78 + $0x62c] sm:$0xf]
    %v1763 = vld [vmem:[%s78 + $0x630] sm:$0xf]
    %v1764 = vld [vmem:[%s78 + $0x634] sm:$0xf]
    %v1765 = vld [vmem:[%s78 + $0x638] sm:$0xf]
    %v1766 = vld [vmem:[%s78 + $0x63c] sm:$0xf]
    %v1767 = vld [vmem:[%s78 + $0x640] sm:$0xf]
    %v1768 = vld [vmem:[%s78 + $0x644] sm:$0xf]
    %v1769 = vld [vmem:[%s78 + $0x648] sm:$0xf]
    %v1770 = vld [vmem:[%s78 + $0x64c] sm:$0xf]
    %v1771 = vld [vmem:[%s78 + $0x650] sm:$0xf]
    %v1772 = vld [vmem:[%s78 + $0x654] sm:$0xf]
    %v1773 = vld [vmem:[%s78 + $0x658] sm:$0xf]
    %v1774 = vld [vmem:[%s78 + $0x65c] sm:$0xf]
    %v1775 = vld [vmem:[%s78 + $0x660] sm:$0xf]
    %v1776 = vld [vmem:[%s78 + $0x664] sm:$0xf]
    %v1777 = vld [vmem:[%s78 + $0x668] sm:$0xf]
    %v1778 = vld [vmem:[%s78 + $0x66c] sm:$0xf]
    %v1779 = vld [vmem:[%s78 + $0x670] sm:$0xf]
    %v1780 = vld [vmem:[%s78 + $0x674] sm:$0xf]
    %v1781 = vld [vmem:[%s78 + $0x678] sm:$0xf]
    %v1782 = vld [vmem:[%s78 + $0x67c] sm:$0xf]
    %v1783 = vld [vmem:[%s78 + $0x680] sm:$0xf]
    %v1784 = vld [vmem:[%s78 + $0x684] sm:$0xf]
    %v1785 = vld [vmem:[%s78 + $0x688] sm:$0xf]
    %v1786 = vld [vmem:[%s78 + $0x68c] sm:$0xf]
    %v1787 = vld [vmem:[%s78 + $0x690] sm:$0xf]
    %v1788 = vld [vmem:[%s78 + $0x694] sm:$0xf]
    %v1789 = vld [vmem:[%s78 + $0x698] sm:$0xf]
    %v1790 = vld [vmem:[%s78 + $0x69c] sm:$0xf]
    %v1791 = vld [vmem:[%s78 + $0x6a0] sm:$0xf]
    %v1792 = vld [vmem:[%s78 + $0x6a4] sm:$0xf]
    %v1793 = vld [vmem:[%s78 + $0x6a8] sm:$0xf]
    %v1794 = vld [vmem:[%s78 + $0x6ac] sm:$0xf]
    %v1795 = vld [vmem:[%s78 + $0x6b0] sm:$0xf]
    %v1796 = vld [vmem:[%s78 + $0x6b4] sm:$0xf]
    %v1797 = vld [vmem:[%s78 + $0x6b8] sm:$0xf]
    %v1798 = vld [vmem:[%s78 + $0x6bc] sm:$0xf]
    %v1799 = vld [vmem:[%s78 + $0x6c0] sm:$0xf]
    %v1800 = vld [vmem:[%s78 + $0x6c4] sm:$0xf]
    %v1801 = vld [vmem:[%s78 + $0x6c8] sm:$0xf]
    %v1802 = vld [vmem:[%s78 + $0x6cc] sm:$0xf]
    %v1803 = vld [vmem:[%s78 + $0x6d0] sm:$0xf]
    %v1804 = vld [vmem:[%s78 + $0x6d4] sm:$0xf]
    %v1805 = vld [vmem:[%s78 + $0x6d8] sm:$0xf]
    %v1806 = vld [vmem:[%s78 + $0x6dc] sm:$0xf]
    %v1807 = vld [vmem:[%s78 + $0x6e0] sm:$0xf]
    %v1808 = vld [vmem:[%s78 + $0x6e4] sm:$0xf]
    %v1809 = vld [vmem:[%s78 + $0x6e8] sm:$0xf]
    %v1810 = vld [vmem:[%s78 + $0x6ec] sm:$0xf]
    %v1811 = vld [vmem:[%s78 + $0x6f0] sm:$0xf]
    %v1812 = vld [vmem:[%s78 + $0x6f4] sm:$0xf]
    %v1813 = vld [vmem:[%s78 + $0x6f8] sm:$0xf]
    %v1814 = vld [vmem:[%s78 + $0x6fc] sm:$0xf]
    %v1815 = vld [vmem:[%s78 + $0x700] sm:$0xf]
    %v1816 = vld [vmem:[%s78 + $0x704] sm:$0xf]
    %v1817 = vld [vmem:[%s78 + $0x708] sm:$0xf]
    %v1818 = vld [vmem:[%s78 + $0x70c] sm:$0xf]
    %v1819 = vld [vmem:[%s78 + $0x710] sm:$0xf]
    %v1820 = vld [vmem:[%s78 + $0x714] sm:$0xf]
    %v1821 = vld [vmem:[%s78 + $0x718] sm:$0xf]
    %v1822 = vld [vmem:[%s78 + $0x71c] sm:$0xf]
    %v1823 = vld [vmem:[%s78 + $0x720] sm:$0xf]
    %v1824 = vld [vmem:[%s78 + $0x724] sm:$0xf]
    %v1825 = vld [vmem:[%s78 + $0x728] sm:$0xf]
    %v1826 = vld [vmem:[%s78 + $0x72c] sm:$0xf]
    %v1827 = vld [vmem:[%s78 + $0x730] sm:$0xf]
    %v1828 = vld [vmem:[%s78 + $0x734] sm:$0xf]
    %v1829 = vld [vmem:[%s78 + $0x738] sm:$0xf]
    %v1830 = vld [vmem:[%s78 + $0x73c] sm:$0xf]
    %v1831 = vld [vmem:[%s78 + $0x740] sm:$0xf]
    %v1832 = vld [vmem:[%s78 + $0x744] sm:$0xf]
    %v1833 = vld [vmem:[%s78 + $0x748] sm:$0xf]
    %v1834 = vld [vmem:[%s78 + $0x74c] sm:$0xf]
    %v1835 = vld [vmem:[%s78 + $0x750] sm:$0xf]
    %v1836 = vld [vmem:[%s78 + $0x754] sm:$0xf]
    %v1837 = vld [vmem:[%s78 + $0x758] sm:$0xf]
    %v1838 = vld [vmem:[%s78 + $0x75c] sm:$0xf]
    %v1839 = vld [vmem:[%s78 + $0x760] sm:$0xf]
    %v1840 = vld [vmem:[%s78 + $0x764] sm:$0xf]
    %v1841 = vld [vmem:[%s78 + $0x768] sm:$0xf]
    %v1842 = vld [vmem:[%s78 + $0x76c] sm:$0xf]
    %v1843 = vld [vmem:[%s78 + $0x770] sm:$0xf]
    %v1844 = vld [vmem:[%s78 + $0x774] sm:$0xf]
    %v1845 = vld [vmem:[%s78 + $0x778] sm:$0xf]
    %v1846 = vld [vmem:[%s78 + $0x77c] sm:$0xf]
    %v1847 = vld [vmem:[%s78 + $0x780] sm:$0xf]
    %v1848 = vld [vmem:[%s78 + $0x784] sm:$0xf]
    %v1849 = vld [vmem:[%s78 + $0x788] sm:$0xf]
    %v1850 = vld [vmem:[%s78 + $0x78c] sm:$0xf]
    %v1851 = vld [vmem:[%s78 + $0x790] sm:$0xf]
    %v1852 = vld [vmem:[%s78 + $0x794] sm:$0xf]
    %v1853 = vld [vmem:[%s78 + $0x798] sm:$0xf]
    %v1854 = vld [vmem:[%s78 + $0x79c] sm:$0xf]
    %v1855 = vld [vmem:[%s78 + $0x7a0] sm:$0xf]
    %v1856 = vld [vmem:[%s78 + $0x7a4] sm:$0xf]
    %v1857 = vld [vmem:[%s78 + $0x7a8] sm:$0xf]
    %v1858 = vld [vmem:[%s78 + $0x7ac] sm:$0xf]
    %v1859 = vld [vmem:[%s78 + $0x7b0] sm:$0xf]
    %v1860 = vld [vmem:[%s78 + $0x7b4] sm:$0xf]
    %v1861 = vld [vmem:[%s78 + $0x7b8] sm:$0xf]
    %v1862 = vld [vmem:[%s78 + $0x7bc] sm:$0xf]
    %v1863 = vld [vmem:[%s78 + $0x7c0] sm:$0xf]
    %v1864 = vld [vmem:[%s78 + $0x7c4] sm:$0xf]
    %v1865 = vld [vmem:[%s78 + $0x7c8] sm:$0xf]
    %v1866 = vld [vmem:[%s78 + $0x7cc] sm:$0xf]
    %v1867 = vld [vmem:[%s78 + $0x7d0] sm:$0xf]
    %v1868 = vld [vmem:[%s78 + $0x7d4] sm:$0xf]
    %v1869 = vld [vmem:[%s78 + $0x7d8] sm:$0xf]
    %v1870 = vld [vmem:[%s78 + $0x7dc] sm:$0xf]
    %v1871 = vld [vmem:[%s78 + $0x7e0] sm:$0xf]
    %v1872 = vld [vmem:[%s78 + $0x7e4] sm:$0xf]
    %v1873 = vld [vmem:[%s78 + $0x7e8] sm:$0xf]
    %v1874 = vld [vmem:[%s78 + $0x7ec] sm:$0xf]
    %v1875 = vld [vmem:[%s78 + $0x7f0] sm:$0xf]
    %v1876 = vld [vmem:[%s78 + $0x7f4] sm:$0xf]
    %v1877 = vld [vmem:[%s78 + $0x7f8] sm:$0xf]
    %v1878 = vld [vmem:[%s78 + $0x7fc] sm:$0xf]
    %v2391 = vunpack.c.l.b16 %v1367
    %v2392 = vunpack.c.l.b16 %v1368
    %v2393 = vunpack.c.l.b16 %v1369
    %v2394 = vunpack.c.l.b16 %v1370
    %v2395 = vunpack.c.l.b16 %v1371
    %v2396 = vunpack.c.l.b16 %v1372
    %v2397 = vunpack.c.l.b16 %v1373
    %v2398 = vunpack.c.l.b16 %v1374
    %v2399 = vunpack.c.l.b16 %v1375
    %v2400 = vunpack.c.l.b16 %v1376
    %v2401 = vunpack.c.l.b16 %v1377
    %v2402 = vunpack.c.l.b16 %v1378
    %v2403 = vunpack.c.l.b16 %v1379
    %v2404 = vunpack.c.l.b16 %v1380
    %v2405 = vunpack.c.l.b16 %v1381
    %v2406 = vunpack.c.l.b16 %v1382
    %v2407 = vunpack.c.l.b16 %v1383
    %v2408 = vunpack.c.l.b16 %v1384
    %v2409 = vunpack.c.l.b16 %v1385
    %v2410 = vunpack.c.l.b16 %v1386
    %v2411 = vunpack.c.l.b16 %v1387
    %v2412 = vunpack.c.l.b16 %v1388
    %v2413 = vunpack.c.l.b16 %v1389
    %v2414 = vunpack.c.l.b16 %v1390
    %v2415 = vunpack.c.l.b16 %v1391
    %v2416 = vunpack.c.l.b16 %v1392
    %v2417 = vunpack.c.l.b16 %v1393
    %v2418 = vunpack.c.l.b16 %v1394
    %v2419 = vunpack.c.l.b16 %v1395
    %v2420 = vunpack.c.l.b16 %v1396
    %v2421 = vunpack.c.l.b16 %v1397
    %v2422 = vunpack.c.l.b16 %v1398
    %v2423 = vunpack.c.l.b16 %v1399
    %v2424 = vunpack.c.l.b16 %v1400
    %v2425 = vunpack.c.l.b16 %v1401
    %v2426 = vunpack.c.l.b16 %v1402
    %v2427 = vunpack.c.l.b16 %v1403
    %v2428 = vunpack.c.l.b16 %v1404
    %v2429 = vunpack.c.l.b16 %v1405
    %v2430 = vunpack.c.l.b16 %v1406
    %v2431 = vunpack.c.l.b16 %v1407
    %v2432 = vunpack.c.l.b16 %v1408
    %v2433 = vunpack.c.l.b16 %v1409
    %v2434 = vunpack.c.l.b16 %v1410
    %v2435 = vunpack.c.l.b16 %v1411
    %v2436 = vunpack.c.l.b16 %v1412
    %v2437 = vunpack.c.l.b16 %v1413
    %v2438 = vunpack.c.l.b16 %v1414
    %v2439 = vunpack.c.l.b16 %v1415
    %v2440 = vunpack.c.l.b16 %v1416
    %v2441 = vunpack.c.l.b16 %v1417
    %v2442 = vunpack.c.l.b16 %v1418
    %v2443 = vunpack.c.l.b16 %v1419
    %v2444 = vunpack.c.l.b16 %v1420
    %v2445 = vunpack.c.l.b16 %v1421
    %v2446 = vunpack.c.l.b16 %v1422
    %v2447 = vunpack.c.l.b16 %v1423
    %v2448 = vunpack.c.l.b16 %v1424
    %v2449 = vunpack.c.l.b16 %v1425
    %v2450 = vunpack.c.l.b16 %v1426
    %v2451 = vunpack.c.l.b16 %v1427
    %v2452 = vunpack.c.l.b16 %v1428
    %v2453 = vunpack.c.l.b16 %v1429
    %v2454 = vunpack.c.l.b16 %v1430
    %v2455 = vunpack.c.l.b16 %v1431
    %v2456 = vunpack.c.l.b16 %v1432
    %v2457 = vunpack.c.l.b16 %v1433
    %v2458 = vunpack.c.l.b16 %v1434
    %v2459 = vunpack.c.l.b16 %v1435
    %v2460 = vunpack.c.l.b16 %v1436
    %v2461 = vunpack.c.l.b16 %v1437
    %v2462 = vunpack.c.l.b16 %v1438
    %v2463 = vunpack.c.l.b16 %v1439
    %v2464 = vunpack.c.l.b16 %v1440
    %v2465 = vunpack.c.l.b16 %v1441
    %v2466 = vunpack.c.l.b16 %v1442
    %v2467 = vunpack.c.l.b16 %v1443
    %v2468 = vunpack.c.l.b16 %v1444
    %v2469 = vunpack.c.l.b16 %v1445
    %v2470 = vunpack.c.l.b16 %v1446
    %v2471 = vunpack.c.l.b16 %v1447
    %v2472 = vunpack.c.l.b16 %v1448
    %v2473 = vunpack.c.l.b16 %v1449
    %v2474 = vunpack.c.l.b16 %v1450
    %v2475 = vunpack.c.l.b16 %v1451
    %v2476 = vunpack.c.l.b16 %v1452
    %v2477 = vunpack.c.l.b16 %v1453
    %v2478 = vunpack.c.l.b16 %v1454
    %v2479 = vunpack.c.l.b16 %v1455
    %v2480 = vunpack.c.l.b16 %v1456
    %v2481 = vunpack.c.l.b16 %v1457
    %v2482 = vunpack.c.l.b16 %v1458
    %v2483 = vunpack.c.l.b16 %v1459
    %v2484 = vunpack.c.l.b16 %v1460
    %v2485 = vunpack.c.l.b16 %v1461
    %v2486 = vunpack.c.l.b16 %v1462
    %v2487 = vunpack.c.l.b16 %v1463
    %v2488 = vunpack.c.l.b16 %v1464
    %v2489 = vunpack.c.l.b16 %v1465
    %v2490 = vunpack.c.l.b16 %v1466
    %v2491 = vunpack.c.l.b16 %v1467
    %v2492 = vunpack.c.l.b16 %v1468
    %v2493 = vunpack.c.l.b16 %v1469
    %v2494 = vunpack.c.l.b16 %v1470
    %v2495 = vunpack.c.l.b16 %v1471
    %v2496 = vunpack.c.l.b16 %v1472
    %v2497 = vunpack.c.l.b16 %v1473
    %v2498 = vunpack.c.l.b16 %v1474
    %v2499 = vunpack.c.l.b16 %v1475
    %v2500 = vunpack.c.l.b16 %v1476
    %v2501 = vunpack.c.l.b16 %v1477
    %v2502 = vunpack.c.l.b16 %v1478
    %v2503 = vunpack.c.l.b16 %v1479
    %v2504 = vunpack.c.l.b16 %v1480
    %v2505 = vunpack.c.l.b16 %v1481
    %v2506 = vunpack.c.l.b16 %v1482
    %v2507 = vunpack.c.l.b16 %v1483
    %v2508 = vunpack.c.l.b16 %v1484
    %v2509 = vunpack.c.l.b16 %v1485
    %v2510 = vunpack.c.l.b16 %v1486
    %v2511 = vunpack.c.l.b16 %v1487
    %v2512 = vunpack.c.l.b16 %v1488
    %v2513 = vunpack.c.l.b16 %v1489
    %v2514 = vunpack.c.l.b16 %v1490
    %v2515 = vunpack.c.l.b16 %v1491
    %v2516 = vunpack.c.l.b16 %v1492
    %v2517 = vunpack.c.l.b16 %v1493
    %v2518 = vunpack.c.l.b16 %v1494
    %v2519 = vunpack.c.l.b16 %v1495
    %v2520 = vunpack.c.l.b16 %v1496
    %v2521 = vunpack.c.l.b16 %v1497
    %v2522 = vunpack.c.l.b16 %v1498
    %v2523 = vunpack.c.l.b16 %v1499
    %v2524 = vunpack.c.l.b16 %v1500
    %v2525 = vunpack.c.l.b16 %v1501
    %v2526 = vunpack.c.l.b16 %v1502
    %v2527 = vunpack.c.l.b16 %v1503
    %v2528 = vunpack.c.l.b16 %v1504
    %v2529 = vunpack.c.l.b16 %v1505
    %v2530 = vunpack.c.l.b16 %v1506
    %v2531 = vunpack.c.l.b16 %v1507
    %v2532 = vunpack.c.l.b16 %v1508
    %v2533 = vunpack.c.l.b16 %v1509
    %v2534 = vunpack.c.l.b16 %v1510
    %v2535 = vunpack.c.l.b16 %v1511
    %v2536 = vunpack.c.l.b16 %v1512
    %v2537 = vunpack.c.l.b16 %v1513
    %v2538 = vunpack.c.l.b16 %v1514
    %v2539 = vunpack.c.l.b16 %v1515
    %v2540 = vunpack.c.l.b16 %v1516
    %v2541 = vunpack.c.l.b16 %v1517
    %v2542 = vunpack.c.l.b16 %v1518
    %v2543 = vunpack.c.l.b16 %v1519
    %v2544 = vunpack.c.l.b16 %v1520
    %v2545 = vunpack.c.l.b16 %v1521
    %v2546 = vunpack.c.l.b16 %v1522
    %v2547 = vunpack.c.l.b16 %v1523
    %v2548 = vunpack.c.l.b16 %v1524
    %v2549 = vunpack.c.l.b16 %v1525
    %v2550 = vunpack.c.l.b16 %v1526
    %v2551 = vunpack.c.l.b16 %v1527
    %v2552 = vunpack.c.l.b16 %v1528
    %v2553 = vunpack.c.l.b16 %v1529
    %v2554 = vunpack.c.l.b16 %v1530
    %v2555 = vunpack.c.l.b16 %v1531
    %v2556 = vunpack.c.l.b16 %v1532
    %v2557 = vunpack.c.l.b16 %v1533
    %v2558 = vunpack.c.l.b16 %v1534
    %v2559 = vunpack.c.l.b16 %v1535
    %v2560 = vunpack.c.l.b16 %v1536
    %v2561 = vunpack.c.l.b16 %v1537
    %v2562 = vunpack.c.l.b16 %v1538
    %v2563 = vunpack.c.l.b16 %v1539
    %v2564 = vunpack.c.l.b16 %v1540
    %v2565 = vunpack.c.l.b16 %v1541
    %v2566 = vunpack.c.l.b16 %v1542
    %v2567 = vunpack.c.l.b16 %v1543
    %v2568 = vunpack.c.l.b16 %v1544
    %v2569 = vunpack.c.l.b16 %v1545
    %v2570 = vunpack.c.l.b16 %v1546
    %v2571 = vunpack.c.l.b16 %v1547
    %v2572 = vunpack.c.l.b16 %v1548
    %v2573 = vunpack.c.l.b16 %v1549
    %v2574 = vunpack.c.l.b16 %v1550
    %v2575 = vunpack.c.l.b16 %v1551
    %v2576 = vunpack.c.l.b16 %v1552
    %v2577 = vunpack.c.l.b16 %v1553
    %v2578 = vunpack.c.l.b16 %v1554
    %v2579 = vunpack.c.l.b16 %v1555
    %v2580 = vunpack.c.l.b16 %v1556
    %v2581 = vunpack.c.l.b16 %v1557
    %v2582 = vunpack.c.l.b16 %v1558
    %v2583 = vunpack.c.l.b16 %v1559
    %v2584 = vunpack.c.l.b16 %v1560
    %v2585 = vunpack.c.l.b16 %v1561
    %v2586 = vunpack.c.l.b16 %v1562
    %v2587 = vunpack.c.l.b16 %v1563
    %v2588 = vunpack.c.l.b16 %v1564
    %v2589 = vunpack.c.l.b16 %v1565
    %v2590 = vunpack.c.l.b16 %v1566
    %v2591 = vunpack.c.l.b16 %v1567
    %v2592 = vunpack.c.l.b16 %v1568
    %v2593 = vunpack.c.l.b16 %v1569
    %v2594 = vunpack.c.l.b16 %v1570
    %v2595 = vunpack.c.l.b16 %v1571
    %v2596 = vunpack.c.l.b16 %v1572
    %v2597 = vunpack.c.l.b16 %v1573
    %v2598 = vunpack.c.l.b16 %v1574
    %v2599 = vunpack.c.l.b16 %v1575
    %v2600 = vunpack.c.l.b16 %v1576
    %v2601 = vunpack.c.l.b16 %v1577
    %v2602 = vunpack.c.l.b16 %v1578
    %v2603 = vunpack.c.l.b16 %v1579
    %v2604 = vunpack.c.l.b16 %v1580
    %v2605 = vunpack.c.l.b16 %v1581
    %v2606 = vunpack.c.l.b16 %v1582
    %v2607 = vunpack.c.l.b16 %v1583
    %v2608 = vunpack.c.l.b16 %v1584
    %v2609 = vunpack.c.l.b16 %v1585
    %v2610 = vunpack.c.l.b16 %v1586
    %v2611 = vunpack.c.l.b16 %v1587
    %v2612 = vunpack.c.l.b16 %v1588
    %v2613 = vunpack.c.l.b16 %v1589
    %v2614 = vunpack.c.l.b16 %v1590
    %v2615 = vunpack.c.l.b16 %v1591
    %v2616 = vunpack.c.l.b16 %v1592
    %v2617 = vunpack.c.l.b16 %v1593
    %v2618 = vunpack.c.l.b16 %v1594
    %v2619 = vunpack.c.l.b16 %v1595
    %v2620 = vunpack.c.l.b16 %v1596
    %v2621 = vunpack.c.l.b16 %v1597
    %v2622 = vunpack.c.l.b16 %v1598
    %v2623 = vunpack.c.l.b16 %v1599
    %v2624 = vunpack.c.l.b16 %v1600
    %v2625 = vunpack.c.l.b16 %v1601
    %v2626 = vunpack.c.l.b16 %v1602
    %v2627 = vunpack.c.l.b16 %v1603
    %v2628 = vunpack.c.l.b16 %v1604
    %v2629 = vunpack.c.l.b16 %v1605
    %v2630 = vunpack.c.l.b16 %v1606
    %v2631 = vunpack.c.l.b16 %v1607
    %v2632 = vunpack.c.l.b16 %v1608
    %v2633 = vunpack.c.l.b16 %v1609
    %v2634 = vunpack.c.l.b16 %v1610
    %v2635 = vunpack.c.l.b16 %v1611
    %v2636 = vunpack.c.l.b16 %v1612
    %v2637 = vunpack.c.l.b16 %v1613
    %v2638 = vunpack.c.l.b16 %v1614
    %v2639 = vunpack.c.l.b16 %v1615
    %v2640 = vunpack.c.l.b16 %v1616
    %v2641 = vunpack.c.l.b16 %v1617
    %v2642 = vunpack.c.l.b16 %v1618
    %v2643 = vunpack.c.l.b16 %v1619
    %v2644 = vunpack.c.l.b16 %v1620
    %v2645 = vunpack.c.l.b16 %v1621
    %v2646 = vunpack.c.l.b16 %v1622
    %v2647 = vunpack.c.l.b16 %v1623
    %v2648 = vunpack.c.l.b16 %v1624
    %v2649 = vunpack.c.l.b16 %v1625
    %v2650 = vunpack.c.l.b16 %v1626
    %v2651 = vunpack.c.l.b16 %v1627
    %v2652 = vunpack.c.l.b16 %v1628
    %v2653 = vunpack.c.l.b16 %v1629
    %v2654 = vunpack.c.l.b16 %v1630
    %v2655 = vunpack.c.l.b16 %v1631
    %v2656 = vunpack.c.l.b16 %v1632
    %v2657 = vunpack.c.l.b16 %v1633
    %v2658 = vunpack.c.l.b16 %v1634
    %v2659 = vunpack.c.l.b16 %v1635
    %v2660 = vunpack.c.l.b16 %v1636
    %v2661 = vunpack.c.l.b16 %v1637
    %v2662 = vunpack.c.l.b16 %v1638
    %v2663 = vunpack.c.l.b16 %v1639
    %v2664 = vunpack.c.l.b16 %v1640
    %v2665 = vunpack.c.l.b16 %v1641
    %v2666 = vunpack.c.l.b16 %v1642
    %v2667 = vunpack.c.l.b16 %v1643
    %v2668 = vunpack.c.l.b16 %v1644
    %v2669 = vunpack.c.l.b16 %v1645
    %v2670 = vunpack.c.l.b16 %v1646
    %v2671 = vunpack.c.l.b16 %v1647
    %v2672 = vunpack.c.l.b16 %v1648
    %v2673 = vunpack.c.l.b16 %v1649
    %v2674 = vunpack.c.l.b16 %v1650
    %v2675 = vunpack.c.l.b16 %v1651
    %v2676 = vunpack.c.l.b16 %v1652
    %v2677 = vunpack.c.l.b16 %v1653
    %v2678 = vunpack.c.l.b16 %v1654
    %v2679 = vunpack.c.l.b16 %v1655
    %v2680 = vunpack.c.l.b16 %v1656
    %v2681 = vunpack.c.l.b16 %v1657
    %v2682 = vunpack.c.l.b16 %v1658
    %v2683 = vunpack.c.l.b16 %v1659
    %v2684 = vunpack.c.l.b16 %v1660
    %v2685 = vunpack.c.l.b16 %v1661
    %v2686 = vunpack.c.l.b16 %v1662
    %v2687 = vunpack.c.l.b16 %v1663
    %v2688 = vunpack.c.l.b16 %v1664
    %v2689 = vunpack.c.l.b16 %v1665
    %v2690 = vunpack.c.l.b16 %v1666
    %v2691 = vunpack.c.l.b16 %v1667
    %v2692 = vunpack.c.l.b16 %v1668
    %v2693 = vunpack.c.l.b16 %v1669
    %v2694 = vunpack.c.l.b16 %v1670
    %v2695 = vunpack.c.l.b16 %v1671
    %v2696 = vunpack.c.l.b16 %v1672
    %v2697 = vunpack.c.l.b16 %v1673
    %v2698 = vunpack.c.l.b16 %v1674
    %v2699 = vunpack.c.l.b16 %v1675
    %v2700 = vunpack.c.l.b16 %v1676
    %v2701 = vunpack.c.l.b16 %v1677
    %v2702 = vunpack.c.l.b16 %v1678
    %v2703 = vunpack.c.l.b16 %v1679
    %v2704 = vunpack.c.l.b16 %v1680
    %v2705 = vunpack.c.l.b16 %v1681
    %v2706 = vunpack.c.l.b16 %v1682
    %v2707 = vunpack.c.l.b16 %v1683
    %v2708 = vunpack.c.l.b16 %v1684
    %v2709 = vunpack.c.l.b16 %v1685
    %v2710 = vunpack.c.l.b16 %v1686
    %v2711 = vunpack.c.l.b16 %v1687
    %v2712 = vunpack.c.l.b16 %v1688
    %v2713 = vunpack.c.l.b16 %v1689
    %v2714 = vunpack.c.l.b16 %v1690
    %v2715 = vunpack.c.l.b16 %v1691
    %v2716 = vunpack.c.l.b16 %v1692
    %v2717 = vunpack.c.l.b16 %v1693
    %v2718 = vunpack.c.l.b16 %v1694
    %v2719 = vunpack.c.l.b16 %v1695
    %v2720 = vunpack.c.l.b16 %v1696
    %v2721 = vunpack.c.l.b16 %v1697
    %v2722 = vunpack.c.l.b16 %v1698
    %v2723 = vunpack.c.l.b16 %v1699
    %v2724 = vunpack.c.l.b16 %v1700
    %v2725 = vunpack.c.l.b16 %v1701
    %v2726 = vunpack.c.l.b16 %v1702
    %v2727 = vunpack.c.l.b16 %v1703
    %v2728 = vunpack.c.l.b16 %v1704
    %v2729 = vunpack.c.l.b16 %v1705
    %v2730 = vunpack.c.l.b16 %v1706
    %v2731 = vunpack.c.l.b16 %v1707
    %v2732 = vunpack.c.l.b16 %v1708
    %v2733 = vunpack.c.l.b16 %v1709
    %v2734 = vunpack.c.l.b16 %v1710
    %v2735 = vunpack.c.l.b16 %v1711
    %v2736 = vunpack.c.l.b16 %v1712
    %v2737 = vunpack.c.l.b16 %v1713
    %v2738 = vunpack.c.l.b16 %v1714
    %v2739 = vunpack.c.l.b16 %v1715
    %v2740 = vunpack.c.l.b16 %v1716
    %v2741 = vunpack.c.l.b16 %v1717
    %v2742 = vunpack.c.l.b16 %v1718
    %v2743 = vunpack.c.l.b16 %v1719
    %v2744 = vunpack.c.l.b16 %v1720
    %v2745 = vunpack.c.l.b16 %v1721
    %v2746 = vunpack.c.l.b16 %v1722
    %v2747 = vunpack.c.l.b16 %v1723
    %v2748 = vunpack.c.l.b16 %v1724
    %v2749 = vunpack.c.l.b16 %v1725
    %v2750 = vunpack.c.l.b16 %v1726
    %v2751 = vunpack.c.l.b16 %v1727
    %v2752 = vunpack.c.l.b16 %v1728
    %v2753 = vunpack.c.l.b16 %v1729
    %v2754 = vunpack.c.l.b16 %v1730
    %v2755 = vunpack.c.l.b16 %v1731
    %v2756 = vunpack.c.l.b16 %v1732
    %v2757 = vunpack.c.l.b16 %v1733
    %v2758 = vunpack.c.l.b16 %v1734
    %v2759 = vunpack.c.l.b16 %v1735
    %v2760 = vunpack.c.l.b16 %v1736
    %v2761 = vunpack.c.l.b16 %v1737
    %v2762 = vunpack.c.l.b16 %v1738
    %v2763 = vunpack.c.l.b16 %v1739
    %v2764 = vunpack.c.l.b16 %v1740
    %v2765 = vunpack.c.l.b16 %v1741
    %v2766 = vunpack.c.l.b16 %v1742
    %v2767 = vunpack.c.l.b16 %v1743
    %v2768 = vunpack.c.l.b16 %v1744
    %v2769 = vunpack.c.l.b16 %v1745
    %v2770 = vunpack.c.l.b16 %v1746
    %v2771 = vunpack.c.l.b16 %v1747
    %v2772 = vunpack.c.l.b16 %v1748
    %v2773 = vunpack.c.l.b16 %v1749
    %v2774 = vunpack.c.l.b16 %v1750
    %v2775 = vunpack.c.l.b16 %v1751
    %v2776 = vunpack.c.l.b16 %v1752
    %v2777 = vunpack.c.l.b16 %v1753
    %v2778 = vunpack.c.l.b16 %v1754
    %v2779 = vunpack.c.l.b16 %v1755
    %v2780 = vunpack.c.l.b16 %v1756
    %v2781 = vunpack.c.l.b16 %v1757
    %v2782 = vunpack.c.l.b16 %v1758
    %v2783 = vunpack.c.l.b16 %v1759
    %v2784 = vunpack.c.l.b16 %v1760
    %v2785 = vunpack.c.l.b16 %v1761
    %v2786 = vunpack.c.l.b16 %v1762
    %v2787 = vunpack.c.l.b16 %v1763
    %v2788 = vunpack.c.l.b16 %v1764
    %v2789 = vunpack.c.l.b16 %v1765
    %v2790 = vunpack.c.l.b16 %v1766
    %v2791 = vunpack.c.l.b16 %v1767
    %v2792 = vunpack.c.l.b16 %v1768
    %v2793 = vunpack.c.l.b16 %v1769
    %v2794 = vunpack.c.l.b16 %v1770
    %v2795 = vunpack.c.l.b16 %v1771
    %v2796 = vunpack.c.l.b16 %v1772
    %v2797 = vunpack.c.l.b16 %v1773
    %v2798 = vunpack.c.l.b16 %v1774
    %v2799 = vunpack.c.l.b16 %v1775
    %v2800 = vunpack.c.l.b16 %v1776
    %v2801 = vunpack.c.l.b16 %v1777
    %v2802 = vunpack.c.l.b16 %v1778
    %v2803 = vunpack.c.l.b16 %v1779
    %v2804 = vunpack.c.l.b16 %v1780
    %v2805 = vunpack.c.l.b16 %v1781
    %v2806 = vunpack.c.l.b16 %v1782
    %v2807 = vunpack.c.l.b16 %v1783
    %v2808 = vunpack.c.l.b16 %v1784
    %v2809 = vunpack.c.l.b16 %v1785
    %v2810 = vunpack.c.l.b16 %v1786
    %v2811 = vunpack.c.l.b16 %v1787
    %v2812 = vunpack.c.l.b16 %v1788
    %v2813 = vunpack.c.l.b16 %v1789
    %v2814 = vunpack.c.l.b16 %v1790
    %v2815 = vunpack.c.l.b16 %v1791
    %v2816 = vunpack.c.l.b16 %v1792
    %v2817 = vunpack.c.l.b16 %v1793
    %v2818 = vunpack.c.l.b16 %v1794
    %v2819 = vunpack.c.l.b16 %v1795
    %v2820 = vunpack.c.l.b16 %v1796
    %v2821 = vunpack.c.l.b16 %v1797
    %v2822 = vunpack.c.l.b16 %v1798
    %v2823 = vunpack.c.l.b16 %v1799
    %v2824 = vunpack.c.l.b16 %v1800
    %v2825 = vunpack.c.l.b16 %v1801
    %v2826 = vunpack.c.l.b16 %v1802
    %v2827 = vunpack.c.l.b16 %v1803
    %v2828 = vunpack.c.l.b16 %v1804
    %v2829 = vunpack.c.l.b16 %v1805
    %v2830 = vunpack.c.l.b16 %v1806
    %v2831 = vunpack.c.l.b16 %v1807
    %v2832 = vunpack.c.l.b16 %v1808
    %v2833 = vunpack.c.l.b16 %v1809
    %v2834 = vunpack.c.l.b16 %v1810
    %v2835 = vunpack.c.l.b16 %v1811
    %v2836 = vunpack.c.l.b16 %v1812
    %v2837 = vunpack.c.l.b16 %v1813
    %v2838 = vunpack.c.l.b16 %v1814
    %v2839 = vunpack.c.l.b16 %v1815
    %v2840 = vunpack.c.l.b16 %v1816
    %v2841 = vunpack.c.l.b16 %v1817
    %v2842 = vunpack.c.l.b16 %v1818
    %v2843 = vunpack.c.l.b16 %v1819
    %v2844 = vunpack.c.l.b16 %v1820
    %v2845 = vunpack.c.l.b16 %v1821
    %v2846 = vunpack.c.l.b16 %v1822
    %v2847 = vunpack.c.l.b16 %v1823
    %v2848 = vunpack.c.l.b16 %v1824
    %v2849 = vunpack.c.l.b16 %v1825
    %v2850 = vunpack.c.l.b16 %v1826
    %v2851 = vunpack.c.l.b16 %v1827
    %v2852 = vunpack.c.l.b16 %v1828
    %v2853 = vunpack.c.l.b16 %v1829
    %v2854 = vunpack.c.l.b16 %v1830
    %v2855 = vunpack.c.l.b16 %v1831
    %v2856 = vunpack.c.l.b16 %v1832
    %v2857 = vunpack.c.l.b16 %v1833
    %v2858 = vunpack.c.l.b16 %v1834
    %v2859 = vunpack.c.l.b16 %v1835
    %v2860 = vunpack.c.l.b16 %v1836
    %v2861 = vunpack.c.l.b16 %v1837
    %v2862 = vunpack.c.l.b16 %v1838
    %v2863 = vunpack.c.l.b16 %v1839
    %v2864 = vunpack.c.l.b16 %v1840
    %v2865 = vunpack.c.l.b16 %v1841
    %v2866 = vunpack.c.l.b16 %v1842
    %v2867 = vunpack.c.l.b16 %v1843
    %v2868 = vunpack.c.l.b16 %v1844
    %v2869 = vunpack.c.l.b16 %v1845
    %v2870 = vunpack.c.l.b16 %v1846
    %v2871 = vunpack.c.l.b16 %v1847
    %v2872 = vunpack.c.l.b16 %v1848
    %v2873 = vunpack.c.l.b16 %v1849
    %v2874 = vunpack.c.l.b16 %v1850
    %v2875 = vunpack.c.l.b16 %v1851
    %v2876 = vunpack.c.l.b16 %v1852
    %v2877 = vunpack.c.l.b16 %v1853
    %v2878 = vunpack.c.l.b16 %v1854
    %v2879 = vunpack.c.l.b16 %v1855
    %v2880 = vunpack.c.l.b16 %v1856
    %v2881 = vunpack.c.l.b16 %v1857
    %v2882 = vunpack.c.l.b16 %v1858
    %v2883 = vunpack.c.l.b16 %v1859
    %v2884 = vunpack.c.l.b16 %v1860
    %v2885 = vunpack.c.l.b16 %v1861
    %v2886 = vunpack.c.l.b16 %v1862
    %v2887 = vunpack.c.l.b16 %v1863
    %v2888 = vunpack.c.l.b16 %v1864
    %v2889 = vunpack.c.l.b16 %v1865
    %v2890 = vunpack.c.l.b16 %v1866
    %v2891 = vunpack.c.l.b16 %v1867
    %v2892 = vunpack.c.l.b16 %v1868
    %v2893 = vunpack.c.l.b16 %v1869
    %v2894 = vunpack.c.l.b16 %v1870
    %v2895 = vunpack.c.l.b16 %v1871
    %v2896 = vunpack.c.l.b16 %v1872
    %v2897 = vunpack.c.l.b16 %v1873
    %v2898 = vunpack.c.l.b16 %v1874
    %v2899 = vunpack.c.l.b16 %v1875
    %v2900 = vunpack.c.l.b16 %v1876
    %v2901 = vunpack.c.l.b16 %v1877
    %v2902 = vunpack.c.l.b16 %v1878
    %v2903 = vpack.c.b16 %v2392, %v2391
    %v2904 = vpack.c.b16 %v2394, %v2393
    %v2905 = vpack.c.b16 %v2396, %v2395
    %v2906 = vpack.c.b16 %v2398, %v2397
    %v2907 = vpack.c.b16 %v2400, %v2399
    %v2908 = vpack.c.b16 %v2402, %v2401
    %v2909 = vpack.c.b16 %v2404, %v2403
    %v2910 = vpack.c.b16 %v2406, %v2405
    %v2911 = vpack.c.b16 %v2408, %v2407
    %v2912 = vpack.c.b16 %v2410, %v2409
    %v2913 = vpack.c.b16 %v2412, %v2411
    %v2914 = vpack.c.b16 %v2414, %v2413
    %v2915 = vpack.c.b16 %v2416, %v2415
    %v2916 = vpack.c.b16 %v2418, %v2417
    %v2917 = vpack.c.b16 %v2420, %v2419
    %v2918 = vpack.c.b16 %v2422, %v2421
    %v2919 = vpack.c.b16 %v2424, %v2423
    %v2920 = vpack.c.b16 %v2426, %v2425
    %v2921 = vpack.c.b16 %v2428, %v2427
    %v2922 = vpack.c.b16 %v2430, %v2429
    %v2923 = vpack.c.b16 %v2432, %v2431
    %v2924 = vpack.c.b16 %v2434, %v2433
    %v2925 = vpack.c.b16 %v2436, %v2435
    %v2926 = vpack.c.b16 %v2438, %v2437
    %v2927 = vpack.c.b16 %v2440, %v2439
    %v2928 = vpack.c.b16 %v2442, %v2441
    %v2929 = vpack.c.b16 %v2444, %v2443
    %v2930 = vpack.c.b16 %v2446, %v2445
    %v2931 = vpack.c.b16 %v2448, %v2447
    %v2932 = vpack.c.b16 %v2450, %v2449
    %v2933 = vpack.c.b16 %v2452, %v2451
    %v2934 = vpack.c.b16 %v2454, %v2453
    %v2935 = vpack.c.b16 %v2456, %v2455
    %v2936 = vpack.c.b16 %v2458, %v2457
    %v2937 = vpack.c.b16 %v2460, %v2459
    %v2938 = vpack.c.b16 %v2462, %v2461
    %v2939 = vpack.c.b16 %v2464, %v2463
    %v2940 = vpack.c.b16 %v2466, %v2465
    %v2941 = vpack.c.b16 %v2468, %v2467
    %v2942 = vpack.c.b16 %v2470, %v2469
    %v2943 = vpack.c.b16 %v2472, %v2471
    %v2944 = vpack.c.b16 %v2474, %v2473
    %v2945 = vpack.c.b16 %v2476, %v2475
    %v2946 = vpack.c.b16 %v2478, %v2477
    %v2947 = vpack.c.b16 %v2480, %v2479
    %v2948 = vpack.c.b16 %v2482, %v2481
    %v2949 = vpack.c.b16 %v2484, %v2483
    %v2950 = vpack.c.b16 %v2486, %v2485
    %v2951 = vpack.c.b16 %v2488, %v2487
    %v2952 = vpack.c.b16 %v2490, %v2489
    %v2953 = vpack.c.b16 %v2492, %v2491
    %v2954 = vpack.c.b16 %v2494, %v2493
    %v2955 = vpack.c.b16 %v2496, %v2495
    %v2956 = vpack.c.b16 %v2498, %v2497
    %v2957 = vpack.c.b16 %v2500, %v2499
    %v2958 = vpack.c.b16 %v2502, %v2501
    %v2959 = vpack.c.b16 %v2504, %v2503
    %v2960 = vpack.c.b16 %v2506, %v2505
    %v2961 = vpack.c.b16 %v2508, %v2507
    %v2962 = vpack.c.b16 %v2510, %v2509
    %v2963 = vpack.c.b16 %v2512, %v2511
    %v2964 = vpack.c.b16 %v2514, %v2513
    %v2965 = vpack.c.b16 %v2516, %v2515
    %v2966 = vpack.c.b16 %v2518, %v2517
    %v2967 = vpack.c.b16 %v2520, %v2519
    %v2968 = vpack.c.b16 %v2522, %v2521
    %v2969 = vpack.c.b16 %v2524, %v2523
    %v2970 = vpack.c.b16 %v2526, %v2525
    %v2971 = vpack.c.b16 %v2528, %v2527
    %v2972 = vpack.c.b16 %v2530, %v2529
    %v2973 = vpack.c.b16 %v2532, %v2531
    %v2974 = vpack.c.b16 %v2534, %v2533
    %v2975 = vpack.c.b16 %v2536, %v2535
    %v2976 = vpack.c.b16 %v2538, %v2537
    %v2977 = vpack.c.b16 %v2540, %v2539
    %v2978 = vpack.c.b16 %v2542, %v2541
    %v2979 = vpack.c.b16 %v2544, %v2543
    %v2980 = vpack.c.b16 %v2546, %v2545
    %v2981 = vpack.c.b16 %v2548, %v2547
    %v2982 = vpack.c.b16 %v2550, %v2549
    %v2983 = vpack.c.b16 %v2552, %v2551
    %v2984 = vpack.c.b16 %v2554, %v2553
    %v2985 = vpack.c.b16 %v2556, %v2555
    %v2986 = vpack.c.b16 %v2558, %v2557
    %v2987 = vpack.c.b16 %v2560, %v2559
    %v2988 = vpack.c.b16 %v2562, %v2561
    %v2989 = vpack.c.b16 %v2564, %v2563
    %v2990 = vpack.c.b16 %v2566, %v2565
    %v2991 = vpack.c.b16 %v2568, %v2567
    %v2992 = vpack.c.b16 %v2570, %v2569
    %v2993 = vpack.c.b16 %v2572, %v2571
    %v2994 = vpack.c.b16 %v2574, %v2573
    %v2995 = vpack.c.b16 %v2576, %v2575
    %v2996 = vpack.c.b16 %v2578, %v2577
    %v2997 = vpack.c.b16 %v2580, %v2579
    %v2998 = vpack.c.b16 %v2582, %v2581
    %v2999 = vpack.c.b16 %v2584, %v2583
    %v3000 = vpack.c.b16 %v2586, %v2585
    %v3001 = vpack.c.b16 %v2588, %v2587
    %v3002 = vpack.c.b16 %v2590, %v2589
    %v3003 = vpack.c.b16 %v2592, %v2591
    %v3004 = vpack.c.b16 %v2594, %v2593
    %v3005 = vpack.c.b16 %v2596, %v2595
    %v3006 = vpack.c.b16 %v2598, %v2597
    %v3007 = vpack.c.b16 %v2600, %v2599
    %v3008 = vpack.c.b16 %v2602, %v2601
    %v3009 = vpack.c.b16 %v2604, %v2603
    %v3010 = vpack.c.b16 %v2606, %v2605
    %v3011 = vpack.c.b16 %v2608, %v2607
    %v3012 = vpack.c.b16 %v2610, %v2609
    %v3013 = vpack.c.b16 %v2612, %v2611
    %v3014 = vpack.c.b16 %v2614, %v2613
    %v3015 = vpack.c.b16 %v2616, %v2615
    %v3016 = vpack.c.b16 %v2618, %v2617
    %v3017 = vpack.c.b16 %v2620, %v2619
    %v3018 = vpack.c.b16 %v2622, %v2621
    %v3019 = vpack.c.b16 %v2624, %v2623
    %v3020 = vpack.c.b16 %v2626, %v2625
    %v3021 = vpack.c.b16 %v2628, %v2627
    %v3022 = vpack.c.b16 %v2630, %v2629
    %v3023 = vpack.c.b16 %v2632, %v2631
    %v3024 = vpack.c.b16 %v2634, %v2633
    %v3025 = vpack.c.b16 %v2636, %v2635
    %v3026 = vpack.c.b16 %v2638, %v2637
    %v3027 = vpack.c.b16 %v2640, %v2639
    %v3028 = vpack.c.b16 %v2642, %v2641
    %v3029 = vpack.c.b16 %v2644, %v2643
    %v3030 = vpack.c.b16 %v2646, %v2645
    %v3031 = vpack.c.b16 %v2648, %v2647
    %v3032 = vpack.c.b16 %v2650, %v2649
    %v3033 = vpack.c.b16 %v2652, %v2651
    %v3034 = vpack.c.b16 %v2654, %v2653
    %v3035 = vpack.c.b16 %v2656, %v2655
    %v3036 = vpack.c.b16 %v2658, %v2657
    %v3037 = vpack.c.b16 %v2660, %v2659
    %v3038 = vpack.c.b16 %v2662, %v2661
    %v3039 = vpack.c.b16 %v2664, %v2663
    %v3040 = vpack.c.b16 %v2666, %v2665
    %v3041 = vpack.c.b16 %v2668, %v2667
    %v3042 = vpack.c.b16 %v2670, %v2669
    %v3043 = vpack.c.b16 %v2672, %v2671
    %v3044 = vpack.c.b16 %v2674, %v2673
    %v3045 = vpack.c.b16 %v2676, %v2675
    %v3046 = vpack.c.b16 %v2678, %v2677
    %v3047 = vpack.c.b16 %v2680, %v2679
    %v3048 = vpack.c.b16 %v2682, %v2681
    %v3049 = vpack.c.b16 %v2684, %v2683
    %v3050 = vpack.c.b16 %v2686, %v2685
    %v3051 = vpack.c.b16 %v2688, %v2687
    %v3052 = vpack.c.b16 %v2690, %v2689
    %v3053 = vpack.c.b16 %v2692, %v2691
    %v3054 = vpack.c.b16 %v2694, %v2693
    %v3055 = vpack.c.b16 %v2696, %v2695
    %v3056 = vpack.c.b16 %v2698, %v2697
    %v3057 = vpack.c.b16 %v2700, %v2699
    %v3058 = vpack.c.b16 %v2702, %v2701
    %v3059 = vpack.c.b16 %v2704, %v2703
    %v3060 = vpack.c.b16 %v2706, %v2705
    %v3061 = vpack.c.b16 %v2708, %v2707
    %v3062 = vpack.c.b16 %v2710, %v2709
    %v3063 = vpack.c.b16 %v2712, %v2711
    %v3064 = vpack.c.b16 %v2714, %v2713
    %v3065 = vpack.c.b16 %v2716, %v2715
    %v3066 = vpack.c.b16 %v2718, %v2717
    %v3067 = vpack.c.b16 %v2720, %v2719
    %v3068 = vpack.c.b16 %v2722, %v2721
    %v3069 = vpack.c.b16 %v2724, %v2723
    %v3070 = vpack.c.b16 %v2726, %v2725
    %v3071 = vpack.c.b16 %v2728, %v2727
    %v3072 = vpack.c.b16 %v2730, %v2729
    %v3073 = vpack.c.b16 %v2732, %v2731
    %v3074 = vpack.c.b16 %v2734, %v2733
    %v3075 = vpack.c.b16 %v2736, %v2735
    %v3076 = vpack.c.b16 %v2738, %v2737
    %v3077 = vpack.c.b16 %v2740, %v2739
    %v3078 = vpack.c.b16 %v2742, %v2741
    %v3079 = vpack.c.b16 %v2744, %v2743
    %v3080 = vpack.c.b16 %v2746, %v2745
    %v3081 = vpack.c.b16 %v2748, %v2747
    %v3082 = vpack.c.b16 %v2750, %v2749
    %v3083 = vpack.c.b16 %v2752, %v2751
    %v3084 = vpack.c.b16 %v2754, %v2753
    %v3085 = vpack.c.b16 %v2756, %v2755
    %v3086 = vpack.c.b16 %v2758, %v2757
    %v3087 = vpack.c.b16 %v2760, %v2759
    %v3088 = vpack.c.b16 %v2762, %v2761
    %v3089 = vpack.c.b16 %v2764, %v2763
    %v3090 = vpack.c.b16 %v2766, %v2765
    %v3091 = vpack.c.b16 %v2768, %v2767
    %v3092 = vpack.c.b16 %v2770, %v2769
    %v3093 = vpack.c.b16 %v2772, %v2771
    %v3094 = vpack.c.b16 %v2774, %v2773
    %v3095 = vpack.c.b16 %v2776, %v2775
    %v3096 = vpack.c.b16 %v2778, %v2777
    %v3097 = vpack.c.b16 %v2780, %v2779
    %v3098 = vpack.c.b16 %v2782, %v2781
    %v3099 = vpack.c.b16 %v2784, %v2783
    %v3100 = vpack.c.b16 %v2786, %v2785
    %v3101 = vpack.c.b16 %v2788, %v2787
    %v3102 = vpack.c.b16 %v2790, %v2789
    %v3103 = vpack.c.b16 %v2792, %v2791
    %v3104 = vpack.c.b16 %v2794, %v2793
    %v3105 = vpack.c.b16 %v2796, %v2795
    %v3106 = vpack.c.b16 %v2798, %v2797
    %v3107 = vpack.c.b16 %v2800, %v2799
    %v3108 = vpack.c.b16 %v2802, %v2801
    %v3109 = vpack.c.b16 %v2804, %v2803
    %v3110 = vpack.c.b16 %v2806, %v2805
    %v3111 = vpack.c.b16 %v2808, %v2807
    %v3112 = vpack.c.b16 %v2810, %v2809
    %v3113 = vpack.c.b16 %v2812, %v2811
    %v3114 = vpack.c.b16 %v2814, %v2813
    %v3115 = vpack.c.b16 %v2816, %v2815
    %v3116 = vpack.c.b16 %v2818, %v2817
    %v3117 = vpack.c.b16 %v2820, %v2819
    %v3118 = vpack.c.b16 %v2822, %v2821
    %v3119 = vpack.c.b16 %v2824, %v2823
    %v3120 = vpack.c.b16 %v2826, %v2825
    %v3121 = vpack.c.b16 %v2828, %v2827
    %v3122 = vpack.c.b16 %v2830, %v2829
    %v3123 = vpack.c.b16 %v2832, %v2831
    %v3124 = vpack.c.b16 %v2834, %v2833
    %v3125 = vpack.c.b16 %v2836, %v2835
    %v3126 = vpack.c.b16 %v2838, %v2837
    %v3127 = vpack.c.b16 %v2840, %v2839
    %v3128 = vpack.c.b16 %v2842, %v2841
    %v3129 = vpack.c.b16 %v2844, %v2843
    %v3130 = vpack.c.b16 %v2846, %v2845
    %v3131 = vpack.c.b16 %v2848, %v2847
    %v3132 = vpack.c.b16 %v2850, %v2849
    %v3133 = vpack.c.b16 %v2852, %v2851
    %v3134 = vpack.c.b16 %v2854, %v2853
    %v3135 = vpack.c.b16 %v2856, %v2855
    %v3136 = vpack.c.b16 %v2858, %v2857
    %v3137 = vpack.c.b16 %v2860, %v2859
    %v3138 = vpack.c.b16 %v2862, %v2861
    %v3139 = vpack.c.b16 %v2864, %v2863
    %v3140 = vpack.c.b16 %v2866, %v2865
    %v3141 = vpack.c.b16 %v2868, %v2867
    %v3142 = vpack.c.b16 %v2870, %v2869
    %v3143 = vpack.c.b16 %v2872, %v2871
    %v3144 = vpack.c.b16 %v2874, %v2873
    %v3145 = vpack.c.b16 %v2876, %v2875
    %v3146 = vpack.c.b16 %v2878, %v2877
    %v3147 = vpack.c.b16 %v2880, %v2879
    %v3148 = vpack.c.b16 %v2882, %v2881
    %v3149 = vpack.c.b16 %v2884, %v2883
    %v3150 = vpack.c.b16 %v2886, %v2885
    %v3151 = vpack.c.b16 %v2888, %v2887
    %v3152 = vpack.c.b16 %v2890, %v2889
    %v3153 = vpack.c.b16 %v2892, %v2891
    %v3154 = vpack.c.b16 %v2894, %v2893
    %v3155 = vpack.c.b16 %v2896, %v2895
    %v3156 = vpack.c.b16 %v2898, %v2897
    %v3157 = vpack.c.b16 %v2900, %v2899
    %v3158 = vpack.c.b16 %v2902, %v2901
    %3415 = vmatprep.subr.bf16.mxu0 0
    %3416 = vmatpush1.bf16.msra.mxu0 %v2903
    %3417 = vmatprep.subr.bf16.mxu0 0
    %3418 = vmatpush1.bf16.msra.mxu0 %v2904
    %3419 = vmatprep.subr.bf16.mxu0 0
    %3420 = vmatpush1.bf16.msra.mxu0 %v2905
    %3421 = vmatprep.subr.bf16.mxu0 0
    %3422 = vmatpush1.bf16.msra.mxu0 %v2906
    %3423 = vmatprep.subr.bf16.mxu0 0
    %3424 = vmatpush1.bf16.msra.mxu0 %v2907
    %3425 = vmatprep.subr.bf16.mxu0 0
    %3426 = vmatpush1.bf16.msra.mxu0 %v2908
    %3427 = vmatprep.subr.bf16.mxu0 0
    %3428 = vmatpush1.bf16.msra.mxu0 %v2909
    %3429 = vmatprep.subr.bf16.mxu0 0
    %3430 = vmatpush1.bf16.msra.mxu0 %v2910
    %3431 = vmatprep.subr.bf16.mxu0 0
    %3432 = vmatpush1.bf16.msra.mxu0 %v2911
    %3433 = vmatprep.subr.bf16.mxu0 0
    %3434 = vmatpush1.bf16.msra.mxu0 %v2912
    %3435 = vmatprep.subr.bf16.mxu0 0
    %3436 = vmatpush1.bf16.msra.mxu0 %v2913
    %3437 = vmatprep.subr.bf16.mxu0 0
    %3438 = vmatpush1.bf16.msra.mxu0 %v2914
    %3439 = vmatprep.subr.bf16.mxu0 0
    %3440 = vmatpush1.bf16.msra.mxu0 %v2915
    %3441 = vmatprep.subr.bf16.mxu0 0
    %3442 = vmatpush1.bf16.msra.mxu0 %v2916
    %3443 = vmatprep.subr.bf16.mxu0 0
    %3444 = vmatpush1.bf16.msra.mxu0 %v2917
    %3445 = vmatprep.subr.bf16.mxu0 0
    %3446 = vmatpush1.bf16.msra.mxu0 %v2918
    %3447 = vmatprep.mubr.bf16.mxu0 %v1336
    %3448 = vmatmul.mubr.bf16.gmra.mrb[0].mxu0 %v1335
    %v3449 = vpop.f32.mrb[0].mxu0
    %v3450 = vadd.f32 0.0, %v3449
    %v3451 = vpop.f32.mrb[0].mxu0
    %v3452 = vpop.f32.mrb[0].mxu0
    %v3453 = vpop.f32.mrb[0].mxu0
    %3454 = vdwg.mxu0
    %3455 = vmatprep.subr.bf16.mxu0 0
    %3456 = vmatpush1.bf16.msra.mxu0 %v2919
    %3457 = vmatprep.subr.bf16.mxu0 0
    %3458 = vmatpush1.bf16.msra.mxu0 %v2920
    %3459 = vmatprep.subr.bf16.mxu0 0
    %3460 = vmatpush1.bf16.msra.mxu0 %v2921
    %3461 = vmatprep.subr.bf16.mxu0 0
    %3462 = vmatpush1.bf16.msra.mxu0 %v2922
    %3463 = vmatprep.subr.bf16.mxu0 0
    %3464 = vmatpush1.bf16.msra.mxu0 %v2923
    %3465 = vmatprep.subr.bf16.mxu0 0
    %3466 = vmatpush1.bf16.msra.mxu0 %v2924
    %3467 = vmatprep.subr.bf16.mxu0 0
    %3468 = vmatpush1.bf16.msra.mxu0 %v2925
    %3469 = vmatprep.subr.bf16.mxu0 0
    %3470 = vmatpush1.bf16.msra.mxu0 %v2926
    %3471 = vmatprep.subr.bf16.mxu0 0
    %3472 = vmatpush1.bf16.msra.mxu0 %v2927
    %3473 = vmatprep.subr.bf16.mxu0 0
    %3474 = vmatpush1.bf16.msra.mxu0 %v2928
    %3475 = vmatprep.subr.bf16.mxu0 0
    %3476 = vmatpush1.bf16.msra.mxu0 %v2929
    %3477 = vmatprep.subr.bf16.mxu0 0
    %3478 = vmatpush1.bf16.msra.mxu0 %v2930
    %3479 = vmatprep.subr.bf16.mxu0 0
    %3480 = vmatpush1.bf16.msra.mxu0 %v2931
    %3481 = vmatprep.subr.bf16.mxu0 0
    %3482 = vmatpush1.bf16.msra.mxu0 %v2932
    %3483 = vmatprep.subr.bf16.mxu0 0
    %3484 = vmatpush1.bf16.msra.mxu0 %v2933
    %3485 = vmatprep.subr.bf16.mxu0 0
    %3486 = vmatpush1.bf16.msra.mxu0 %v2934
    %3487 = vmatprep.mubr.bf16.mxu0 %v1338
    %3488 = vmatmul.mubr.bf16.gmra.mrb[0].mxu0 %v1337
    %v3489 = vpop.f32.mrb[0].mxu0
    %v3490 = vadd.f32 %v3450, %v3489
    %v3491 = vpop.f32.mrb[0].mxu0
    %v3492 = vpop.f32.mrb[0].mxu0
    %v3493 = vpop.f32.mrb[0].mxu0
    %3494 = vdwg.mxu0
    %3495 = vmatprep.subr.bf16.mxu0 0
    %3496 = vmatpush1.bf16.msra.mxu0 %v2935
    %3497 = vmatprep.subr.bf16.mxu0 0
    %3498 = vmatpush1.bf16.msra.mxu0 %v2936
    %3499 = vmatprep.subr.bf16.mxu0 0
    %3500 = vmatpush1.bf16.msra.mxu0 %v2937
    %3501 = vmatprep.subr.bf16.mxu0 0
    %3502 = vmatpush1.bf16.msra.mxu0 %v2938
    %3503 = vmatprep.subr.bf16.mxu0 0
    %3504 = vmatpush1.bf16.msra.mxu0 %v2939
    %3505 = vmatprep.subr.bf16.mxu0 0
    %3506 = vmatpush1.bf16.msra.mxu0 %v2940
    %3507 = vmatprep.subr.bf16.mxu0 0
    %3508 = vmatpush1.bf16.msra.mxu0 %v2941
    %3509 = vmatprep.subr.bf16.mxu0 0
    %3510 = vmatpush1.bf16.msra.mxu0 %v2942
    %3511 = vmatprep.subr.bf16.mxu0 0
    %3512 = vmatpush1.bf16.msra.mxu0 %v2943
    %3513 = vmatprep.subr.bf16.mxu0 0
    %3514 = vmatpush1.bf16.msra.mxu0 %v2944
    %3515 = vmatprep.subr.bf16.mxu0 0
    %3516 = vmatpush1.bf16.msra.mxu0 %v2945
    %3517 = vmatprep.subr.bf16.mxu0 0
    %3518 = vmatpush1.bf16.msra.mxu0 %v2946
    %3519 = vmatprep.subr.bf16.mxu0 0
    %3520 = vmatpush1.bf16.msra.mxu0 %v2947
    %3521 = vmatprep.subr.bf16.mxu0 0
    %3522 = vmatpush1.bf16.msra.mxu0 %v2948
    %3523 = vmatprep.subr.bf16.mxu0 0
    %3524 = vmatpush1.bf16.msra.mxu0 %v2949
    %3525 = vmatprep.subr.bf16.mxu0 0
    %3526 = vmatpush1.bf16.msra.mxu0 %v2950
    %3527 = vmatprep.mubr.bf16.mxu0 %v1340
    %3528 = vmatmul.mubr.bf16.gmra.mrb[0].mxu0 %v1339
    %v3529 = vpop.f32.mrb[0].mxu0
    %v3530 = vadd.f32 %v3490, %v3529
    %v3531 = vpop.f32.mrb[0].mxu0
    %v3532 = vpop.f32.mrb[0].mxu0
    %v3533 = vpop.f32.mrb[0].mxu0
    %3534 = vdwg.mxu0
    %3535 = vmatprep.subr.bf16.mxu0 0
    %3536 = vmatpush1.bf16.msra.mxu0 %v2951
    %3537 = vmatprep.subr.bf16.mxu0 0
    %3538 = vmatpush1.bf16.msra.mxu0 %v2952
    %3539 = vmatprep.subr.bf16.mxu0 0
    %3540 = vmatpush1.bf16.msra.mxu0 %v2953
    %3541 = vmatprep.subr.bf16.mxu0 0
    %3542 = vmatpush1.bf16.msra.mxu0 %v2954
    %3543 = vmatprep.subr.bf16.mxu0 0
    %3544 = vmatpush1.bf16.msra.mxu0 %v2955
    %3545 = vmatprep.subr.bf16.mxu0 0
    %3546 = vmatpush1.bf16.msra.mxu0 %v2956
    %3547 = vmatprep.subr.bf16.mxu0 0
    %3548 = vmatpush1.bf16.msra.mxu0 %v2957
    %3549 = vmatprep.subr.bf16.mxu0 0
    %3550 = vmatpush1.bf16.msra.mxu0 %v2958
    %3551 = vmatprep.subr.bf16.mxu0 0
    %3552 = vmatpush1.bf16.msra.mxu0 %v2959
    %3553 = vmatprep.subr.bf16.mxu0 0
    %3554 = vmatpush1.bf16.msra.mxu0 %v2960
    %3555 = vmatprep.subr.bf16.mxu0 0
    %3556 = vmatpush1.bf16.msra.mxu0 %v2961
    %3557 = vmatprep.subr.bf16.mxu0 0
    %3558 = vmatpush1.bf16.msra.mxu0 %v2962
    %3559 = vmatprep.subr.bf16.mxu0 0
    %3560 = vmatpush1.bf16.msra.mxu0 %v2963
    %3561 = vmatprep.subr.bf16.mxu0 0
    %3562 = vmatpush1.bf16.msra.mxu0 %v2964
    %3563 = vmatprep.subr.bf16.mxu0 0
    %3564 = vmatpush1.bf16.msra.mxu0 %v2965
    %3565 = vmatprep.subr.bf16.mxu0 0
    %3566 = vmatpush1.bf16.msra.mxu0 %v2966
    %3567 = vmatprep.mubr.bf16.mxu0 %v1342
    %3568 = vmatmul.mubr.bf16.gmra.mrb[0].mxu0 %v1341
    %v3569 = vpop.f32.mrb[0].mxu0
    %v3570 = vadd.f32 %v3530, %v3569
    %v3571 = vpop.f32.mrb[0].mxu0
    %v3572 = vpop.f32.mrb[0].mxu0
    %v3573 = vpop.f32.mrb[0].mxu0
    %3574 = vdwg.mxu0
    %3575 = vmatprep.subr.bf16.mxu0 0
    %3576 = vmatpush1.bf16.msra.mxu0 %v2967
    %3577 = vmatprep.subr.bf16.mxu0 0
    %3578 = vmatpush1.bf16.msra.mxu0 %v2968
    %3579 = vmatprep.subr.bf16.mxu0 0
    %3580 = vmatpush1.bf16.msra.mxu0 %v2969
    %3581 = vmatprep.subr.bf16.mxu0 0
    %3582 = vmatpush1.bf16.msra.mxu0 %v2970
    %3583 = vmatprep.subr.bf16.mxu0 0
    %3584 = vmatpush1.bf16.msra.mxu0 %v2971
    %3585 = vmatprep.subr.bf16.mxu0 0
    %3586 = vmatpush1.bf16.msra.mxu0 %v2972
    %3587 = vmatprep.subr.bf16.mxu0 0
    %3588 = vmatpush1.bf16.msra.mxu0 %v2973
    %3589 = vmatprep.subr.bf16.mxu0 0
    %3590 = vmatpush1.bf16.msra.mxu0 %v2974
    %3591 = vmatprep.subr.bf16.mxu0 0
    %3592 = vmatpush1.bf16.msra.mxu0 %v2975
    %3593 = vmatprep.subr.bf16.mxu0 0
    %3594 = vmatpush1.bf16.msra.mxu0 %v2976
    %3595 = vmatprep.subr.bf16.mxu0 0
    %3596 = vmatpush1.bf16.msra.mxu0 %v2977
    %3597 = vmatprep.subr.bf16.mxu0 0
    %3598 = vmatpush1.bf16.msra.mxu0 %v2978
    %3599 = vmatprep.subr.bf16.mxu0 0
    %3600 = vmatpush1.bf16.msra.mxu0 %v2979
    %3601 = vmatprep.subr.bf16.mxu0 0
    %3602 = vmatpush1.bf16.msra.mxu0 %v2980
    %3603 = vmatprep.subr.bf16.mxu0 0
    %3604 = vmatpush1.bf16.msra.mxu0 %v2981
    %3605 = vmatprep.subr.bf16.mxu0 0
    %3606 = vmatpush1.bf16.msra.mxu0 %v2982
    %3607 = vmatprep.mubr.bf16.mxu0 %v1344
    %3608 = vmatmul.mubr.bf16.gmra.mrb[0].mxu0 %v1343
    %v3609 = vpop.f32.mrb[0].mxu0
    %v3610 = vadd.f32 %v3570, %v3609
    %v3611 = vpop.f32.mrb[0].mxu0
    %v3612 = vpop.f32.mrb[0].mxu0
    %v3613 = vpop.f32.mrb[0].mxu0
    %3614 = vdwg.mxu0
    %3615 = vmatprep.subr.bf16.mxu0 0
    %3616 = vmatpush1.bf16.msra.mxu0 %v2983
    %3617 = vmatprep.subr.bf16.mxu0 0
    %3618 = vmatpush1.bf16.msra.mxu0 %v2984
    %3619 = vmatprep.subr.bf16.mxu0 0
    %3620 = vmatpush1.bf16.msra.mxu0 %v2985
    %3621 = vmatprep.subr.bf16.mxu0 0
    %3622 = vmatpush1.bf16.msra.mxu0 %v2986
    %3623 = vmatprep.subr.bf16.mxu0 0
    %3624 = vmatpush1.bf16.msra.mxu0 %v2987
    %3625 = vmatprep.subr.bf16.mxu0 0
    %3626 = vmatpush1.bf16.msra.mxu0 %v2988
    %3627 = vmatprep.subr.bf16.mxu0 0
    %3628 = vmatpush1.bf16.msra.mxu0 %v2989
    %3629 = vmatprep.subr.bf16.mxu0 0
    %3630 = vmatpush1.bf16.msra.mxu0 %v2990
    %3631 = vmatprep.subr.bf16.mxu0 0
    %3632 = vmatpush1.bf16.msra.mxu0 %v2991
    %3633 = vmatprep.subr.bf16.mxu0 0
    %3634 = vmatpush1.bf16.msra.mxu0 %v2992
    %3635 = vmatprep.subr.bf16.mxu0 0
    %3636 = vmatpush1.bf16.msra.mxu0 %v2993
    %3637 = vmatprep.subr.bf16.mxu0 0
    %3638 = vmatpush1.bf16.msra.mxu0 %v2994
    %3639 = vmatprep.subr.bf16.mxu0 0
    %3640 = vmatpush1.bf16.msra.mxu0 %v2995
    %3641 = vmatprep.subr.bf16.mxu0 0
    %3642 = vmatpush1.bf16.msra.mxu0 %v2996
    %3643 = vmatprep.subr.bf16.mxu0 0
    %3644 = vmatpush1.bf16.msra.mxu0 %v2997
    %3645 = vmatprep.subr.bf16.mxu0 0
    %3646 = vmatpush1.bf16.msra.mxu0 %v2998
    %3647 = vmatprep.mubr.bf16.mxu0 %v1346
    %3648 = vmatmul.mubr.bf16.gmra.mrb[0].mxu0 %v1345
    %v3649 = vpop.f32.mrb[0].mxu0
    %v3650 = vadd.f32 %v3610, %v3649
    %v3651 = vpop.f32.mrb[0].mxu0
    %v3652 = vpop.f32.mrb[0].mxu0
    %v3653 = vpop.f32.mrb[0].mxu0
    %3654 = vdwg.mxu0
    %3655 = vmatprep.subr.bf16.mxu0 0
    %3656 = vmatpush1.bf16.msra.mxu0 %v2999
    %3657 = vmatprep.subr.bf16.mxu0 0
    %3658 = vmatpush1.bf16.msra.mxu0 %v3000
    %3659 = vmatprep.subr.bf16.mxu0 0
    %3660 = vmatpush1.bf16.msra.mxu0 %v3001
    %3661 = vmatprep.subr.bf16.mxu0 0
    %3662 = vmatpush1.bf16.msra.mxu0 %v3002
    %3663 = vmatprep.subr.bf16.mxu0 0
    %3664 = vmatpush1.bf16.msra.mxu0 %v3003
    %3665 = vmatprep.subr.bf16.mxu0 0
    %3666 = vmatpush1.bf16.msra.mxu0 %v3004
    %3667 = vmatprep.subr.bf16.mxu0 0
    %3668 = vmatpush1.bf16.msra.mxu0 %v3005
    %3669 = vmatprep.subr.bf16.mxu0 0
    %3670 = vmatpush1.bf16.msra.mxu0 %v3006
    %3671 = vmatprep.subr.bf16.mxu0 0
    %3672 = vmatpush1.bf16.msra.mxu0 %v3007
    %3673 = vmatprep.subr.bf16.mxu0 0
    %3674 = vmatpush1.bf16.msra.mxu0 %v3008
    %3675 = vmatprep.subr.bf16.mxu0 0
    %3676 = vmatpush1.bf16.msra.mxu0 %v3009
    %3677 = vmatprep.subr.bf16.mxu0 0
    %3678 = vmatpush1.bf16.msra.mxu0 %v3010
    %3679 = vmatprep.subr.bf16.mxu0 0
    %3680 = vmatpush1.bf16.msra.mxu0 %v3011
    %3681 = vmatprep.subr.bf16.mxu0 0
    %3682 = vmatpush1.bf16.msra.mxu0 %v3012
    %3683 = vmatprep.subr.bf16.mxu0 0
    %3684 = vmatpush1.bf16.msra.mxu0 %v3013
    %3685 = vmatprep.subr.bf16.mxu0 0
    %3686 = vmatpush1.bf16.msra.mxu0 %v3014
    %3687 = vmatprep.mubr.bf16.mxu0 %v1348
    %3688 = vmatmul.mubr.bf16.gmra.mrb[0].mxu0 %v1347
    %v3689 = vpop.f32.mrb[0].mxu0
    %v3690 = vadd.f32 %v3650, %v3689
    %v3691 = vpop.f32.mrb[0].mxu0
    %v3692 = vpop.f32.mrb[0].mxu0
    %v3693 = vpop.f32.mrb[0].mxu0
    %3694 = vdwg.mxu0
    %3695 = vmatprep.subr.bf16.mxu0 0
    %3696 = vmatpush1.bf16.msra.mxu0 %v3015
    %3697 = vmatprep.subr.bf16.mxu0 0
    %3698 = vmatpush1.bf16.msra.mxu0 %v3016
    %3699 = vmatprep.subr.bf16.mxu0 0
    %3700 = vmatpush1.bf16.msra.mxu0 %v3017
    %3701 = vmatprep.subr.bf16.mxu0 0
    %3702 = vmatpush1.bf16.msra.mxu0 %v3018
    %3703 = vmatprep.subr.bf16.mxu0 0
    %3704 = vmatpush1.bf16.msra.mxu0 %v3019
    %3705 = vmatprep.subr.bf16.mxu0 0
    %3706 = vmatpush1.bf16.msra.mxu0 %v3020
    %3707 = vmatprep.subr.bf16.mxu0 0
    %3708 = vmatpush1.bf16.msra.mxu0 %v3021
    %3709 = vmatprep.subr.bf16.mxu0 0
    %3710 = vmatpush1.bf16.msra.mxu0 %v3022
    %3711 = vmatprep.subr.bf16.mxu0 0
    %3712 = vmatpush1.bf16.msra.mxu0 %v3023
    %3713 = vmatprep.subr.bf16.mxu0 0
    %3714 = vmatpush1.bf16.msra.mxu0 %v3024
    %3715 = vmatprep.subr.bf16.mxu0 0
    %3716 = vmatpush1.bf16.msra.mxu0 %v3025
    %3717 = vmatprep.subr.bf16.mxu0 0
    %3718 = vmatpush1.bf16.msra.mxu0 %v3026
    %3719 = vmatprep.subr.bf16.mxu0 0
    %3720 = vmatpush1.bf16.msra.mxu0 %v3027
    %3721 = vmatprep.subr.bf16.mxu0 0
    %3722 = vmatpush1.bf16.msra.mxu0 %v3028
    %3723 = vmatprep.subr.bf16.mxu0 0
    %3724 = vmatpush1.bf16.msra.mxu0 %v3029
    %3725 = vmatprep.subr.bf16.mxu0 0
    %3726 = vmatpush1.bf16.msra.mxu0 %v3030
    %3727 = vmatprep.mubr.bf16.mxu0 %v1350
    %3728 = vmatmul.mubr.bf16.gmra.mrb[0].mxu0 %v1349
    %v3729 = vpop.f32.mrb[0].mxu0
    %v3730 = vadd.f32 %v3690, %v3729
    %v3731 = vpop.f32.mrb[0].mxu0
    %v3732 = vpop.f32.mrb[0].mxu0
    %v3733 = vpop.f32.mrb[0].mxu0
    %3734 = vdwg.mxu0
    %3735 = vmatprep.subr.bf16.mxu0 0
    %3736 = vmatpush1.bf16.msra.mxu0 %v3031
    %3737 = vmatprep.subr.bf16.mxu0 0
    %3738 = vmatpush1.bf16.msra.mxu0 %v3032
    %3739 = vmatprep.subr.bf16.mxu0 0
    %3740 = vmatpush1.bf16.msra.mxu0 %v3033
    %3741 = vmatprep.subr.bf16.mxu0 0
    %3742 = vmatpush1.bf16.msra.mxu0 %v3034
    %3743 = vmatprep.subr.bf16.mxu0 0
    %3744 = vmatpush1.bf16.msra.mxu0 %v3035
    %3745 = vmatprep.subr.bf16.mxu0 0
    %3746 = vmatpush1.bf16.msra.mxu0 %v3036
    %3747 = vmatprep.subr.bf16.mxu0 0
    %3748 = vmatpush1.bf16.msra.mxu0 %v3037
    %3749 = vmatprep.subr.bf16.mxu0 0
    %3750 = vmatpush1.bf16.msra.mxu0 %v3038
    %3751 = vmatprep.subr.bf16.mxu0 0
    %3752 = vmatpush1.bf16.msra.mxu0 %v3039
    %3753 = vmatprep.subr.bf16.mxu0 0
    %3754 = vmatpush1.bf16.msra.mxu0 %v3040
    %3755 = vmatprep.subr.bf16.mxu0 0
    %3756 = vmatpush1.bf16.msra.mxu0 %v3041
    %3757 = vmatprep.subr.bf16.mxu0 0
    %3758 = vmatpush1.bf16.msra.mxu0 %v3042
    %3759 = vmatprep.subr.bf16.mxu0 0
    %3760 = vmatpush1.bf16.msra.mxu0 %v3043
    %3761 = vmatprep.subr.bf16.mxu0 0
    %3762 = vmatpush1.bf16.msra.mxu0 %v3044
    %3763 = vmatprep.subr.bf16.mxu0 0
    %3764 = vmatpush1.bf16.msra.mxu0 %v3045
    %3765 = vmatprep.subr.bf16.mxu0 0
    %3766 = vmatpush1.bf16.msra.mxu0 %v3046
    %3767 = vmatprep.mubr.bf16.mxu0 %v1352
    %3768 = vmatmul.mubr.bf16.gmra.mrb[0].mxu0 %v1351
    %v3769 = vpop.f32.mrb[0].mxu0
    %v3770 = vadd.f32 %v3730, %v3769
    %v3771 = vpop.f32.mrb[0].mxu0
    %v3772 = vpop.f32.mrb[0].mxu0
    %v3773 = vpop.f32.mrb[0].mxu0
    %3774 = vdwg.mxu0
    %3775 = vmatprep.subr.bf16.mxu0 0
    %3776 = vmatpush1.bf16.msra.mxu0 %v3047
    %3777 = vmatprep.subr.bf16.mxu0 0
    %3778 = vmatpush1.bf16.msra.mxu0 %v3048
    %3779 = vmatprep.subr.bf16.mxu0 0
    %3780 = vmatpush1.bf16.msra.mxu0 %v3049
    %3781 = vmatprep.subr.bf16.mxu0 0
    %3782 = vmatpush1.bf16.msra.mxu0 %v3050
    %3783 = vmatprep.subr.bf16.mxu0 0
    %3784 = vmatpush1.bf16.msra.mxu0 %v3051
    %3785 = vmatprep.subr.bf16.mxu0 0
    %3786 = vmatpush1.bf16.msra.mxu0 %v3052
    %3787 = vmatprep.subr.bf16.mxu0 0
    %3788 = vmatpush1.bf16.msra.mxu0 %v3053
    %3789 = vmatprep.subr.bf16.mxu0 0
    %3790 = vmatpush1.bf16.msra.mxu0 %v3054
    %3791 = vmatprep.subr.bf16.mxu0 0
    %3792 = vmatpush1.bf16.msra.mxu0 %v3055
    %3793 = vmatprep.subr.bf16.mxu0 0
    %3794 = vmatpush1.bf16.msra.mxu0 %v3056
    %3795 = vmatprep.subr.bf16.mxu0 0
    %3796 = vmatpush1.bf16.msra.mxu0 %v3057
    %3797 = vmatprep.subr.bf16.mxu0 0
    %3798 = vmatpush1.bf16.msra.mxu0 %v3058
    %3799 = vmatprep.subr.bf16.mxu0 0
    %3800 = vmatpush1.bf16.msra.mxu0 %v3059
    %3801 = vmatprep.subr.bf16.mxu0 0
    %3802 = vmatpush1.bf16.msra.mxu0 %v3060
    %3803 = vmatprep.subr.bf16.mxu0 0
    %3804 = vmatpush1.bf16.msra.mxu0 %v3061
    %3805 = vmatprep.subr.bf16.mxu0 0
    %3806 = vmatpush1.bf16.msra.mxu0 %v3062
    %3807 = vmatprep.mubr.bf16.mxu0 %v1354
    %3808 = vmatmul.mubr.bf16.gmra.mrb[0].mxu0 %v1353
    %v3809 = vpop.f32.mrb[0].mxu0
    %v3810 = vadd.f32 %v3770, %v3809
    %v3811 = vpop.f32.mrb[0].mxu0
    %v3812 = vpop.f32.mrb[0].mxu0
    %v3813 = vpop.f32.mrb[0].mxu0
    %3814 = vdwg.mxu0
    %3815 = vmatprep.subr.bf16.mxu0 0
    %3816 = vmatpush1.bf16.msra.mxu0 %v3063
    %3817 = vmatprep.subr.bf16.mxu0 0
    %3818 = vmatpush1.bf16.msra.mxu0 %v3064
    %3819 = vmatprep.subr.bf16.mxu0 0
    %3820 = vmatpush1.bf16.msra.mxu0 %v3065
    %3821 = vmatprep.subr.bf16.mxu0 0
    %3822 = vmatpush1.bf16.msra.mxu0 %v3066
    %3823 = vmatprep.subr.bf16.mxu0 0
    %3824 = vmatpush1.bf16.msra.mxu0 %v3067
    %3825 = vmatprep.subr.bf16.mxu0 0
    %3826 = vmatpush1.bf16.msra.mxu0 %v3068
    %3827 = vmatprep.subr.bf16.mxu0 0
    %3828 = vmatpush1.bf16.msra.mxu0 %v3069
    %3829 = vmatprep.subr.bf16.mxu0 0
    %3830 = vmatpush1.bf16.msra.mxu0 %v3070
    %3831 = vmatprep.subr.bf16.mxu0 0
    %3832 = vmatpush1.bf16.msra.mxu0 %v3071
    %3833 = vmatprep.subr.bf16.mxu0 0
    %3834 = vmatpush1.bf16.msra.mxu0 %v3072
    %3835 = vmatprep.subr.bf16.mxu0 0
    %3836 = vmatpush1.bf16.msra.mxu0 %v3073
    %3837 = vmatprep.subr.bf16.mxu0 0
    %3838 = vmatpush1.bf16.msra.mxu0 %v3074
    %3839 = vmatprep.subr.bf16.mxu0 0
    %3840 = vmatpush1.bf16.msra.mxu0 %v3075
    %3841 = vmatprep.subr.bf16.mxu0 0
    %3842 = vmatpush1.bf16.msra.mxu0 %v3076
    %3843 = vmatprep.subr.bf16.mxu0 0
    %3844 = vmatpush1.bf16.msra.mxu0 %v3077
    %3845 = vmatprep.subr.bf16.mxu0 0
    %3846 = vmatpush1.bf16.msra.mxu0 %v3078
    %3847 = vmatprep.mubr.bf16.mxu0 %v1356
    %3848 = vmatmul.mubr.bf16.gmra.mrb[0].mxu0 %v1355
    %v3849 = vpop.f32.mrb[0].mxu0
    %v3850 = vadd.f32 %v3810, %v3849
    %v3851 = vpop.f32.mrb[0].mxu0
    %v3852 = vpop.f32.mrb[0].mxu0
    %v3853 = vpop.f32.mrb[0].mxu0
    %3854 = vdwg.mxu0
    %3855 = vmatprep.subr.bf16.mxu0 0
    %3856 = vmatpush1.bf16.msra.mxu0 %v3079
    %3857 = vmatprep.subr.bf16.mxu0 0
    %3858 = vmatpush1.bf16.msra.mxu0 %v3080
    %3859 = vmatprep.subr.bf16.mxu0 0
    %3860 = vmatpush1.bf16.msra.mxu0 %v3081
    %3861 = vmatprep.subr.bf16.mxu0 0
    %3862 = vmatpush1.bf16.msra.mxu0 %v3082
    %3863 = vmatprep.subr.bf16.mxu0 0
    %3864 = vmatpush1.bf16.msra.mxu0 %v3083
    %3865 = vmatprep.subr.bf16.mxu0 0
    %3866 = vmatpush1.bf16.msra.mxu0 %v3084
    %3867 = vmatprep.subr.bf16.mxu0 0
    %3868 = vmatpush1.bf16.msra.mxu0 %v3085
    %3869 = vmatprep.subr.bf16.mxu0 0
    %3870 = vmatpush1.bf16.msra.mxu0 %v3086
    %3871 = vmatprep.subr.bf16.mxu0 0
    %3872 = vmatpush1.bf16.msra.mxu0 %v3087
    %3873 = vmatprep.subr.bf16.mxu0 0
    %3874 = vmatpush1.bf16.msra.mxu0 %v3088
    %3875 = vmatprep.subr.bf16.mxu0 0
    %3876 = vmatpush1.bf16.msra.mxu0 %v3089
    %3877 = vmatprep.subr.bf16.mxu0 0
    %3878 = vmatpush1.bf16.msra.mxu0 %v3090
    %3879 = vmatprep.subr.bf16.mxu0 0
    %3880 = vmatpush1.bf16.msra.mxu0 %v3091
    %3881 = vmatprep.subr.bf16.mxu0 0
    %3882 = vmatpush1.bf16.msra.mxu0 %v3092
    %3883 = vmatprep.subr.bf16.mxu0 0
    %3884 = vmatpush1.bf16.msra.mxu0 %v3093
    %3885 = vmatprep.subr.bf16.mxu0 0
    %3886 = vmatpush1.bf16.msra.mxu0 %v3094
    %3887 = vmatprep.mubr.bf16.mxu0 %v1358
    %3888 = vmatmul.mubr.bf16.gmra.mrb[0].mxu0 %v1357
    %v3889 = vpop.f32.mrb[0].mxu0
    %v3890 = vadd.f32 %v3850, %v3889
    %v3891 = vpop.f32.mrb[0].mxu0
    %v3892 = vpop.f32.mrb[0].mxu0
    %v3893 = vpop.f32.mrb[0].mxu0
    %3894 = vdwg.mxu0
    %3895 = vmatprep.subr.bf16.mxu0 0
    %3896 = vmatpush1.bf16.msra.mxu0 %v3095
    %3897 = vmatprep.subr.bf16.mxu0 0
    %3898 = vmatpush1.bf16.msra.mxu0 %v3096
    %3899 = vmatprep.subr.bf16.mxu0 0
    %3900 = vmatpush1.bf16.msra.mxu0 %v3097
    %3901 = vmatprep.subr.bf16.mxu0 0
    %3902 = vmatpush1.bf16.msra.mxu0 %v3098
    %3903 = vmatprep.subr.bf16.mxu0 0
    %3904 = vmatpush1.bf16.msra.mxu0 %v3099
    %3905 = vmatprep.subr.bf16.mxu0 0
    %3906 = vmatpush1.bf16.msra.mxu0 %v3100
    %3907 = vmatprep.subr.bf16.mxu0 0
    %3908 = vmatpush1.bf16.msra.mxu0 %v3101
    %3909 = vmatprep.subr.bf16.mxu0 0
    %3910 = vmatpush1.bf16.msra.mxu0 %v3102
    %3911 = vmatprep.subr.bf16.mxu0 0
    %3912 = vmatpush1.bf16.msra.mxu0 %v3103
    %3913 = vmatprep.subr.bf16.mxu0 0
    %3914 = vmatpush1.bf16.msra.mxu0 %v3104
    %3915 = vmatprep.subr.bf16.mxu0 0
    %3916 = vmatpush1.bf16.msra.mxu0 %v3105
    %3917 = vmatprep.subr.bf16.mxu0 0
    %3918 = vmatpush1.bf16.msra.mxu0 %v3106
    %3919 = vmatprep.subr.bf16.mxu0 0
    %3920 = vmatpush1.bf16.msra.mxu0 %v3107
    %3921 = vmatprep.subr.bf16.mxu0 0
    %3922 = vmatpush1.bf16.msra.mxu0 %v3108
    %3923 = vmatprep.subr.bf16.mxu0 0
    %3924 = vmatpush1.bf16.msra.mxu0 %v3109
    %3925 = vmatprep.subr.bf16.mxu0 0
    %3926 = vmatpush1.bf16.msra.mxu0 %v3110
    %3927 = vmatprep.mubr.bf16.mxu0 %v1360
    %3928 = vmatmul.mubr.bf16.gmra.mrb[0].mxu0 %v1359
    %v3929 = vpop.f32.mrb[0].mxu0
    %v3930 = vadd.f32 %v3890, %v3929
    %v3931 = vpop.f32.mrb[0].mxu0
    %v3932 = vpop.f32.mrb[0].mxu0
    %v3933 = vpop.f32.mrb[0].mxu0
    %3934 = vdwg.mxu0
    %3935 = vmatprep.subr.bf16.mxu0 0
    %3936 = vmatpush1.bf16.msra.mxu0 %v3111
    %3937 = vmatprep.subr.bf16.mxu0 0
    %3938 = vmatpush1.bf16.msra.mxu0 %v3112
    %3939 = vmatprep.subr.bf16.mxu0 0
    %3940 = vmatpush1.bf16.msra.mxu0 %v3113
    %3941 = vmatprep.subr.bf16.mxu0 0
    %3942 = vmatpush1.bf16.msra.mxu0 %v3114
    %3943 = vmatprep.subr.bf16.mxu0 0
    %3944 = vmatpush1.bf16.msra.mxu0 %v3115
    %3945 = vmatprep.subr.bf16.mxu0 0
    %3946 = vmatpush1.bf16.msra.mxu0 %v3116
    %3947 = vmatprep.subr.bf16.mxu0 0
    %3948 = vmatpush1.bf16.msra.mxu0 %v3117
    %3949 = vmatprep.subr.bf16.mxu0 0
    %3950 = vmatpush1.bf16.msra.mxu0 %v3118
    %3951 = vmatprep.subr.bf16.mxu0 0
    %3952 = vmatpush1.bf16.msra.mxu0 %v3119
    %3953 = vmatprep.subr.bf16.mxu0 0
    %3954 = vmatpush1.bf16.msra.mxu0 %v3120
    %3955 = vmatprep.subr.bf16.mxu0 0
    %3956 = vmatpush1.bf16.msra.mxu0 %v3121
    %3957 = vmatprep.subr.bf16.mxu0 0
    %3958 = vmatpush1.bf16.msra.mxu0 %v3122
    %3959 = vmatprep.subr.bf16.mxu0 0
    %3960 = vmatpush1.bf16.msra.mxu0 %v3123
    %3961 = vmatprep.subr.bf16.mxu0 0
    %3962 = vmatpush1.bf16.msra.mxu0 %v3124
    %3963 = vmatprep.subr.bf16.mxu0 0
    %3964 = vmatpush1.bf16.msra.mxu0 %v3125
    %3965 = vmatprep.subr.bf16.mxu0 0
    %3966 = vmatpush1.bf16.msra.mxu0 %v3126
    %3967 = vmatprep.mubr.bf16.mxu0 %v1362
    %3968 = vmatmul.mubr.bf16.gmra.mrb[0].mxu0 %v1361
    %v3969 = vpop.f32.mrb[0].mxu0
    %v3970 = vadd.f32 %v3930, %v3969
    %v3971 = vpop.f32.mrb[0].mxu0
    %v3972 = vpop.f32.mrb[0].mxu0
    %v3973 = vpop.f32.mrb[0].mxu0
    %3974 = vdwg.mxu0
    %3975 = vmatprep.subr.bf16.mxu0 0
    %3976 = vmatpush1.bf16.msra.mxu0 %v3127
    %3977 = vmatprep.subr.bf16.mxu0 0
    %3978 = vmatpush1.bf16.msra.mxu0 %v3128
    %3979 = vmatprep.subr.bf16.mxu0 0
    %3980 = vmatpush1.bf16.msra.mxu0 %v3129
    %3981 = vmatprep.subr.bf16.mxu0 0
    %3982 = vmatpush1.bf16.msra.mxu0 %v3130
    %3983 = vmatprep.subr.bf16.mxu0 0
    %3984 = vmatpush1.bf16.msra.mxu0 %v3131
    %3985 = vmatprep.subr.bf16.mxu0 0
    %3986 = vmatpush1.bf16.msra.mxu0 %v3132
    %3987 = vmatprep.subr.bf16.mxu0 0
    %3988 = vmatpush1.bf16.msra.mxu0 %v3133
    %3989 = vmatprep.subr.bf16.mxu0 0
    %3990 = vmatpush1.bf16.msra.mxu0 %v3134
    %3991 = vmatprep.subr.bf16.mxu0 0
    %3992 = vmatpush1.bf16.msra.mxu0 %v3135
    %3993 = vmatprep.subr.bf16.mxu0 0
    %3994 = vmatpush1.bf16.msra.mxu0 %v3136
    %3995 = vmatprep.subr.bf16.mxu0 0
    %3996 = vmatpush1.bf16.msra.mxu0 %v3137
    %3997 = vmatprep.subr.bf16.mxu0 0
    %3998 = vmatpush1.bf16.msra.mxu0 %v3138
    %3999 = vmatprep.subr.bf16.mxu0 0
    %4000 = vmatpush1.bf16.msra.mxu0 %v3139
    %4001 = vmatprep.subr.bf16.mxu0 0
    %4002 = vmatpush1.bf16.msra.mxu0 %v3140
    %4003 = vmatprep.subr.bf16.mxu0 0
    %4004 = vmatpush1.bf16.msra.mxu0 %v3141
    %4005 = vmatprep.subr.bf16.mxu0 0
    %4006 = vmatpush1.bf16.msra.mxu0 %v3142
    %4007 = vmatprep.mubr.bf16.mxu0 %v1364
    %4008 = vmatmul.mubr.bf16.gmra.mrb[0].mxu0 %v1363
    %v4009 = vpop.f32.mrb[0].mxu0
    %v4010 = vadd.f32 %v3970, %v4009
    %v4011 = vpop.f32.mrb[0].mxu0
    %v4012 = vpop.f32.mrb[0].mxu0
    %v4013 = vpop.f32.mrb[0].mxu0
    %4014 = vdwg.mxu0
    %4015 = vmatprep.subr.bf16.mxu0 0
    %4016 = vmatpush1.bf16.msra.mxu0 %v3143
    %4017 = vmatprep.subr.bf16.mxu0 0
    %4018 = vmatpush1.bf16.msra.mxu0 %v3144
    %4019 = vmatprep.subr.bf16.mxu0 0
    %4020 = vmatpush1.bf16.msra.mxu0 %v3145
    %4021 = vmatprep.subr.bf16.mxu0 0
    %4022 = vmatpush1.bf16.msra.mxu0 %v3146
    %4023 = vmatprep.subr.bf16.mxu0 0
    %4024 = vmatpush1.bf16.msra.mxu0 %v3147
    %4025 = vmatprep.subr.bf16.mxu0 0
    %4026 = vmatpush1.bf16.msra.mxu0 %v3148
    %4027 = vmatprep.subr.bf16.mxu0 0
    %4028 = vmatpush1.bf16.msra.mxu0 %v3149
    %4029 = vmatprep.subr.bf16.mxu0 0
    %4030 = vmatpush1.bf16.msra.mxu0 %v3150
    %4031 = vmatprep.subr.bf16.mxu0 0
    %4032 = vmatpush1.bf16.msra.mxu0 %v3151
    %4033 = vmatprep.subr.bf16.mxu0 0
    %4034 = vmatpush1.bf16.msra.mxu0 %v3152
    %4035 = vmatprep.subr.bf16.mxu0 0
    %4036 = vmatpush1.bf16.msra.mxu0 %v3153
    %4037 = vmatprep.subr.bf16.mxu0 0
    %4038 = vmatpush1.bf16.msra.mxu0 %v3154
    %4039 = vmatprep.subr.bf16.mxu0 0
    %4040 = vmatpush1.bf16.msra.mxu0 %v3155
    %4041 = vmatprep.subr.bf16.mxu0 0
    %4042 = vmatpush1.bf16.msra.mxu0 %v3156
    %4043 = vmatprep.subr.bf16.mxu0 0
    %4044 = vmatpush1.bf16.msra.mxu0 %v3157
    %4045 = vmatprep.subr.bf16.mxu0 0
    %4046 = vmatpush1.bf16.msra.mxu0 %v3158
    %4047 = vmatprep.mubr.bf16.mxu0 %v1366
    %4048 = vmatmul.mubr.bf16.gmra.mrb[0].mxu0 %v1365
    %v4049 = vpop.f32.mrb[0].mxu0
    %v4050 = vadd.f32 %v4010, %v4049
    %v4051 = vpop.f32.mrb[0].mxu0
    %v4052 = vpop.f32.mrb[0].mxu0
    %v4053 = vpop.f32.mrb[0].mxu0
    %4054 = vdwg.mxu0
    %v4055 = vadd.f32 %v1334, %v4050
    %vm4056 = vcmask 254976
    %4057 = vst.msk [vmem:[#allocation2] sm:$0x3] %vm4056, %v4055
    // Predicated region
    $region22: #{tpu_custom_call.1} parent=1 // pred_check
      _
    $region23: #{tpu_custom_call.1} parent=1 // pred_check_branch
      %4059 = sbr.rel (0) target = $region25
    $region24: #{tpu_custom_call.1} parent=1 // pred_region
      %s4061 = ssub.s32 32, 32
      %4062 = vsyncadd [#allocation3], %s4061
      %s4064 = sshll.u32 [#allocation2], 4
      %s4065 = int_to_ptr.vmem [resolvable:$true] %s4064
      %4067 = dma.vmem_to_hbm [thread:$0]  %s4065, 32, %s4, [#allocation3]
    $region25: #{tpu_custom_call.1} parent=1 // pred_fallthru
      _
    // Predicated region
    $region26: #{tpu_custom_call.1} parent=1 // pred_check
      _
    $region27: #{tpu_custom_call.1} parent=1 // pred_check_branch
      %4069 = sbr.rel (0) target = $region29
    $region28: #{tpu_custom_call.1} parent=1 // pred_region
      %4070 = dma.done [#allocation3], 32
    $region29: #{tpu_custom_call.1} parent=1 // pred_fallthru
      _
    %4071 = vsyncpa [#allocation3], 1

</llo_original>
